<compile_context>
chip_gen: v7x
topology: tpu7x:2x2x1
jax: 0.10.0
libtpu: 0.0.40
codegen_flags: <defaults>
</compile_context>

<pallas_src>
import functools

import jax
import jax.numpy as jnp
from jax.experimental import pallas as pl
from jax.experimental.pallas import tpu as pltpu


def _resblock_kernel(x_ref, w1_ref, b1_ref, w2_ref, b2_ref, o_ref,
                     pad_s, col_s, *, res_scale, mm_dtype):
    # x_ref : (1, H, W, C)   un-padded NHWC input tile (one batch element)
    # w*_ref: (9*C, C)       im2col-reshaped conv weights (mm_dtype)
    # b*_ref: (1, C)         biases (f32)
    # o_ref : (1, H, W, C)   output tile
    # pad_s : (H+2, W+2, C)  f32 scratch holding the zero-padded activation
    # col_s : (H*W, 9*C)     mm_dtype scratch holding the im2col patch matrix
    H, W, C = x_ref.shape[1], x_ref.shape[2], x_ref.shape[3]
    Hp, Wp = H + 2, W + 2

    # Zero only the 1-wide halo border (the interior is fully rewritten below).
    pad_s[0:1, :, :] = jnp.zeros((1, Wp, C), jnp.float32)
    pad_s[Hp - 1:Hp, :, :] = jnp.zeros((1, Wp, C), jnp.float32)
    pad_s[:, 0:1, :] = jnp.zeros((Hp, 1, C), jnp.float32)
    pad_s[:, Wp - 1:Wp, :] = jnp.zeros((Hp, 1, C), jnp.float32)

    def conv3x3(w_ref, b_ref):
        # Build the (H*W, 9*C) im2col patch matrix once, then do a single MXU
        # matmul with K = 9*C (column order (dy, dx, cin) matches the weight
        # reshape done in the wrapper).
        k = 0
        for dy in range(3):
            for dx in range(3):
                tap = pad_s[dy:dy + H, dx:dx + W, :].reshape(H * W, C)
                col_s[:, k * C:(k + 1) * C] = tap.astype(mm_dtype)
                k += 1
        acc = jnp.dot(col_s[...], w_ref[...],
                      preferred_element_type=jnp.float32)         # (H*W, C) f32
        return acc + b_ref[...].astype(jnp.float32)

    # ---- conv1 + ReLU ----
    pad_s[1:H + 1, 1:W + 1, :] = x_ref[0].astype(jnp.float32)
    out1 = jnp.maximum(conv3x3(w1_ref, b1_ref), 0.0)              # (H*W, C)

    # ---- conv2 (padded scratch reused; zero border is untouched) ----
    pad_s[1:H + 1, 1:W + 1, :] = out1.reshape(H, W, C)
    out2 = conv3x3(w2_ref, b2_ref)                                # (H*W, C)

    # ---- scaled residual add (multiply skipped statically if res_scale==1) ----
    identity = x_ref[0].astype(jnp.float32).reshape(H * W, C)
    res = identity + (out2 if res_scale == 1.0 else out2 * res_scale)
    o_ref[0] = res.reshape(H, W, C).astype(o_ref.dtype)


def residual_block_nobn_nhwc(x_nhwc, w1_hwio, b1, w2_hwio, b2,
                             res_scale=1.0, matmul_dtype=None):
    """Fused ResidualBlockNoBN on NHWC: x + conv2(relu(conv1(x))) * res_scale.

    matmul_dtype=None keeps f32 MXU operands; jnp.bfloat16 enables the
    bf16-native MXU path on v6e/v7x (accumulation stays f32).
    """
    N, H, W, C = x_nhwc.shape
    mm_dtype = jnp.dtype(jnp.float32 if matmul_dtype is None else matmul_dtype)

    # HWIO (3,3,Cin,Cout) -> (9*Cin, Cout), row order (dy, dx, cin).
    w1m = w1_hwio.reshape(9 * C, C).astype(mm_dtype)
    w2m = w2_hwio.reshape(9 * C, C).astype(mm_dtype)
    b1r = b1.reshape(1, C).astype(jnp.float32)
    b2r = b2.reshape(1, C).astype(jnp.float32)

    kernel = functools.partial(_resblock_kernel,
                               res_scale=float(res_scale), mm_dtype=mm_dtype)

    # Per-step VMEM: double-buffered in/out blocks + padded scratch + im2col
    # staging (+ weights / slack).  Raise the scoped limit accordingly, capped
    # well below every generation's physical VMEM.
    itemsize = jnp.dtype(x_nhwc.dtype).itemsize
    est = (4 * H * W * C * itemsize                  # in + out, double-buffered
           + (H + 2) * (W + 2) * C * 4               # padded scratch (f32)
           + H * W * 9 * C * mm_dtype.itemsize       # im2col scratch
           + (1 << 20))                              # weights / biases / slack
    vmem_limit = max(32 * 1024 * 1024, min(96 * 1024 * 1024, int(1.5 * est)))

    return pl.pallas_call(
        kernel,
        out_shape=jax.ShapeDtypeStruct((N, H, W, C), x_nhwc.dtype),
        grid_spec=pltpu.PrefetchScalarGridSpec(
            num_scalar_prefetch=0,
            grid=(N,),
            in_specs=[
                pl.BlockSpec((1, H, W, C), lambda n: (n, 0, 0, 0)),
                pl.BlockSpec((9 * C, C), lambda n: (0, 0)),
                pl.BlockSpec((1, C), lambda n: (0, 0)),
                pl.BlockSpec((9 * C, C), lambda n: (0, 0)),
                pl.BlockSpec((1, C), lambda n: (0, 0)),
            ],
            out_specs=pl.BlockSpec((1, H, W, C), lambda n: (n, 0, 0, 0)),
            scratch_shapes=[
                pltpu.VMEM((H + 2, W + 2, C), jnp.float32),   # padded activation
                pltpu.VMEM((H * W, 9 * C), mm_dtype),          # im2col patches
            ]),
        compiler_params=pltpu.CompilerParams(
            dimension_semantics=("parallel",),
            vmem_limit_bytes=vmem_limit),
    )(x_nhwc, w1m, b1r, w2m, b2r)


def residual_block_nobn(x_nchw, w1_hwio, b1, w2_hwio, b2,
                        res_scale=1.0, matmul_dtype=None):
    """PyTorch-layout wrapper: (N, C, H, W) in / out.

    NOTE: each transpose below is a full HBM pass of the activation; a network
    that keeps activations NHWC should call residual_block_nobn_nhwc directly.
    """
    x = jnp.transpose(x_nchw, (0, 2, 3, 1))
    y = residual_block_nobn_nhwc(x, w1_hwio, b1, w2_hwio, b2,
                                 res_scale, matmul_dtype)
    return jnp.transpose(y, (0, 3, 1, 2))


def _init_params(key, num_feat, scale=0.1):
    """Deterministic Kaiming-normal init (fan_in, relu gain) scaled by `scale`,
    matching default_init_weights([conv1, conv2], 0.1); biases = 0."""
    k1, k2 = jax.random.split(key)
    fan_in = num_feat * 3 * 3
    std = (2.0 / fan_in) ** 0.5
    w1 = jax.random.normal(k1, (3, 3, num_feat, num_feat), jnp.float32) * std * scale
    w2 = jax.random.normal(k2, (3, 3, num_feat, num_feat), jnp.float32) * std * scale
    b1 = jnp.zeros((num_feat,), jnp.float32)
    b2 = jnp.zeros((num_feat,), jnp.float32)
    return w1, b1, w2, b2


def _reference(x_nchw, w1_hwio, b1, w2_hwio, b2, res_scale):
    def conv3x3(x, w, b):
        y = jax.lax.conv_general_dilated(
            x, w, window_strides=(1, 1), padding="SAME",
            dimension_numbers=("NCHW", "HWIO", "NCHW"))
        return y + b.reshape(1, -1, 1, 1)

    out = conv3x3(jnp.maximum(conv3x3(x_nchw, w1_hwio, b1), 0.0), w2_hwio, b2)
    return x_nchw + out * res_scale


if __name__ == "__main__":
    key = jax.random.PRNGKey(0)
    kx, kp = jax.random.split(key)

    N, C, H, W = 2, 4, 16, 16            # num_feat = 4
    x = jax.random.normal(kx, (N, C, H, W), jnp.float32)
    w1, b1, w2, b2 = _init_params(kp, C, scale=0.1)

    for res_scale in (1.0, 0.2):         # covers the static skip-multiply path
        y = residual_block_nobn(x, w1, b1, w2, b2, res_scale)
        y = jax.block_until_ready(y)
        y_ref = _reference(x, w1, b1, w2, b2, res_scale)
        assert y.shape == (N, C, H, W)
        err = jnp.max(jnp.abs(y - y_ref))
        assert jnp.allclose(y, y_ref, atol=1e-5, rtol=1e-5), \
            f"res_scale={res_scale}: max abs err = {err}"

    print("KERNEL_OK")
</pallas_src>

<mosaic_0001>
module attributes {stable_mosaic.version = 11 : i64} {
  func.func @_resblock_kernel(%arg0: i32, %arg1: memref<1x16x16x4xf32, #tpu.memory_space<vmem>>, %arg2: memref<36x4xf32, #tpu.memory_space<vmem>>, %arg3: memref<1x4xf32, #tpu.memory_space<vmem>>, %arg4: memref<36x4xf32, #tpu.memory_space<vmem>>, %arg5: memref<1x4xf32, #tpu.memory_space<vmem>>, %arg6: memref<1x16x16x4xf32, #tpu.memory_space<vmem>>, %arg7: memref<18x18x4xf32, #tpu.memory_space<vmem>>, %arg8: memref<256x36xf32, #tpu.memory_space<vmem>>) attributes {dimension_semantics = [#tpu.dimension_semantics<parallel>], iteration_bounds = array<i64: 2>, scalar_prefetch = 0 : i64, scratch_operands = 2 : i64, tpu.core_type = #tpu.core_type<tc>, window_params = [{transform_indices = @transform_0, window_bounds = array<i64: 1, 16, 16, 4>}, {pipeline_mode = #tpu.pipeline_mode<synchronous>, transform_indices = @transform_1, window_bounds = array<i64: 36, 4>}, {pipeline_mode = #tpu.pipeline_mode<synchronous>, transform_indices = @transform_2, window_bounds = array<i64: 1, 4>}, {pipeline_mode = #tpu.pipeline_mode<synchronous>, transform_indices = @transform_3, window_bounds = array<i64: 36, 4>}, {pipeline_mode = #tpu.pipeline_mode<synchronous>, transform_indices = @transform_4, window_bounds = array<i64: 1, 4>}, {transform_indices = @transform_5, window_bounds = array<i64: 1, 16, 16, 4>}]} {
    %cst = arith.constant 0.000000e+00 : f32
    %0 = vector.broadcast %cst : f32 to vector<1x18x4xf32>
    %c0 = arith.constant 0 : index
    %c0_0 = arith.constant 0 : index
    %c0_1 = arith.constant 0 : index
    %1 = vector.load %arg7[%c0, %c0_0, %c0_1] : memref<18x18x4xf32, #tpu.memory_space<vmem>>, vector<1x18x4xf32>
    tpu.vector_store %arg7[%c0, %c0_0, %c0_1], %0 {strides = array<i32>} : memref<18x18x4xf32, #tpu.memory_space<vmem>>, vector<1x18x4xf32>,
    %cst_2 = arith.constant 0.000000e+00 : f32
    %2 = vector.broadcast %cst_2 : f32 to vector<1x18x4xf32>
    %c17 = arith.constant 17 : index
    %c0_3 = arith.constant 0 : index
    %c0_4 = arith.constant 0 : index
    %3 = vector.load %arg7[%c17, %c0_3, %c0_4] : memref<18x18x4xf32, #tpu.memory_space<vmem>>, vector<1x18x4xf32>
    tpu.vector_store %arg7[%c17, %c0_3, %c0_4], %2 {strides = array<i32>} : memref<18x18x4xf32, #tpu.memory_space<vmem>>, vector<1x18x4xf32>,
    %cst_5 = arith.constant 0.000000e+00 : f32
    %4 = vector.broadcast %cst_5 : f32 to vector<18x1x4xf32>
    %c0_6 = arith.constant 0 : index
    %c0_7 = arith.constant 0 : index
    %c0_8 = arith.constant 0 : index
    %5 = vector.load %arg7[%c0_6, %c0_7, %c0_8] : memref<18x18x4xf32, #tpu.memory_space<vmem>>, vector<18x1x4xf32>
    tpu.vector_store %arg7[%c0_6, %c0_7, %c0_8], %4 {strides = array<i32>} : memref<18x18x4xf32, #tpu.memory_space<vmem>>, vector<18x1x4xf32>,
    %cst_9 = arith.constant 0.000000e+00 : f32
    %6 = vector.broadcast %cst_9 : f32 to vector<18x1x4xf32>
    %c0_10 = arith.constant 0 : index
    %c17_11 = arith.constant 17 : index
    %c0_12 = arith.constant 0 : index
    %7 = vector.load %arg7[%c0_10, %c17_11, %c0_12] : memref<18x18x4xf32, #tpu.memory_space<vmem>>, vector<18x1x4xf32>
    tpu.vector_store %arg7[%c0_10, %c17_11, %c0_12], %6 {strides = array<i32>} : memref<18x18x4xf32, #tpu.memory_space<vmem>>, vector<18x1x4xf32>,
    %c0_13 = arith.constant 0 : index
    %c0_14 = arith.constant 0 : index
    %c0_15 = arith.constant 0 : index
    %c0_16 = arith.constant 0 : index
    %8 = vector.load %arg1[%c0_13, %c0_14, %c0_15, %c0_16] : memref<1x16x16x4xf32, #tpu.memory_space<vmem>>, vector<1x16x16x4xf32>
    %9 = vector.shape_cast %8 : vector<1x16x16x4xf32> to vector<16x16x4xf32>
    %c1 = arith.constant 1 : index
    %c1_17 = arith.constant 1 : index
    %c0_18 = arith.constant 0 : index
    %10 = vector.load %arg7[%c1, %c1_17, %c0_18] : memref<18x18x4xf32, #tpu.memory_space<vmem>>, vector<16x16x4xf32>
    tpu.vector_store %arg7[%c1, %c1_17, %c0_18], %9 {strides = array<i32>} : memref<18x18x4xf32, #tpu.memory_space<vmem>>, vector<16x16x4xf32>,
    %c0_19 = arith.constant 0 : index
    %c0_20 = arith.constant 0 : index
    %c0_21 = arith.constant 0 : index
    %11 = vector.load %arg7[%c0_19, %c0_20, %c0_21] : memref<18x18x4xf32, #tpu.memory_space<vmem>>, vector<16x16x4xf32>
    %12 = vector.shape_cast %11 : vector<16x16x4xf32> to vector<256x4xf32>
    %c0_22 = arith.constant 0 : index
    %c0_23 = arith.constant 0 : index
    %13 = vector.load %arg8[%c0_22, %c0_23] : memref<256x36xf32, #tpu.memory_space<vmem>>, vector<256x4xf32>
    tpu.vector_store %arg8[%c0_22, %c0_23], %12 {strides = array<i32>} : memref<256x36xf32, #tpu.memory_space<vmem>>, vector<256x4xf32>,
    %c0_24 = arith.constant 0 : index
    %c1_25 = arith.constant 1 : index
    %c0_26 = arith.constant 0 : index
    %14 = vector.load %arg7[%c0_24, %c1_25, %c0_26] : memref<18x18x4xf32, #tpu.memory_space<vmem>>, vector<16x16x4xf32>
    %15 = vector.shape_cast %14 : vector<16x16x4xf32> to vector<256x4xf32>
    %c0_27 = arith.constant 0 : index
    %c4 = arith.constant 4 : index
    %16 = vector.load %arg8[%c0_27, %c4] : memref<256x36xf32, #tpu.memory_space<vmem>>, vector<256x4xf32>
    tpu.vector_store %arg8[%c0_27, %c4], %15 {strides = array<i32>} : memref<256x36xf32, #tpu.memory_space<vmem>>, vector<256x4xf32>,
    %c0_28 = arith.constant 0 : index
    %c2 = arith.constant 2 : index
    %c0_29 = arith.constant 0 : index
    %17 = vector.load %arg7[%c0_28, %c2, %c0_29] : memref<18x18x4xf32, #tpu.memory_space<vmem>>, vector<16x16x4xf32>
    %18 = vector.shape_cast %17 : vector<16x16x4xf32> to vector<256x4xf32>
    %c0_30 = arith.constant 0 : index
    %c8 = arith.constant 8 : index
    %19 = vector.load %arg8[%c0_30, %c8] : memref<256x36xf32, #tpu.memory_space<vmem>>, vector<256x4xf32>
    tpu.vector_store %arg8[%c0_30, %c8], %18 {strides = array<i32>} : memref<256x36xf32, #tpu.memory_space<vmem>>, vector<256x4xf32>,
    %c1_31 = arith.constant 1 : index
    %c0_32 = arith.constant 0 : index
    %c0_33 = arith.constant 0 : index
    %20 = vector.load %arg7[%c1_31, %c0_32, %c0_33] : memref<18x18x4xf32, #tpu.memory_space<vmem>>, vector<16x16x4xf32>
    %21 = vector.shape_cast %20 : vector<16x16x4xf32> to vector<256x4xf32>
    %c0_34 = arith.constant 0 : index
    %c12 = arith.constant 12 : index
    %22 = vector.load %arg8[%c0_34, %c12] : memref<256x36xf32, #tpu.memory_space<vmem>>, vector<256x4xf32>
    tpu.vector_store %arg8[%c0_34, %c12], %21 {strides = array<i32>} : memref<256x36xf32, #tpu.memory_space<vmem>>, vector<256x4xf32>,
    %c1_35 = arith.constant 1 : index
    %c1_36 = arith.constant 1 : index
    %c0_37 = arith.constant 0 : index
    %23 = vector.load %arg7[%c1_35, %c1_36, %c0_37] : memref<18x18x4xf32, #tpu.memory_space<vmem>>, vector<16x16x4xf32>
    %24 = vector.shape_cast %23 : vector<16x16x4xf32> to vector<256x4xf32>
    %c0_38 = arith.constant 0 : index
    %c16 = arith.constant 16 : index
    %25 = vector.load %arg8[%c0_38, %c16] : memref<256x36xf32, #tpu.memory_space<vmem>>, vector<256x4xf32>
    tpu.vector_store %arg8[%c0_38, %c16], %24 {strides = array<i32>} : memref<256x36xf32, #tpu.memory_space<vmem>>, vector<256x4xf32>,
    %c1_39 = arith.constant 1 : index
    %c2_40 = arith.constant 2 : index
    %c0_41 = arith.constant 0 : index
    %26 = vector.load %arg7[%c1_39, %c2_40, %c0_41] : memref<18x18x4xf32, #tpu.memory_space<vmem>>, vector<16x16x4xf32>
    %27 = vector.shape_cast %26 : vector<16x16x4xf32> to vector<256x4xf32>
    %c0_42 = arith.constant 0 : index
    %c20 = arith.constant 20 : index
    %28 = vector.load %arg8[%c0_42, %c20] : memref<256x36xf32, #tpu.memory_space<vmem>>, vector<256x4xf32>
    tpu.vector_store %arg8[%c0_42, %c20], %27 {strides = array<i32>} : memref<256x36xf32, #tpu.memory_space<vmem>>, vector<256x4xf32>,
    %c2_43 = arith.constant 2 : index
    %c0_44 = arith.constant 0 : index
    %c0_45 = arith.constant 0 : index
    %29 = vector.load %arg7[%c2_43, %c0_44, %c0_45] : memref<18x18x4xf32, #tpu.memory_space<vmem>>, vector<16x16x4xf32>
    %30 = vector.shape_cast %29 : vector<16x16x4xf32> to vector<256x4xf32>
    %c0_46 = arith.constant 0 : index
    %c24 = arith.constant 24 : index
    %31 = vector.load %arg8[%c0_46, %c24] : memref<256x36xf32, #tpu.memory_space<vmem>>, vector<256x4xf32>
    tpu.vector_store %arg8[%c0_46, %c24], %30 {strides = array<i32>} : memref<256x36xf32, #tpu.memory_space<vmem>>, vector<256x4xf32>,
    %c2_47 = arith.constant 2 : index
    %c1_48 = arith.constant 1 : index
    %c0_49 = arith.constant 0 : index
    %32 = vector.load %arg7[%c2_47, %c1_48, %c0_49] : memref<18x18x4xf32, #tpu.memory_space<vmem>>, vector<16x16x4xf32>
    %33 = vector.shape_cast %32 : vector<16x16x4xf32> to vector<256x4xf32>
    %c0_50 = arith.constant 0 : index
    %c28 = arith.constant 28 : index
    %34 = vector.load %arg8[%c0_50, %c28] : memref<256x36xf32, #tpu.memory_space<vmem>>, vector<256x4xf32>
    tpu.vector_store %arg8[%c0_50, %c28], %33 {strides = array<i32>} : memref<256x36xf32, #tpu.memory_space<vmem>>, vector<256x4xf32>,
    %c2_51 = arith.constant 2 : index
    %c2_52 = arith.constant 2 : index
    %c0_53 = arith.constant 0 : index
    %35 = vector.load %arg7[%c2_51, %c2_52, %c0_53] : memref<18x18x4xf32, #tpu.memory_space<vmem>>, vector<16x16x4xf32>
    %36 = vector.shape_cast %35 : vector<16x16x4xf32> to vector<256x4xf32>
    %c0_54 = arith.constant 0 : index
    %c32 = arith.constant 32 : index
    %37 = vector.load %arg8[%c0_54, %c32] : memref<256x36xf32, #tpu.memory_space<vmem>>, vector<256x4xf32>
    tpu.vector_store %arg8[%c0_54, %c32], %36 {strides = array<i32>} : memref<256x36xf32, #tpu.memory_space<vmem>>, vector<256x4xf32>,
    %c0_55 = arith.constant 0 : index
    %c0_56 = arith.constant 0 : index
    %38 = vector.load %arg8[%c0_55, %c0_56] : memref<256x36xf32, #tpu.memory_space<vmem>>, vector<256x36xf32>
    %c0_57 = arith.constant 0 : index
    %c0_58 = arith.constant 0 : index
    %39 = vector.load %arg2[%c0_57, %c0_58] : memref<36x4xf32, #tpu.memory_space<vmem>>, vector<36x4xf32>
    %cst_59 = arith.constant dense<0.000000e+00> : vector<256x4xf32>
    %40 = tpu.matmul %38, %39, %cst_59 {dimension_numbers = #tpu.dot_dimension_numbers<[1], [0], [0], [1], [0, 0, 1, 1], [], []>} : vector<256x36xf32>, vector<36x4xf32>, vector<256x4xf32> -> vector<256x4xf32>
    %c0_60 = arith.constant 0 : index
    %c0_61 = arith.constant 0 : index
    %41 = vector.load %arg3[%c0_60, %c0_61] : memref<1x4xf32, #tpu.memory_space<vmem>>, vector<1x4xf32>
    %42 = vector.broadcast %41 : vector<1x4xf32> to vector<256x4xf32>
    %43 = arith.addf %40, %42 : vector<256x4xf32>
    %cst_62 = arith.constant 0.000000e+00 : f32
    %44 = vector.broadcast %cst_62 : f32 to vector<256x4xf32>
    %45 = arith.maximumf %43, %44 : vector<256x4xf32>
    %46 = vector.shape_cast %45 : vector<256x4xf32> to vector<16x16x4xf32>
    %c1_63 = arith.constant 1 : index
    %c1_64 = arith.constant 1 : index
    %c0_65 = arith.constant 0 : index
    %47 = vector.load %arg7[%c1_63, %c1_64, %c0_65] : memref<18x18x4xf32, #tpu.memory_space<vmem>>, vector<16x16x4xf32>
    tpu.vector_store %arg7[%c1_63, %c1_64, %c0_65], %46 {strides = array<i32>} : memref<18x18x4xf32, #tpu.memory_space<vmem>>, vector<16x16x4xf32>,
    %c0_66 = arith.constant 0 : index
    %c0_67 = arith.constant 0 : index
    %c0_68 = arith.constant 0 : index
    %48 = vector.load %arg7[%c0_66, %c0_67, %c0_68] : memref<18x18x4xf32, #tpu.memory_space<vmem>>, vector<16x16x4xf32>
    %49 = vector.shape_cast %48 : vector<16x16x4xf32> to vector<256x4xf32>
    %c0_69 = arith.constant 0 : index
    %c0_70 = arith.constant 0 : index
    %50 = vector.load %arg8[%c0_69, %c0_70] : memref<256x36xf32, #tpu.memory_space<vmem>>, vector<256x4xf32>
    tpu.vector_store %arg8[%c0_69, %c0_70], %49 {strides = array<i32>} : memref<256x36xf32, #tpu.memory_space<vmem>>, vector<256x4xf32>,
    %c0_71 = arith.constant 0 : index
    %c1_72 = arith.constant 1 : index
    %c0_73 = arith.constant 0 : index
    %51 = vector.load %arg7[%c0_71, %c1_72, %c0_73] : memref<18x18x4xf32, #tpu.memory_space<vmem>>, vector<16x16x4xf32>
    %52 = vector.shape_cast %51 : vector<16x16x4xf32> to vector<256x4xf32>
    %c0_74 = arith.constant 0 : index
    %c4_75 = arith.constant 4 : index
    %53 = vector.load %arg8[%c0_74, %c4_75] : memref<256x36xf32, #tpu.memory_space<vmem>>, vector<256x4xf32>
    tpu.vector_store %arg8[%c0_74, %c4_75], %52 {strides = array<i32>} : memref<256x36xf32, #tpu.memory_space<vmem>>, vector<256x4xf32>,
    %c0_76 = arith.constant 0 : index
    %c2_77 = arith.constant 2 : index
    %c0_78 = arith.constant 0 : index
    %54 = vector.load %arg7[%c0_76, %c2_77, %c0_78] : memref<18x18x4xf32, #tpu.memory_space<vmem>>, vector<16x16x4xf32>
    %55 = vector.shape_cast %54 : vector<16x16x4xf32> to vector<256x4xf32>
    %c0_79 = arith.constant 0 : index
    %c8_80 = arith.constant 8 : index
    %56 = vector.load %arg8[%c0_79, %c8_80] : memref<256x36xf32, #tpu.memory_space<vmem>>, vector<256x4xf32>
    tpu.vector_store %arg8[%c0_79, %c8_80], %55 {strides = array<i32>} : memref<256x36xf32, #tpu.memory_space<vmem>>, vector<256x4xf32>,
    %c1_81 = arith.constant 1 : index
    %c0_82 = arith.constant 0 : index
    %c0_83 = arith.constant 0 : index
    %57 = vector.load %arg7[%c1_81, %c0_82, %c0_83] : memref<18x18x4xf32, #tpu.memory_space<vmem>>, vector<16x16x4xf32>
    %58 = vector.shape_cast %57 : vector<16x16x4xf32> to vector<256x4xf32>
    %c0_84 = arith.constant 0 : index
    %c12_85 = arith.constant 12 : index
    %59 = vector.load %arg8[%c0_84, %c12_85] : memref<256x36xf32, #tpu.memory_space<vmem>>, vector<256x4xf32>
    tpu.vector_store %arg8[%c0_84, %c12_85], %58 {strides = array<i32>} : memref<256x36xf32, #tpu.memory_space<vmem>>, vector<256x4xf32>,
    %c1_86 = arith.constant 1 : index
    %c1_87 = arith.constant 1 : index
    %c0_88 = arith.constant 0 : index
    %60 = vector.load %arg7[%c1_86, %c1_87, %c0_88] : memref<18x18x4xf32, #tpu.memory_space<vmem>>, vector<16x16x4xf32>
    %61 = vector.shape_cast %60 : vector<16x16x4xf32> to vector<256x4xf32>
    %c0_89 = arith.constant 0 : index
    %c16_90 = arith.constant 16 : index
    %62 = vector.load %arg8[%c0_89, %c16_90] : memref<256x36xf32, #tpu.memory_space<vmem>>, vector<256x4xf32>
    tpu.vector_store %arg8[%c0_89, %c16_90], %61 {strides = array<i32>} : memref<256x36xf32, #tpu.memory_space<vmem>>, vector<256x4xf32>,
    %c1_91 = arith.constant 1 : index
    %c2_92 = arith.constant 2 : index
    %c0_93 = arith.constant 0 : index
    %63 = vector.load %arg7[%c1_91, %c2_92, %c0_93] : memref<18x18x4xf32, #tpu.memory_space<vmem>>, vector<16x16x4xf32>
    %64 = vector.shape_cast %63 : vector<16x16x4xf32> to vector<256x4xf32>
    %c0_94 = arith.constant 0 : index
    %c20_95 = arith.constant 20 : index
    %65 = vector.load %arg8[%c0_94, %c20_95] : memref<256x36xf32, #tpu.memory_space<vmem>>, vector<256x4xf32>
    tpu.vector_store %arg8[%c0_94, %c20_95], %64 {strides = array<i32>} : memref<256x36xf32, #tpu.memory_space<vmem>>, vector<256x4xf32>,
    %c2_96 = arith.constant 2 : index
    %c0_97 = arith.constant 0 : index
    %c0_98 = arith.constant 0 : index
    %66 = vector.load %arg7[%c2_96, %c0_97, %c0_98] : memref<18x18x4xf32, #tpu.memory_space<vmem>>, vector<16x16x4xf32>
    %67 = vector.shape_cast %66 : vector<16x16x4xf32> to vector<256x4xf32>
    %c0_99 = arith.constant 0 : index
    %c24_100 = arith.constant 24 : index
    %68 = vector.load %arg8[%c0_99, %c24_100] : memref<256x36xf32, #tpu.memory_space<vmem>>, vector<256x4xf32>
    tpu.vector_store %arg8[%c0_99, %c24_100], %67 {strides = array<i32>} : memref<256x36xf32, #tpu.memory_space<vmem>>, vector<256x4xf32>,
    %c2_101 = arith.constant 2 : index
    %c1_102 = arith.constant 1 : index
    %c0_103 = arith.constant 0 : index
    %69 = vector.load %arg7[%c2_101, %c1_102, %c0_103] : memref<18x18x4xf32, #tpu.memory_space<vmem>>, vector<16x16x4xf32>
    %70 = vector.shape_cast %69 : vector<16x16x4xf32> to vector<256x4xf32>
    %c0_104 = arith.constant 0 : index
    %c28_105 = arith.constant 28 : index
    %71 = vector.load %arg8[%c0_104, %c28_105] : memref<256x36xf32, #tpu.memory_space<vmem>>, vector<256x4xf32>
    tpu.vector_store %arg8[%c0_104, %c28_105], %70 {strides = array<i32>} : memref<256x36xf32, #tpu.memory_space<vmem>>, vector<256x4xf32>,
    %c2_106 = arith.constant 2 : index
    %c2_107 = arith.constant 2 : index
    %c0_108 = arith.constant 0 : index
    %72 = vector.load %arg7[%c2_106, %c2_107, %c0_108] : memref<18x18x4xf32, #tpu.memory_space<vmem>>, vector<16x16x4xf32>
    %73 = vector.shape_cast %72 : vector<16x16x4xf32> to vector<256x4xf32>
    %c0_109 = arith.constant 0 : index
    %c32_110 = arith.constant 32 : index
    %74 = vector.load %arg8[%c0_109, %c32_110] : memref<256x36xf32, #tpu.memory_space<vmem>>, vector<256x4xf32>
    tpu.vector_store %arg8[%c0_109, %c32_110], %73 {strides = array<i32>} : memref<256x36xf32, #tpu.memory_space<vmem>>, vector<256x4xf32>,
    %c0_111 = arith.constant 0 : index
    %c0_112 = arith.constant 0 : index
    %75 = vector.load %arg8[%c0_111, %c0_112] : memref<256x36xf32, #tpu.memory_space<vmem>>, vector<256x36xf32>
    %c0_113 = arith.constant 0 : index
    %c0_114 = arith.constant 0 : index
    %76 = vector.load %arg4[%c0_113, %c0_114] : memref<36x4xf32, #tpu.memory_space<vmem>>, vector<36x4xf32>
    %cst_115 = arith.constant dense<0.000000e+00> : vector<256x4xf32>
    %77 = tpu.matmul %75, %76, %cst_115 {dimension_numbers = #tpu.dot_dimension_numbers<[1], [0], [0], [1], [0, 0, 1, 1], [], []>} : vector<256x36xf32>, vector<36x4xf32>, vector<256x4xf32> -> vector<256x4xf32>
    %c0_116 = arith.constant 0 : index
    %c0_117 = arith.constant 0 : index
    %78 = vector.load %arg5[%c0_116, %c0_117] : memref<1x4xf32, #tpu.memory_space<vmem>>, vector<1x4xf32>
    %79 = vector.broadcast %78 : vector<1x4xf32> to vector<256x4xf32>
    %80 = arith.addf %77, %79 : vector<256x4xf32>
    %c0_118 = arith.constant 0 : index
    %c0_119 = arith.constant 0 : index
    %c0_120 = arith.constant 0 : index
    %c0_121 = arith.constant 0 : index
    %81 = vector.load %arg1[%c0_118, %c0_119, %c0_120, %c0_121] : memref<1x16x16x4xf32, #tpu.memory_space<vmem>>, vector<1x16x16x4xf32>
    %82 = vector.shape_cast %81 : vector<1x16x16x4xf32> to vector<16x16x4xf32>
    %83 = vector.shape_cast %82 : vector<16x16x4xf32> to vector<256x4xf32>
    %84 = arith.addf %83, %80 : vector<256x4xf32>
    %85 = vector.shape_cast %84 : vector<256x4xf32> to vector<16x16x4xf32>
    %c0_122 = arith.constant 0 : index
    %c0_123 = arith.constant 0 : index
    %c0_124 = arith.constant 0 : index
    %c0_125 = arith.constant 0 : index
    %86 = vector.load %arg6[%c0_122, %c0_123, %c0_124, %c0_125] : memref<1x16x16x4xf32, #tpu.memory_space<vmem>>, vector<1x16x16x4xf32>
    %87 = vector.shape_cast %86 : vector<1x16x16x4xf32> to vector<16x16x4xf32>
    %88 = vector.shape_cast %85 : vector<16x16x4xf32> to vector<1x16x16x4xf32>
    tpu.vector_store %arg6[%c0_122, %c0_123, %c0_124, %c0_125], %88 {strides = array<i32>} : memref<1x16x16x4xf32, #tpu.memory_space<vmem>>, vector<1x16x16x4xf32>,
    return
  }
  func.func @transform_0(%arg0: i32) -> (i32, i32, i32, i32) {
    %c0_i32 = arith.constant 0 : i32
    %c0_i32_0 = arith.constant 0 : i32
    %c0_i32_1 = arith.constant 0 : i32
    %c0_i32_2 = arith.constant 0 : i32
    return %arg0, %c0_i32, %c0_i32_0, %c0_i32_1 : i32, i32, i32, i32
  }
  func.func @transform_1(%arg0: i32) -> (i32, i32) {
    %c0_i32 = arith.constant 0 : i32
    %c0_i32_0 = arith.constant 0 : i32
    %c0_i32_1 = arith.constant 0 : i32
    return %c0_i32, %c0_i32_0 : i32, i32
  }
  func.func @transform_2(%arg0: i32) -> (i32, i32) {
    %c0_i32 = arith.constant 0 : i32
    %c0_i32_0 = arith.constant 0 : i32
    %c0_i32_1 = arith.constant 0 : i32
    return %c0_i32, %c0_i32_0 : i32, i32
  }
  func.func @transform_3(%arg0: i32) -> (i32, i32) {
    %c0_i32 = arith.constant 0 : i32
    %c0_i32_0 = arith.constant 0 : i32
    %c0_i32_1 = arith.constant 0 : i32
    return %c0_i32, %c0_i32_0 : i32, i32
  }
  func.func @transform_4(%arg0: i32) -> (i32, i32) {
    %c0_i32 = arith.constant 0 : i32
    %c0_i32_0 = arith.constant 0 : i32
    %c0_i32_1 = arith.constant 0 : i32
    return %c0_i32, %c0_i32_0 : i32, i32
  }
  func.func @transform_5(%arg0: i32) -> (i32, i32, i32, i32) {
    %c0_i32 = arith.constant 0 : i32
    %c0_i32_0 = arith.constant 0 : i32
    %c0_i32_1 = arith.constant 0 : i32
    %c0_i32_2 = arith.constant 0 : i32
    return %arg0, %c0_i32, %c0_i32_0, %c0_i32_1 : i32, i32, i32, i32
  }
}

</mosaic_0001>

<llo_original>
// kernel: tpu_custom_call.1
$region0: #{tpu_custom_call.1}
  #allocation0 [shape = 'u32[]', space=smem, size = 0x4, offset = 0x4, fixed_abs, tag = 'smem constant byte address 0x4 - core index']
  #allocation1 [shape = 'u32[144,128]{1,0:T(1,128)}', space=vmem, size = 0x12000, scoped, tag = 'internal scratch']
  #allocation2 [shape = 'f32[18,18,4]{2,1,0:T(8,128)}', space=vmem, size = 0x36000, scoped, tag = 'scratch operand']
  #allocation3 [shape = 'f32[256,36]{1,0:T(8,128)}', space=vmem, size = 0x20000, scoped, tag = 'scratch operand']
  %s0 = inlined_call_operand.vmem [shape: f32[2,16,16,4], index: 0, kind: input, shape index: {}]
  %s1 = inlined_call_operand.vmem [shape: f32[36,4], index: 1, kind: input, shape index: {}]
  %s2 = inlined_call_operand.vmem [shape: f32[1,4], index: 2, kind: input, shape index: {}]
  %s3 = inlined_call_operand.vmem [shape: f32[36,4], index: 3, kind: input, shape index: {}]
  %s4 = inlined_call_operand.vmem [shape: f32[1,4], index: 4, kind: input, shape index: {}]
  %s5 = inlined_call_operand.vmem [shape: f32[2,16,16,4], index: 5, kind: output, shape index: {}]
  %s6 = sld [smem:[#allocation0]]
  $region53: #{tpu_custom_call.1} parent=0
    _
  %s8 = ssub.s32 1, %s6
  %s9 = scalar_select 0, %s8, %s6
  loop: start=0, step=1, limit=4
  $region2: #{tpu_custom_call.1} parent=0 // loop_pre_header
    _
  $region3: #{tpu_custom_call.1} parent=0 // loop_header
    %s11 = sphi 0, %s15
    %p12 = scmp.ge.s32.totalorder %s11, 4
    %s21 = sphi 0, %s23
    %s24 = sphi 0, %s21
    %s25 = sphi 0, %s24
    %s41 = sphi 0, %s25
    %s45 = sphi 0, %s45
    %s47 = sphi 0, %s45
    %s48 = sphi 0, %s47
    %s62 = sphi 0, %s48
    %s66 = sphi 0, %s66
    %s68 = sphi 0, %s66
    %s69 = sphi 0, %s68
    %s83 = sphi 0, %s69
    %s87 = sphi 0, %s87
    %s89 = sphi 0, %s87
    %s90 = sphi 0, %s89
    %s104 = sphi 0, %s90
    %s108 = sphi 0, %s108
    %s110 = sphi 0, %s108
    %s111 = sphi 0, %s110
    %s125 = sphi 0, %s111
    %s131 = sphi 0, %s133
    %s134 = sphi 0, %s131
    %s135 = sphi 0, %s134
    %s151 = sphi 0, %s135
  $region4: #{tpu_custom_call.1} parent=0 // loop_header_branch
    %14 = sbr.rel (%p12) target = $region8
  $region5: #{tpu_custom_call.1} parent=0 // loop_body
    %s16 = ssub.s32 %s11, 1
    %s17 = ssub.s32 %s11, 2
    %s18 = sadd.s32 %s11, 1
    %s19 = ssub.s32 %s11, %s18
    %p20 = scmp.eq.s32.totalorder %s19, 0
    %s22 = sadd.s32 %s21, 1
    %s23 = scalar_select %p20, %s21, %s22
    %p26 = pneg %p20
    %p27 = scmp.eq.s32.totalorder %s11, 1
    %p28 = por %p26, %p27
    %p29 = scmp.ne.s32.totalorder %s21, %s24
    %p30 = scmp.eq.s32.totalorder %s11, 0
    %p31 = por %p29, %p30
    %p32 = scmp.ne.s32.totalorder %s21, %s24
    %p33 = scmp.eq.s32.totalorder %s16, 1
    %p34 = por %p32, %p33
    %p35 = scmp.ne.s32.totalorder %s24, %s25
    %p36 = scmp.eq.s32.totalorder %s16, 0
    %p37 = por %p35, %p36
    %p38 = scmp.ne.s32.totalorder %s24, %s25
    %p39 = scmp.eq.s32.totalorder %s17, 1
    %p40 = por %p38, %p39
    %p42 = scmp.ne.s32.totalorder %s25, %s41
    %p43 = scmp.eq.s32.totalorder %s17, 0
    %p44 = por %p42, %p43
    %s46 = sadd.s32 %s45, 1
    %p49 = scmp.eq.s32.totalorder %s11, 1
    %p50 = scmp.ne.s32.totalorder %s45, %s47
    %p51 = scmp.eq.s32.totalorder %s11, 0
    %p52 = por %p50, %p51
    %p53 = scmp.ne.s32.totalorder %s45, %s47
    %p54 = scmp.eq.s32.totalorder %s16, 1
    %p55 = por %p53, %p54
    %p56 = scmp.ne.s32.totalorder %s47, %s48
    %p57 = scmp.eq.s32.totalorder %s16, 0
    %p58 = por %p56, %p57
    %p59 = scmp.ne.s32.totalorder %s47, %s48
    %p60 = scmp.eq.s32.totalorder %s17, 1
    %p61 = por %p59, %p60
    %p63 = scmp.ne.s32.totalorder %s48, %s62
    %p64 = scmp.eq.s32.totalorder %s17, 0
    %p65 = por %p63, %p64
    %s67 = sadd.s32 %s66, 1
    %p70 = scmp.eq.s32.totalorder %s11, 1
    %p71 = scmp.ne.s32.totalorder %s66, %s68
    %p72 = scmp.eq.s32.totalorder %s11, 0
    %p73 = por %p71, %p72
    %p74 = scmp.ne.s32.totalorder %s66, %s68
    %p75 = scmp.eq.s32.totalorder %s16, 1
    %p76 = por %p74, %p75
    %p77 = scmp.ne.s32.totalorder %s68, %s69
    %p78 = scmp.eq.s32.totalorder %s16, 0
    %p79 = por %p77, %p78
    %p80 = scmp.ne.s32.totalorder %s68, %s69
    %p81 = scmp.eq.s32.totalorder %s17, 1
    %p82 = por %p80, %p81
    %p84 = scmp.ne.s32.totalorder %s69, %s83
    %p85 = scmp.eq.s32.totalorder %s17, 0
    %p86 = por %p84, %p85
    %s88 = sadd.s32 %s87, 1
    %p91 = scmp.eq.s32.totalorder %s11, 1
    %p92 = scmp.ne.s32.totalorder %s87, %s89
    %p93 = scmp.eq.s32.totalorder %s11, 0
    %p94 = por %p92, %p93
    %p95 = scmp.ne.s32.totalorder %s87, %s89
    %p96 = scmp.eq.s32.totalorder %s16, 1
    %p97 = por %p95, %p96
    %p98 = scmp.ne.s32.totalorder %s89, %s90
    %p99 = scmp.eq.s32.totalorder %s16, 0
    %p100 = por %p98, %p99
    %p101 = scmp.ne.s32.totalorder %s89, %s90
    %p102 = scmp.eq.s32.totalorder %s17, 1
    %p103 = por %p101, %p102
    %p105 = scmp.ne.s32.totalorder %s90, %s104
    %p106 = scmp.eq.s32.totalorder %s17, 0
    %p107 = por %p105, %p106
    %s109 = sadd.s32 %s108, 1
    %p112 = scmp.eq.s32.totalorder %s11, 1
    %p113 = scmp.ne.s32.totalorder %s108, %s110
    %p114 = scmp.eq.s32.totalorder %s11, 0
    %p115 = por %p113, %p114
    %p116 = scmp.ne.s32.totalorder %s108, %s110
    %p117 = scmp.eq.s32.totalorder %s16, 1
    %p118 = por %p116, %p117
    %p119 = scmp.ne.s32.totalorder %s110, %s111
    %p120 = scmp.eq.s32.totalorder %s16, 0
    %p121 = por %p119, %p120
    %p122 = scmp.ne.s32.totalorder %s110, %s111
    %p123 = scmp.eq.s32.totalorder %s17, 1
    %p124 = por %p122, %p123
    %p126 = scmp.ne.s32.totalorder %s111, %s125
    %p127 = scmp.eq.s32.totalorder %s17, 0
    %p128 = por %p126, %p127
    %s129 = ssub.s32 %s11, %s18
    %p130 = scmp.eq.s32.totalorder %s129, 0
    %s132 = sadd.s32 %s131, 1
    %s133 = scalar_select %p130, %s131, %s132
    %p136 = pneg %p130
    %p137 = scmp.eq.s32.totalorder %s11, 1
    %p138 = por %p136, %p137
    %p139 = scmp.ne.s32.totalorder %s131, %s134
    %p140 = scmp.eq.s32.totalorder %s11, 0
    %p141 = por %p139, %p140
    %p142 = scmp.ne.s32.totalorder %s131, %s134
    %p143 = scmp.eq.s32.totalorder %s16, 1
    %p144 = por %p142, %p143
    %p145 = scmp.ne.s32.totalorder %s134, %s135
    %p146 = scmp.eq.s32.totalorder %s16, 0
    %p147 = por %p145, %p146
    %p148 = scmp.ne.s32.totalorder %s134, %s135
    %p149 = scmp.eq.s32.totalorder %s17, 1
    %p150 = por %p148, %p149
    %p152 = scmp.ne.s32.totalorder %s135, %s151
    %p153 = scmp.eq.s32.totalorder %s17, 0
    %p154 = por %p152, %p153
    %p155 = scmp.le.s32.totalorder 1, %s11
    %p156 = scmp.lt.s32.totalorder %s11, 3
    %p157 = pnand %p155, %p156
    %p158 = pneg %p157
    // Predicated region
    $region9: #{tpu_custom_call.1} parent=5 // pred_check
      _
    $region10: #{tpu_custom_call.1} parent=5 // pred_check_branch
      %160 = sbr.rel (%p157) target = $region12
    $region11: #{tpu_custom_call.1} parent=5 // pred_region
      %s161 = ssub.s32 %s11, 1
      // Predicated region
      $region13: #{tpu_custom_call.1} parent=11 // pred_check
        %p162 = pneg %p58
      $region14: #{tpu_custom_call.1} parent=11 // pred_check_branch
        %164 = sbr.rel (%p162) target = $region16
      $region15: #{tpu_custom_call.1} parent=11 // pred_region
        _
      $region16: #{tpu_custom_call.1} parent=11 // pred_fallthru
        _
      // Predicated region
      $region17: #{tpu_custom_call.1} parent=11 // pred_check
        %p165 = pneg %p79
      $region18: #{tpu_custom_call.1} parent=11 // pred_check_branch
        %167 = sbr.rel (%p165) target = $region20
      $region19: #{tpu_custom_call.1} parent=11 // pred_region
        _
      $region20: #{tpu_custom_call.1} parent=11 // pred_fallthru
        _
      // Predicated region
      $region21: #{tpu_custom_call.1} parent=11 // pred_check
        %p168 = pneg %p100
      $region22: #{tpu_custom_call.1} parent=11 // pred_check_branch
        %170 = sbr.rel (%p168) target = $region24
      $region23: #{tpu_custom_call.1} parent=11 // pred_region
        _
      $region24: #{tpu_custom_call.1} parent=11 // pred_fallthru
        _
      // Predicated region
      $region25: #{tpu_custom_call.1} parent=11 // pred_check
        %p171 = pneg %p121
      $region26: #{tpu_custom_call.1} parent=11 // pred_check_branch
        %173 = sbr.rel (%p171) target = $region28
      $region27: #{tpu_custom_call.1} parent=11 // pred_region
        _
      $region28: #{tpu_custom_call.1} parent=11 // pred_fallthru
        _
    $region12: #{tpu_custom_call.1} parent=5 // pred_fallthru
      _
    %p174 = scmp.lt.s32.totalorder %s11, 2
    // Predicated region
    $region29: #{tpu_custom_call.1} parent=5 // pred_check
      %p175 = pneg %p174
    $region30: #{tpu_custom_call.1} parent=5 // pred_check_branch
      %177 = sbr.rel (%p175) target = $region32
    $region31: #{tpu_custom_call.1} parent=5 // pred_region
      // Predicated region
      $region33: #{tpu_custom_call.1} parent=31 // pred_check
        %p178 = pneg %p31
      $region34: #{tpu_custom_call.1} parent=31 // pred_check_branch
        %180 = sbr.rel (%p178) target = $region36
      $region35: #{tpu_custom_call.1} parent=31 // pred_region
        %p181 = scmp.lt.s32.totalorder %s11, 1
        %s182 = scalar_select %p181, %s11, 1
        %s183 = smul.addr %s182, 32
        %s184 = smul.addr %s183, 8
        %s185 = scalar_lea.vmem %s0, %s184
      $region36: #{tpu_custom_call.1} parent=31 // pred_fallthru
        _
    $region32: #{tpu_custom_call.1} parent=5 // pred_fallthru
      _
    %p186 = scmp.le.s32.totalorder 1, %s11
    %p187 = scmp.lt.s32.totalorder %s11, 3
    %p188 = pnand %p186, %p187
    %p189 = pneg %p188
    // Predicated region
    $region37: #{tpu_custom_call.1} parent=5 // pred_check
      _
    $region38: #{tpu_custom_call.1} parent=5 // pred_check_branch
      %191 = sbr.rel (%p188) target = $region40
    $region39: #{tpu_custom_call.1} parent=5 // pred_region
      %s192 = ssub.s32 %s11, 1
      %p193 = scmp.lt.s32.totalorder %s16, 1
      %s194 = scalar_select %p193, %s16, 1
      %s195 = smul.addr %s194, 32
      %s196 = smul.addr %s195, 8
      %s197 = scalar_lea.vmem %s0, %s196
      %p198 = pneg %p37
      %p199 = pneg %p34
      %p200 = pneg %p58
      %p201 = pneg %p55
      %p202 = pneg %p79
      %p203 = pneg %p76
      %p204 = pneg %p100
      %p205 = pneg %p97
      %p206 = pneg %p121
      %p207 = pneg %p118
      %p208 = pneg %p147
      %p209 = pneg %p144
      %p210 = scmp.lt.s32.totalorder %s16, 1
      %s211 = scalar_select %p210, %s16, 1
      %s212 = smul.addr %s211, 32
      %s213 = smul.addr %s212, 8
      %s214 = scalar_lea.vmem %s5, %s213
      %p215 = scmp.lt.s32.totalorder %s16, 1
      %s216 = scalar_select %p215, %s16, 1
      %s217 = smul.addr %s216, 32
      %s218 = smul.addr %s217, 8
      %s219 = scalar_lea.vmem %s0, %s218
      %p220 = scmp.lt.s32.totalorder %s16, 1
      %s221 = scalar_select %p220, %s16, 1
      %s222 = smul.addr %s221, 32
      %s223 = smul.addr %s222, 8
      %s224 = scalar_lea.vmem %s5, %s223
      %vm225 = vcmask 31744
      %226 = vst.msk [vmem:[#allocation2] sm:$0xff] %vm225, 0.0
      %227 = vst.msk [vmem:[#allocation2 + $0x8] sm:$0xff] %vm225, 0.0
      %vm228 = vcmask 25600
      %229 = vst.msk [vmem:[#allocation2 + $0x10] sm:$0x3] %vm228, 0.0
      %s230 = scalar_lea.vmem [#allocation2], 408
      %231 = vst.msk [vmem:[%s230] sm:$0xff] %vm225, 0.0
      %232 = vst.msk [vmem:[%s230 + $0x8] sm:$0xff] %vm225, 0.0
      %233 = vst.msk [vmem:[%s230 + $0x10] sm:$0x3] %vm228, 0.0
      %vm234 = vcmask 24576
      %235 = vst.msk [vmem:[#allocation2] sm:$0x1] %vm234, 0.0
      %236 = vst.msk [vmem:[#allocation2 + $0x18] sm:$0x1] %vm234, 0.0
      %237 = vst.msk [vmem:[#allocation2 + $0x30] sm:$0x1] %vm234, 0.0
      %238 = vst.msk [vmem:[#allocation2 + $0x48] sm:$0x1] %vm234, 0.0
      %239 = vst.msk [vmem:[#allocation2 + $0x60] sm:$0x1] %vm234, 0.0
      %240 = vst.msk [vmem:[#allocation2 + $0x78] sm:$0x1] %vm234, 0.0
      %241 = vst.msk [vmem:[#allocation2 + $0x90] sm:$0x1] %vm234, 0.0
      %242 = vst.msk [vmem:[#allocation2 + $0xa8] sm:$0x1] %vm234, 0.0
      %243 = vst.msk [vmem:[#allocation2 + $0xc0] sm:$0x1] %vm234, 0.0
      %244 = vst.msk [vmem:[#allocation2 + $0xd8] sm:$0x1] %vm234, 0.0
      %245 = vst.msk [vmem:[#allocation2 + $0xf0] sm:$0x1] %vm234, 0.0
      %246 = vst.msk [vmem:[#allocation2 + $0x108] sm:$0x1] %vm234, 0.0
      %247 = vst.msk [vmem:[#allocation2 + $0x120] sm:$0x1] %vm234, 0.0
      %248 = vst.msk [vmem:[#allocation2 + $0x138] sm:$0x1] %vm234, 0.0
      %249 = vst.msk [vmem:[#allocation2 + $0x150] sm:$0x1] %vm234, 0.0
      %250 = vst.msk [vmem:[#allocation2 + $0x168] sm:$0x1] %vm234, 0.0
      %251 = vst.msk [vmem:[#allocation2 + $0x180] sm:$0x1] %vm234, 0.0
      %252 = vst.msk [vmem:[#allocation2 + $0x198] sm:$0x1] %vm234, 0.0
      %253 = vst.msk [vmem:[#allocation2 + $0x11] sm:$0x1] %vm234, 0.0
      %254 = vst.msk [vmem:[#allocation2 + $0x29] sm:$0x1] %vm234, 0.0
      %255 = vst.msk [vmem:[#allocation2 + $0x41] sm:$0x1] %vm234, 0.0
      %256 = vst.msk [vmem:[#allocation2 + $0x59] sm:$0x1] %vm234, 0.0
      %257 = vst.msk [vmem:[#allocation2 + $0x71] sm:$0x1] %vm234, 0.0
      %258 = vst.msk [vmem:[#allocation2 + $0x89] sm:$0x1] %vm234, 0.0
      %259 = vst.msk [vmem:[#allocation2 + $0xa1] sm:$0x1] %vm234, 0.0
      %260 = vst.msk [vmem:[#allocation2 + $0xb9] sm:$0x1] %vm234, 0.0
      %261 = vst.msk [vmem:[#allocation2 + $0xd1] sm:$0x1] %vm234, 0.0
      %262 = vst.msk [vmem:[#allocation2 + $0xe9] sm:$0x1] %vm234, 0.0
      %263 = vst.msk [vmem:[#allocation2 + $0x101] sm:$0x1] %vm234, 0.0
      %264 = vst.msk [vmem:[#allocation2 + $0x119] sm:$0x1] %vm234, 0.0
      %265 = vst.msk [vmem:[#allocation2 + $0x131] sm:$0x1] %vm234, 0.0
      %266 = vst.msk [vmem:[#allocation2 + $0x149] sm:$0x1] %vm234, 0.0
      %267 = vst.msk [vmem:[#allocation2 + $0x161] sm:$0x1] %vm234, 0.0
      %268 = vst.msk [vmem:[#allocation2 + $0x179] sm:$0x1] %vm234, 0.0
      %269 = vst.msk [vmem:[#allocation2 + $0x191] sm:$0x1] %vm234, 0.0
      %270 = vst.msk [vmem:[#allocation2 + $0x1a9] sm:$0x1] %vm234, 0.0
      %v271 = vld [vmem:[%s219] sm:$0xff]
      %v272 = vld [vmem:[%s219 + $0x8] sm:$0xff]
      %v273 = vld [vmem:[%s219 + $0x10] sm:$0xff]
      %v274 = vld [vmem:[%s219 + $0x18] sm:$0xff]
      %v275 = vld [vmem:[%s219 + $0x20] sm:$0xff]
      %v276 = vld [vmem:[%s219 + $0x28] sm:$0xff]
      %v277 = vld [vmem:[%s219 + $0x30] sm:$0xff]
      %v278 = vld [vmem:[%s219 + $0x38] sm:$0xff]
      %v279 = vld [vmem:[%s219 + $0x40] sm:$0xff]
      %v280 = vld [vmem:[%s219 + $0x48] sm:$0xff]
      %v281 = vld [vmem:[%s219 + $0x50] sm:$0xff]
      %v282 = vld [vmem:[%s219 + $0x58] sm:$0xff]
      %v283 = vld [vmem:[%s219 + $0x60] sm:$0xff]
      %v284 = vld [vmem:[%s219 + $0x68] sm:$0xff]
      %v285 = vld [vmem:[%s219 + $0x70] sm:$0xff]
      %v286 = vld [vmem:[%s219 + $0x78] sm:$0xff]
      %v287 = vld [vmem:[%s219 + $0x80] sm:$0xff]
      %v288 = vld [vmem:[%s219 + $0x88] sm:$0xff]
      %v289 = vld [vmem:[%s219 + $0x90] sm:$0xff]
      %v290 = vld [vmem:[%s219 + $0x98] sm:$0xff]
      %v291 = vld [vmem:[%s219 + $0xa0] sm:$0xff]
      %v292 = vld [vmem:[%s219 + $0xa8] sm:$0xff]
      %v293 = vld [vmem:[%s219 + $0xb0] sm:$0xff]
      %v294 = vld [vmem:[%s219 + $0xb8] sm:$0xff]
      %v295 = vld [vmem:[%s219 + $0xc0] sm:$0xff]
      %v296 = vld [vmem:[%s219 + $0xc8] sm:$0xff]
      %v297 = vld [vmem:[%s219 + $0xd0] sm:$0xff]
      %v298 = vld [vmem:[%s219 + $0xd8] sm:$0xff]
      %v299 = vld [vmem:[%s219 + $0xe0] sm:$0xff]
      %v300 = vld [vmem:[%s219 + $0xe8] sm:$0xff]
      %v301 = vld [vmem:[%s219 + $0xf0] sm:$0xff]
      %v302 = vld [vmem:[%s219 + $0xf8] sm:$0xff]
      %s303 = scalar_lea.vmem [#allocation2], 24
      %304 = vst.msk [vmem:[%s303 + $0x1] sm:$0xff] %vm225, %v271
      %305 = vst.msk [vmem:[%s303 + $0x9] sm:$0xff] %vm225, %v272
      %306 = vst.msk [vmem:[%s303 + $0x19] sm:$0xff] %vm225, %v273
      %307 = vst.msk [vmem:[%s303 + $0x21] sm:$0xff] %vm225, %v274
      %308 = vst.msk [vmem:[%s303 + $0x31] sm:$0xff] %vm225, %v275
      %309 = vst.msk [vmem:[%s303 + $0x39] sm:$0xff] %vm225, %v276
      %310 = vst.msk [vmem:[%s303 + $0x49] sm:$0xff] %vm225, %v277
      %311 = vst.msk [vmem:[%s303 + $0x51] sm:$0xff] %vm225, %v278
      %312 = vst.msk [vmem:[%s303 + $0x61] sm:$0xff] %vm225, %v279
      %313 = vst.msk [vmem:[%s303 + $0x69] sm:$0xff] %vm225, %v280
      %314 = vst.msk [vmem:[%s303 + $0x79] sm:$0xff] %vm225, %v281
      %315 = vst.msk [vmem:[%s303 + $0x81] sm:$0xff] %vm225, %v282
      %316 = vst.msk [vmem:[%s303 + $0x91] sm:$0xff] %vm225, %v283
      %317 = vst.msk [vmem:[%s303 + $0x99] sm:$0xff] %vm225, %v284
      %318 = vst.msk [vmem:[%s303 + $0xa9] sm:$0xff] %vm225, %v285
      %319 = vst.msk [vmem:[%s303 + $0xb1] sm:$0xff] %vm225, %v286
      %320 = vst.msk [vmem:[%s303 + $0xc1] sm:$0xff] %vm225, %v287
      %321 = vst.msk [vmem:[%s303 + $0xc9] sm:$0xff] %vm225, %v288
      %322 = vst.msk [vmem:[%s303 + $0xd9] sm:$0xff] %vm225, %v289
      %323 = vst.msk [vmem:[%s303 + $0xe1] sm:$0xff] %vm225, %v290
      %324 = vst.msk [vmem:[%s303 + $0xf1] sm:$0xff] %vm225, %v291
      %325 = vst.msk [vmem:[%s303 + $0xf9] sm:$0xff] %vm225, %v292
      %326 = vst.msk [vmem:[%s303 + $0x109] sm:$0xff] %vm225, %v293
      %327 = vst.msk [vmem:[%s303 + $0x111] sm:$0xff] %vm225, %v294
      %328 = vst.msk [vmem:[%s303 + $0x121] sm:$0xff] %vm225, %v295
      %329 = vst.msk [vmem:[%s303 + $0x129] sm:$0xff] %vm225, %v296
      %330 = vst.msk [vmem:[%s303 + $0x139] sm:$0xff] %vm225, %v297
      %331 = vst.msk [vmem:[%s303 + $0x141] sm:$0xff] %vm225, %v298
      %332 = vst.msk [vmem:[%s303 + $0x151] sm:$0xff] %vm225, %v299
      %333 = vst.msk [vmem:[%s303 + $0x159] sm:$0xff] %vm225, %v300
      %334 = vst.msk [vmem:[%s303 + $0x169] sm:$0xff] %vm225, %v301
      %335 = vst.msk [vmem:[%s303 + $0x171] sm:$0xff] %vm225, %v302
      %v336 = vld [vmem:[#allocation2] sm:$0xff]
      %v337 = vld [vmem:[#allocation2 + $0x8] sm:$0xff]
      %v338 = vld [vmem:[#allocation2 + $0x18] sm:$0xff]
      %v339 = vld [vmem:[#allocation2 + $0x20] sm:$0xff]
      %v340 = vld [vmem:[#allocation2 + $0x30] sm:$0xff]
      %v341 = vld [vmem:[#allocation2 + $0x38] sm:$0xff]
      %v342 = vld [vmem:[#allocation2 + $0x48] sm:$0xff]
      %v343 = vld [vmem:[#allocation2 + $0x50] sm:$0xff]
      %v344 = vld [vmem:[#allocation2 + $0x60] sm:$0xff]
      %v345 = vld [vmem:[#allocation2 + $0x68] sm:$0xff]
      %v346 = vld [vmem:[#allocation2 + $0x78] sm:$0xff]
      %v347 = vld [vmem:[#allocation2 + $0x80] sm:$0xff]
      %v348 = vld [vmem:[#allocation2 + $0x90] sm:$0xff]
      %v349 = vld [vmem:[#allocation2 + $0x98] sm:$0xff]
      %v350 = vld [vmem:[#allocation2 + $0xa8] sm:$0xff]
      %v351 = vld [vmem:[#allocation2 + $0xb0] sm:$0xff]
      %v352 = vld [vmem:[#allocation2 + $0xc0] sm:$0xff]
      %v353 = vld [vmem:[#allocation2 + $0xc8] sm:$0xff]
      %v354 = vld [vmem:[#allocation2 + $0xd8] sm:$0xff]
      %v355 = vld [vmem:[#allocation2 + $0xe0] sm:$0xff]
      %v356 = vld [vmem:[#allocation2 + $0xf0] sm:$0xff]
      %v357 = vld [vmem:[#allocation2 + $0xf8] sm:$0xff]
      %v358 = vld [vmem:[#allocation2 + $0x108] sm:$0xff]
      %v359 = vld [vmem:[#allocation2 + $0x110] sm:$0xff]
      %v360 = vld [vmem:[#allocation2 + $0x120] sm:$0xff]
      %v361 = vld [vmem:[#allocation2 + $0x128] sm:$0xff]
      %v362 = vld [vmem:[#allocation2 + $0x138] sm:$0xff]
      %v363 = vld [vmem:[#allocation2 + $0x140] sm:$0xff]
      %v364 = vld [vmem:[#allocation2 + $0x150] sm:$0xff]
      %v365 = vld [vmem:[#allocation2 + $0x158] sm:$0xff]
      %v366 = vld [vmem:[#allocation2 + $0x168] sm:$0xff]
      %v367 = vld [vmem:[#allocation2 + $0x170] sm:$0xff]
      %368 = vst.msk [vmem:[#allocation3] sm:$0xff] %vm225, %v336
      %369 = vst.msk [vmem:[#allocation3 + $0x8] sm:$0xff] %vm225, %v337
      %370 = vst.msk [vmem:[#allocation3 + $0x10] sm:$0xff] %vm225, %v338
      %371 = vst.msk [vmem:[#allocation3 + $0x18] sm:$0xff] %vm225, %v339
      %372 = vst.msk [vmem:[#allocation3 + $0x20] sm:$0xff] %vm225, %v340
      %373 = vst.msk [vmem:[#allocation3 + $0x28] sm:$0xff] %vm225, %v341
      %374 = vst.msk [vmem:[#allocation3 + $0x30] sm:$0xff] %vm225, %v342
      %375 = vst.msk [vmem:[#allocation3 + $0x38] sm:$0xff] %vm225, %v343
      %376 = vst.msk [vmem:[#allocation3 + $0x40] sm:$0xff] %vm225, %v344
      %377 = vst.msk [vmem:[#allocation3 + $0x48] sm:$0xff] %vm225, %v345
      %378 = vst.msk [vmem:[#allocation3 + $0x50] sm:$0xff] %vm225, %v346
      %379 = vst.msk [vmem:[#allocation3 + $0x58] sm:$0xff] %vm225, %v347
      %380 = vst.msk [vmem:[#allocation3 + $0x60] sm:$0xff] %vm225, %v348
      %381 = vst.msk [vmem:[#allocation3 + $0x68] sm:$0xff] %vm225, %v349
      %382 = vst.msk [vmem:[#allocation3 + $0x70] sm:$0xff] %vm225, %v350
      %383 = vst.msk [vmem:[#allocation3 + $0x78] sm:$0xff] %vm225, %v351
      %384 = vst.msk [vmem:[#allocation3 + $0x80] sm:$0xff] %vm225, %v352
      %385 = vst.msk [vmem:[#allocation3 + $0x88] sm:$0xff] %vm225, %v353
      %386 = vst.msk [vmem:[#allocation3 + $0x90] sm:$0xff] %vm225, %v354
      %387 = vst.msk [vmem:[#allocation3 + $0x98] sm:$0xff] %vm225, %v355
      %388 = vst.msk [vmem:[#allocation3 + $0xa0] sm:$0xff] %vm225, %v356
      %389 = vst.msk [vmem:[#allocation3 + $0xa8] sm:$0xff] %vm225, %v357
      %390 = vst.msk [vmem:[#allocation3 + $0xb0] sm:$0xff] %vm225, %v358
      %391 = vst.msk [vmem:[#allocation3 + $0xb8] sm:$0xff] %vm225, %v359
      %392 = vst.msk [vmem:[#allocation3 + $0xc0] sm:$0xff] %vm225, %v360
      %393 = vst.msk [vmem:[#allocation3 + $0xc8] sm:$0xff] %vm225, %v361
      %394 = vst.msk [vmem:[#allocation3 + $0xd0] sm:$0xff] %vm225, %v362
      %395 = vst.msk [vmem:[#allocation3 + $0xd8] sm:$0xff] %vm225, %v363
      %396 = vst.msk [vmem:[#allocation3 + $0xe0] sm:$0xff] %vm225, %v364
      %397 = vst.msk [vmem:[#allocation3 + $0xe8] sm:$0xff] %vm225, %v365
      %398 = vst.msk [vmem:[#allocation3 + $0xf0] sm:$0xff] %vm225, %v366
      %399 = vst.msk [vmem:[#allocation3 + $0xf8] sm:$0xff] %vm225, %v367
      %v400 = vld [vmem:[#allocation2 + $0x1] sm:$0xff]
      %v401 = vld [vmem:[#allocation2 + $0x9] sm:$0xff]
      %v402 = vld [vmem:[#allocation2 + $0x19] sm:$0xff]
      %v403 = vld [vmem:[#allocation2 + $0x21] sm:$0xff]
      %v404 = vld [vmem:[#allocation2 + $0x31] sm:$0xff]
      %v405 = vld [vmem:[#allocation2 + $0x39] sm:$0xff]
      %v406 = vld [vmem:[#allocation2 + $0x49] sm:$0xff]
      %v407 = vld [vmem:[#allocation2 + $0x51] sm:$0xff]
      %v408 = vld [vmem:[#allocation2 + $0x61] sm:$0xff]
      %v409 = vld [vmem:[#allocation2 + $0x69] sm:$0xff]
      %v410 = vld [vmem:[#allocation2 + $0x79] sm:$0xff]
      %v411 = vld [vmem:[#allocation2 + $0x81] sm:$0xff]
      %v412 = vld [vmem:[#allocation2 + $0x91] sm:$0xff]
      %v413 = vld [vmem:[#allocation2 + $0x99] sm:$0xff]
      %v414 = vld [vmem:[#allocation2 + $0xa9] sm:$0xff]
      %v415 = vld [vmem:[#allocation2 + $0xb1] sm:$0xff]
      %v416 = vld [vmem:[#allocation2 + $0xc1] sm:$0xff]
      %v417 = vld [vmem:[#allocation2 + $0xc9] sm:$0xff]
      %v418 = vld [vmem:[#allocation2 + $0xd9] sm:$0xff]
      %v419 = vld [vmem:[#allocation2 + $0xe1] sm:$0xff]
      %v420 = vld [vmem:[#allocation2 + $0xf1] sm:$0xff]
      %v421 = vld [vmem:[#allocation2 + $0xf9] sm:$0xff]
      %v422 = vld [vmem:[#allocation2 + $0x109] sm:$0xff]
      %v423 = vld [vmem:[#allocation2 + $0x111] sm:$0xff]
      %v424 = vld [vmem:[#allocation2 + $0x121] sm:$0xff]
      %v425 = vld [vmem:[#allocation2 + $0x129] sm:$0xff]
      %v426 = vld [vmem:[#allocation2 + $0x139] sm:$0xff]
      %v427 = vld [vmem:[#allocation2 + $0x141] sm:$0xff]
      %v428 = vld [vmem:[#allocation2 + $0x151] sm:$0xff]
      %v429 = vld [vmem:[#allocation2 + $0x159] sm:$0xff]
      %v430 = vld [vmem:[#allocation2 + $0x169] sm:$0xff]
      %v431 = vld [vmem:[#allocation2 + $0x171] sm:$0xff]
      %464 = vrot.lane.b32.xlu0 %v400, 4
      %v465 = vpop.permute.xlu0 %464
      %466 = vrot.lane.b32.xlu0 %v401, 4
      %v467 = vpop.permute.xlu0 %466
      %468 = vrot.lane.b32.xlu0 %v402, 4
      %v469 = vpop.permute.xlu0 %468
      %470 = vrot.lane.b32.xlu0 %v403, 4
      %v471 = vpop.permute.xlu0 %470
      %472 = vrot.lane.b32.xlu0 %v404, 4
      %v473 = vpop.permute.xlu0 %472
      %474 = vrot.lane.b32.xlu0 %v405, 4
      %v475 = vpop.permute.xlu0 %474
      %476 = vrot.lane.b32.xlu0 %v406, 4
      %v477 = vpop.permute.xlu0 %476
      %478 = vrot.lane.b32.xlu0 %v407, 4
      %v479 = vpop.permute.xlu0 %478
      %480 = vrot.lane.b32.xlu0 %v408, 4
      %v481 = vpop.permute.xlu0 %480
      %482 = vrot.lane.b32.xlu0 %v409, 4
      %v483 = vpop.permute.xlu0 %482
      %484 = vrot.lane.b32.xlu0 %v410, 4
      %v485 = vpop.permute.xlu0 %484
      %486 = vrot.lane.b32.xlu0 %v411, 4
      %v487 = vpop.permute.xlu0 %486
      %488 = vrot.lane.b32.xlu0 %v412, 4
      %v489 = vpop.permute.xlu0 %488
      %490 = vrot.lane.b32.xlu0 %v413, 4
      %v491 = vpop.permute.xlu0 %490
      %492 = vrot.lane.b32.xlu0 %v414, 4
      %v493 = vpop.permute.xlu0 %492
      %494 = vrot.lane.b32.xlu0 %v415, 4
      %v495 = vpop.permute.xlu0 %494
      %496 = vrot.lane.b32.xlu0 %v416, 4
      %v497 = vpop.permute.xlu0 %496
      %498 = vrot.lane.b32.xlu0 %v417, 4
      %v499 = vpop.permute.xlu0 %498
      %500 = vrot.lane.b32.xlu0 %v418, 4
      %v501 = vpop.permute.xlu0 %500
      %502 = vrot.lane.b32.xlu0 %v419, 4
      %v503 = vpop.permute.xlu0 %502
      %504 = vrot.lane.b32.xlu0 %v420, 4
      %v505 = vpop.permute.xlu0 %504
      %506 = vrot.lane.b32.xlu0 %v421, 4
      %v507 = vpop.permute.xlu0 %506
      %508 = vrot.lane.b32.xlu0 %v422, 4
      %v509 = vpop.permute.xlu0 %508
      %510 = vrot.lane.b32.xlu0 %v423, 4
      %v511 = vpop.permute.xlu0 %510
      %512 = vrot.lane.b32.xlu0 %v424, 4
      %v513 = vpop.permute.xlu0 %512
      %514 = vrot.lane.b32.xlu0 %v425, 4
      %v515 = vpop.permute.xlu0 %514
      %516 = vrot.lane.b32.xlu0 %v426, 4
      %v517 = vpop.permute.xlu0 %516
      %518 = vrot.lane.b32.xlu0 %v427, 4
      %v519 = vpop.permute.xlu0 %518
      %520 = vrot.lane.b32.xlu0 %v428, 4
      %v521 = vpop.permute.xlu0 %520
      %522 = vrot.lane.b32.xlu0 %v429, 4
      %v523 = vpop.permute.xlu0 %522
      %524 = vrot.lane.b32.xlu0 %v430, 4
      %v525 = vpop.permute.xlu0 %524
      %526 = vrot.lane.b32.xlu0 %v431, 4
      %v527 = vpop.permute.xlu0 %526
      %vm560 = vcmask 64544
      %561 = vst.msk [vmem:[#allocation3] sm:$0xff] %vm560, %v465
      %562 = vst.msk [vmem:[#allocation3 + $0x8] sm:$0xff] %vm560, %v467
      %563 = vst.msk [vmem:[#allocation3 + $0x10] sm:$0xff] %vm560, %v469
      %564 = vst.msk [vmem:[#allocation3 + $0x18] sm:$0xff] %vm560, %v471
      %565 = vst.msk [vmem:[#allocation3 + $0x20] sm:$0xff] %vm560, %v473
      %566 = vst.msk [vmem:[#allocation3 + $0x28] sm:$0xff] %vm560, %v475
      %567 = vst.msk [vmem:[#allocation3 + $0x30] sm:$0xff] %vm560, %v477
      %568 = vst.msk [vmem:[#allocation3 + $0x38] sm:$0xff] %vm560, %v479
      %569 = vst.msk [vmem:[#allocation3 + $0x40] sm:$0xff] %vm560, %v481
      %570 = vst.msk [vmem:[#allocation3 + $0x48] sm:$0xff] %vm560, %v483
      %571 = vst.msk [vmem:[#allocation3 + $0x50] sm:$0xff] %vm560, %v485
      %572 = vst.msk [vmem:[#allocation3 + $0x58] sm:$0xff] %vm560, %v487
      %573 = vst.msk [vmem:[#allocation3 + $0x60] sm:$0xff] %vm560, %v489
      %574 = vst.msk [vmem:[#allocation3 + $0x68] sm:$0xff] %vm560, %v491
      %575 = vst.msk [vmem:[#allocation3 + $0x70] sm:$0xff] %vm560, %v493
      %576 = vst.msk [vmem:[#allocation3 + $0x78] sm:$0xff] %vm560, %v495
      %577 = vst.msk [vmem:[#allocation3 + $0x80] sm:$0xff] %vm560, %v497
      %578 = vst.msk [vmem:[#allocation3 + $0x88] sm:$0xff] %vm560, %v499
      %579 = vst.msk [vmem:[#allocation3 + $0x90] sm:$0xff] %vm560, %v501
      %580 = vst.msk [vmem:[#allocation3 + $0x98] sm:$0xff] %vm560, %v503
      %581 = vst.msk [vmem:[#allocation3 + $0xa0] sm:$0xff] %vm560, %v505
      %582 = vst.msk [vmem:[#allocation3 + $0xa8] sm:$0xff] %vm560, %v507
      %583 = vst.msk [vmem:[#allocation3 + $0xb0] sm:$0xff] %vm560, %v509
      %584 = vst.msk [vmem:[#allocation3 + $0xb8] sm:$0xff] %vm560, %v511
      %585 = vst.msk [vmem:[#allocation3 + $0xc0] sm:$0xff] %vm560, %v513
      %586 = vst.msk [vmem:[#allocation3 + $0xc8] sm:$0xff] %vm560, %v515
      %587 = vst.msk [vmem:[#allocation3 + $0xd0] sm:$0xff] %vm560, %v517
      %588 = vst.msk [vmem:[#allocation3 + $0xd8] sm:$0xff] %vm560, %v519
      %589 = vst.msk [vmem:[#allocation3 + $0xe0] sm:$0xff] %vm560, %v521
      %590 = vst.msk [vmem:[#allocation3 + $0xe8] sm:$0xff] %vm560, %v523
      %591 = vst.msk [vmem:[#allocation3 + $0xf0] sm:$0xff] %vm560, %v525
      %592 = vst.msk [vmem:[#allocation3 + $0xf8] sm:$0xff] %vm560, %v527
      %v593 = vld [vmem:[#allocation2 + $0x2] sm:$0xff]
      %v594 = vld [vmem:[#allocation2 + $0xa] sm:$0xff]
      %v595 = vld [vmem:[#allocation2 + $0x1a] sm:$0xff]
      %v596 = vld [vmem:[#allocation2 + $0x22] sm:$0xff]
      %v597 = vld [vmem:[#allocation2 + $0x32] sm:$0xff]
      %v598 = vld [vmem:[#allocation2 + $0x3a] sm:$0xff]
      %v599 = vld [vmem:[#allocation2 + $0x4a] sm:$0xff]
      %v600 = vld [vmem:[#allocation2 + $0x52] sm:$0xff]
      %v601 = vld [vmem:[#allocation2 + $0x62] sm:$0xff]
      %v602 = vld [vmem:[#allocation2 + $0x6a] sm:$0xff]
      %v603 = vld [vmem:[#allocation2 + $0x7a] sm:$0xff]
      %v604 = vld [vmem:[#allocation2 + $0x82] sm:$0xff]
      %v605 = vld [vmem:[#allocation2 + $0x92] sm:$0xff]
      %v606 = vld [vmem:[#allocation2 + $0x9a] sm:$0xff]
      %v607 = vld [vmem:[#allocation2 + $0xaa] sm:$0xff]
      %v608 = vld [vmem:[#allocation2 + $0xb2] sm:$0xff]
      %v609 = vld [vmem:[#allocation2 + $0xc2] sm:$0xff]
      %v610 = vld [vmem:[#allocation2 + $0xca] sm:$0xff]
      %v611 = vld [vmem:[#allocation2 + $0xda] sm:$0xff]
      %v612 = vld [vmem:[#allocation2 + $0xe2] sm:$0xff]
      %v613 = vld [vmem:[#allocation2 + $0xf2] sm:$0xff]
      %v614 = vld [vmem:[#allocation2 + $0xfa] sm:$0xff]
      %v615 = vld [vmem:[#allocation2 + $0x10a] sm:$0xff]
      %v616 = vld [vmem:[#allocation2 + $0x112] sm:$0xff]
      %v617 = vld [vmem:[#allocation2 + $0x122] sm:$0xff]
      %v618 = vld [vmem:[#allocation2 + $0x12a] sm:$0xff]
      %v619 = vld [vmem:[#allocation2 + $0x13a] sm:$0xff]
      %v620 = vld [vmem:[#allocation2 + $0x142] sm:$0xff]
      %v621 = vld [vmem:[#allocation2 + $0x152] sm:$0xff]
      %v622 = vld [vmem:[#allocation2 + $0x15a] sm:$0xff]
      %v623 = vld [vmem:[#allocation2 + $0x16a] sm:$0xff]
      %v624 = vld [vmem:[#allocation2 + $0x172] sm:$0xff]
      %657 = vrot.lane.b32.xlu0 %v593, 8
      %v658 = vpop.permute.xlu0 %657
      %659 = vrot.lane.b32.xlu0 %v594, 8
      %v660 = vpop.permute.xlu0 %659
      %661 = vrot.lane.b32.xlu0 %v595, 8
      %v662 = vpop.permute.xlu0 %661
      %663 = vrot.lane.b32.xlu0 %v596, 8
      %v664 = vpop.permute.xlu0 %663
      %665 = vrot.lane.b32.xlu0 %v597, 8
      %v666 = vpop.permute.xlu0 %665
      %667 = vrot.lane.b32.xlu0 %v598, 8
      %v668 = vpop.permute.xlu0 %667
      %669 = vrot.lane.b32.xlu0 %v599, 8
      %v670 = vpop.permute.xlu0 %669
      %671 = vrot.lane.b32.xlu0 %v600, 8
      %v672 = vpop.permute.xlu0 %671
      %673 = vrot.lane.b32.xlu0 %v601, 8
      %v674 = vpop.permute.xlu0 %673
      %675 = vrot.lane.b32.xlu0 %v602, 8
      %v676 = vpop.permute.xlu0 %675
      %677 = vrot.lane.b32.xlu0 %v603, 8
      %v678 = vpop.permute.xlu0 %677
      %679 = vrot.lane.b32.xlu0 %v604, 8
      %v680 = vpop.permute.xlu0 %679
      %681 = vrot.lane.b32.xlu0 %v605, 8
      %v682 = vpop.permute.xlu0 %681
      %683 = vrot.lane.b32.xlu0 %v606, 8
      %v684 = vpop.permute.xlu0 %683
      %685 = vrot.lane.b32.xlu0 %v607, 8
      %v686 = vpop.permute.xlu0 %685
      %687 = vrot.lane.b32.xlu0 %v608, 8
      %v688 = vpop.permute.xlu0 %687
      %689 = vrot.lane.b32.xlu0 %v609, 8
      %v690 = vpop.permute.xlu0 %689
      %691 = vrot.lane.b32.xlu0 %v610, 8
      %v692 = vpop.permute.xlu0 %691
      %693 = vrot.lane.b32.xlu0 %v611, 8
      %v694 = vpop.permute.xlu0 %693
      %695 = vrot.lane.b32.xlu0 %v612, 8
      %v696 = vpop.permute.xlu0 %695
      %697 = vrot.lane.b32.xlu0 %v613, 8
      %v698 = vpop.permute.xlu0 %697
      %699 = vrot.lane.b32.xlu0 %v614, 8
      %v700 = vpop.permute.xlu0 %699
      %701 = vrot.lane.b32.xlu0 %v615, 8
      %v702 = vpop.permute.xlu0 %701
      %703 = vrot.lane.b32.xlu0 %v616, 8
      %v704 = vpop.permute.xlu0 %703
      %705 = vrot.lane.b32.xlu0 %v617, 8
      %v706 = vpop.permute.xlu0 %705
      %707 = vrot.lane.b32.xlu0 %v618, 8
      %v708 = vpop.permute.xlu0 %707
      %709 = vrot.lane.b32.xlu0 %v619, 8
      %v710 = vpop.permute.xlu0 %709
      %711 = vrot.lane.b32.xlu0 %v620, 8
      %v712 = vpop.permute.xlu0 %711
      %713 = vrot.lane.b32.xlu0 %v621, 8
      %v714 = vpop.permute.xlu0 %713
      %715 = vrot.lane.b32.xlu0 %v622, 8
      %v716 = vpop.permute.xlu0 %715
      %717 = vrot.lane.b32.xlu0 %v623, 8
      %v718 = vpop.permute.xlu0 %717
      %719 = vrot.lane.b32.xlu0 %v624, 8
      %v720 = vpop.permute.xlu0 %719
      %vm753 = vcmask 97344
      %754 = vst.msk [vmem:[#allocation3] sm:$0xff] %vm753, %v658
      %755 = vst.msk [vmem:[#allocation3 + $0x8] sm:$0xff] %vm753, %v660
      %756 = vst.msk [vmem:[#allocation3 + $0x10] sm:$0xff] %vm753, %v662
      %757 = vst.msk [vmem:[#allocation3 + $0x18] sm:$0xff] %vm753, %v664
      %758 = vst.msk [vmem:[#allocation3 + $0x20] sm:$0xff] %vm753, %v666
      %759 = vst.msk [vmem:[#allocation3 + $0x28] sm:$0xff] %vm753, %v668
      %760 = vst.msk [vmem:[#allocation3 + $0x30] sm:$0xff] %vm753, %v670
      %761 = vst.msk [vmem:[#allocation3 + $0x38] sm:$0xff] %vm753, %v672
      %762 = vst.msk [vmem:[#allocation3 + $0x40] sm:$0xff] %vm753, %v674
      %763 = vst.msk [vmem:[#allocation3 + $0x48] sm:$0xff] %vm753, %v676
      %764 = vst.msk [vmem:[#allocation3 + $0x50] sm:$0xff] %vm753, %v678
      %765 = vst.msk [vmem:[#allocation3 + $0x58] sm:$0xff] %vm753, %v680
      %766 = vst.msk [vmem:[#allocation3 + $0x60] sm:$0xff] %vm753, %v682
      %767 = vst.msk [vmem:[#allocation3 + $0x68] sm:$0xff] %vm753, %v684
      %768 = vst.msk [vmem:[#allocation3 + $0x70] sm:$0xff] %vm753, %v686
      %769 = vst.msk [vmem:[#allocation3 + $0x78] sm:$0xff] %vm753, %v688
      %770 = vst.msk [vmem:[#allocation3 + $0x80] sm:$0xff] %vm753, %v690
      %771 = vst.msk [vmem:[#allocation3 + $0x88] sm:$0xff] %vm753, %v692
      %772 = vst.msk [vmem:[#allocation3 + $0x90] sm:$0xff] %vm753, %v694
      %773 = vst.msk [vmem:[#allocation3 + $0x98] sm:$0xff] %vm753, %v696
      %774 = vst.msk [vmem:[#allocation3 + $0xa0] sm:$0xff] %vm753, %v698
      %775 = vst.msk [vmem:[#allocation3 + $0xa8] sm:$0xff] %vm753, %v700
      %776 = vst.msk [vmem:[#allocation3 + $0xb0] sm:$0xff] %vm753, %v702
      %777 = vst.msk [vmem:[#allocation3 + $0xb8] sm:$0xff] %vm753, %v704
      %778 = vst.msk [vmem:[#allocation3 + $0xc0] sm:$0xff] %vm753, %v706
      %779 = vst.msk [vmem:[#allocation3 + $0xc8] sm:$0xff] %vm753, %v708
      %780 = vst.msk [vmem:[#allocation3 + $0xd0] sm:$0xff] %vm753, %v710
      %781 = vst.msk [vmem:[#allocation3 + $0xd8] sm:$0xff] %vm753, %v712
      %782 = vst.msk [vmem:[#allocation3 + $0xe0] sm:$0xff] %vm753, %v714
      %783 = vst.msk [vmem:[#allocation3 + $0xe8] sm:$0xff] %vm753, %v716
      %784 = vst.msk [vmem:[#allocation3 + $0xf0] sm:$0xff] %vm753, %v718
      %785 = vst.msk [vmem:[#allocation3 + $0xf8] sm:$0xff] %vm753, %v720
      %v786 = vld [vmem:[%s303] sm:$0xff]
      %v787 = vld [vmem:[%s303 + $0x8] sm:$0xff]
      %v788 = vld [vmem:[%s303 + $0x18] sm:$0xff]
      %v789 = vld [vmem:[%s303 + $0x20] sm:$0xff]
      %v790 = vld [vmem:[%s303 + $0x30] sm:$0xff]
      %v791 = vld [vmem:[%s303 + $0x38] sm:$0xff]
      %v792 = vld [vmem:[%s303 + $0x48] sm:$0xff]
      %v793 = vld [vmem:[%s303 + $0x50] sm:$0xff]
      %v794 = vld [vmem:[%s303 + $0x60] sm:$0xff]
      %v795 = vld [vmem:[%s303 + $0x68] sm:$0xff]
      %v796 = vld [vmem:[%s303 + $0x78] sm:$0xff]
      %v797 = vld [vmem:[%s303 + $0x80] sm:$0xff]
      %v798 = vld [vmem:[%s303 + $0x90] sm:$0xff]
      %v799 = vld [vmem:[%s303 + $0x98] sm:$0xff]
      %v800 = vld [vmem:[%s303 + $0xa8] sm:$0xff]
      %v801 = vld [vmem:[%s303 + $0xb0] sm:$0xff]
      %v802 = vld [vmem:[%s303 + $0xc0] sm:$0xff]
      %v803 = vld [vmem:[%s303 + $0xc8] sm:$0xff]
      %v804 = vld [vmem:[%s303 + $0xd8] sm:$0xff]
      %v805 = vld [vmem:[%s303 + $0xe0] sm:$0xff]
      %v806 = vld [vmem:[%s303 + $0xf0] sm:$0xff]
      %v807 = vld [vmem:[%s303 + $0xf8] sm:$0xff]
      %v808 = vld [vmem:[%s303 + $0x108] sm:$0xff]
      %v809 = vld [vmem:[%s303 + $0x110] sm:$0xff]
      %v810 = vld [vmem:[%s303 + $0x120] sm:$0xff]
      %v811 = vld [vmem:[%s303 + $0x128] sm:$0xff]
      %v812 = vld [vmem:[%s303 + $0x138] sm:$0xff]
      %v813 = vld [vmem:[%s303 + $0x140] sm:$0xff]
      %v814 = vld [vmem:[%s303 + $0x150] sm:$0xff]
      %v815 = vld [vmem:[%s303 + $0x158] sm:$0xff]
      %v816 = vld [vmem:[%s303 + $0x168] sm:$0xff]
      %v817 = vld [vmem:[%s303 + $0x170] sm:$0xff]
      %850 = vrot.lane.b32.xlu0 %v786, 12
      %v851 = vpop.permute.xlu0 %850
      %852 = vrot.lane.b32.xlu0 %v787, 12
      %v853 = vpop.permute.xlu0 %852
      %854 = vrot.lane.b32.xlu0 %v788, 12
      %v855 = vpop.permute.xlu0 %854
      %856 = vrot.lane.b32.xlu0 %v789, 12
      %v857 = vpop.permute.xlu0 %856
      %858 = vrot.lane.b32.xlu0 %v790, 12
      %v859 = vpop.permute.xlu0 %858
      %860 = vrot.lane.b32.xlu0 %v791, 12
      %v861 = vpop.permute.xlu0 %860
      %862 = vrot.lane.b32.xlu0 %v792, 12
      %v863 = vpop.permute.xlu0 %862
      %864 = vrot.lane.b32.xlu0 %v793, 12
      %v865 = vpop.permute.xlu0 %864
      %866 = vrot.lane.b32.xlu0 %v794, 12
      %v867 = vpop.permute.xlu0 %866
      %868 = vrot.lane.b32.xlu0 %v795, 12
      %v869 = vpop.permute.xlu0 %868
      %870 = vrot.lane.b32.xlu0 %v796, 12
      %v871 = vpop.permute.xlu0 %870
      %872 = vrot.lane.b32.xlu0 %v797, 12
      %v873 = vpop.permute.xlu0 %872
      %874 = vrot.lane.b32.xlu0 %v798, 12
      %v875 = vpop.permute.xlu0 %874
      %876 = vrot.lane.b32.xlu0 %v799, 12
      %v877 = vpop.permute.xlu0 %876
      %878 = vrot.lane.b32.xlu0 %v800, 12
      %v879 = vpop.permute.xlu0 %878
      %880 = vrot.lane.b32.xlu0 %v801, 12
      %v881 = vpop.permute.xlu0 %880
      %882 = vrot.lane.b32.xlu0 %v802, 12
      %v883 = vpop.permute.xlu0 %882
      %884 = vrot.lane.b32.xlu0 %v803, 12
      %v885 = vpop.permute.xlu0 %884
      %886 = vrot.lane.b32.xlu0 %v804, 12
      %v887 = vpop.permute.xlu0 %886
      %888 = vrot.lane.b32.xlu0 %v805, 12
      %v889 = vpop.permute.xlu0 %888
      %890 = vrot.lane.b32.xlu0 %v806, 12
      %v891 = vpop.permute.xlu0 %890
      %892 = vrot.lane.b32.xlu0 %v807, 12
      %v893 = vpop.permute.xlu0 %892
      %894 = vrot.lane.b32.xlu0 %v808, 12
      %v895 = vpop.permute.xlu0 %894
      %896 = vrot.lane.b32.xlu0 %v809, 12
      %v897 = vpop.permute.xlu0 %896
      %898 = vrot.lane.b32.xlu0 %v810, 12
      %v899 = vpop.permute.xlu0 %898
      %900 = vrot.lane.b32.xlu0 %v811, 12
      %v901 = vpop.permute.xlu0 %900
      %902 = vrot.lane.b32.xlu0 %v812, 12
      %v903 = vpop.permute.xlu0 %902
      %904 = vrot.lane.b32.xlu0 %v813, 12
      %v905 = vpop.permute.xlu0 %904
      %906 = vrot.lane.b32.xlu0 %v814, 12
      %v907 = vpop.permute.xlu0 %906
      %908 = vrot.lane.b32.xlu0 %v815, 12
      %v909 = vpop.permute.xlu0 %908
      %910 = vrot.lane.b32.xlu0 %v816, 12
      %v911 = vpop.permute.xlu0 %910
      %912 = vrot.lane.b32.xlu0 %v817, 12
      %v913 = vpop.permute.xlu0 %912
      %vm946 = vcmask 130144
      %947 = vst.msk [vmem:[#allocation3] sm:$0xff] %vm946, %v851
      %948 = vst.msk [vmem:[#allocation3 + $0x8] sm:$0xff] %vm946, %v853
      %949 = vst.msk [vmem:[#allocation3 + $0x10] sm:$0xff] %vm946, %v855
      %950 = vst.msk [vmem:[#allocation3 + $0x18] sm:$0xff] %vm946, %v857
      %951 = vst.msk [vmem:[#allocation3 + $0x20] sm:$0xff] %vm946, %v859
      %952 = vst.msk [vmem:[#allocation3 + $0x28] sm:$0xff] %vm946, %v861
      %953 = vst.msk [vmem:[#allocation3 + $0x30] sm:$0xff] %vm946, %v863
      %954 = vst.msk [vmem:[#allocation3 + $0x38] sm:$0xff] %vm946, %v865
      %955 = vst.msk [vmem:[#allocation3 + $0x40] sm:$0xff] %vm946, %v867
      %956 = vst.msk [vmem:[#allocation3 + $0x48] sm:$0xff] %vm946, %v869
      %957 = vst.msk [vmem:[#allocation3 + $0x50] sm:$0xff] %vm946, %v871
      %958 = vst.msk [vmem:[#allocation3 + $0x58] sm:$0xff] %vm946, %v873
      %959 = vst.msk [vmem:[#allocation3 + $0x60] sm:$0xff] %vm946, %v875
      %960 = vst.msk [vmem:[#allocation3 + $0x68] sm:$0xff] %vm946, %v877
      %961 = vst.msk [vmem:[#allocation3 + $0x70] sm:$0xff] %vm946, %v879
      %962 = vst.msk [vmem:[#allocation3 + $0x78] sm:$0xff] %vm946, %v881
      %963 = vst.msk [vmem:[#allocation3 + $0x80] sm:$0xff] %vm946, %v883
      %964 = vst.msk [vmem:[#allocation3 + $0x88] sm:$0xff] %vm946, %v885
      %965 = vst.msk [vmem:[#allocation3 + $0x90] sm:$0xff] %vm946, %v887
      %966 = vst.msk [vmem:[#allocation3 + $0x98] sm:$0xff] %vm946, %v889
      %967 = vst.msk [vmem:[#allocation3 + $0xa0] sm:$0xff] %vm946, %v891
      %968 = vst.msk [vmem:[#allocation3 + $0xa8] sm:$0xff] %vm946, %v893
      %969 = vst.msk [vmem:[#allocation3 + $0xb0] sm:$0xff] %vm946, %v895
      %970 = vst.msk [vmem:[#allocation3 + $0xb8] sm:$0xff] %vm946, %v897
      %971 = vst.msk [vmem:[#allocation3 + $0xc0] sm:$0xff] %vm946, %v899
      %972 = vst.msk [vmem:[#allocation3 + $0xc8] sm:$0xff] %vm946, %v901
      %973 = vst.msk [vmem:[#allocation3 + $0xd0] sm:$0xff] %vm946, %v903
      %974 = vst.msk [vmem:[#allocation3 + $0xd8] sm:$0xff] %vm946, %v905
      %975 = vst.msk [vmem:[#allocation3 + $0xe0] sm:$0xff] %vm946, %v907
      %976 = vst.msk [vmem:[#allocation3 + $0xe8] sm:$0xff] %vm946, %v909
      %977 = vst.msk [vmem:[#allocation3 + $0xf0] sm:$0xff] %vm946, %v911
      %978 = vst.msk [vmem:[#allocation3 + $0xf8] sm:$0xff] %vm946, %v913
      %v979 = vld [vmem:[%s303 + $0x1] sm:$0xff]
      %v980 = vld [vmem:[%s303 + $0x9] sm:$0xff]
      %v981 = vld [vmem:[%s303 + $0x19] sm:$0xff]
      %v982 = vld [vmem:[%s303 + $0x21] sm:$0xff]
      %v983 = vld [vmem:[%s303 + $0x31] sm:$0xff]
      %v984 = vld [vmem:[%s303 + $0x39] sm:$0xff]
      %v985 = vld [vmem:[%s303 + $0x49] sm:$0xff]
      %v986 = vld [vmem:[%s303 + $0x51] sm:$0xff]
      %v987 = vld [vmem:[%s303 + $0x61] sm:$0xff]
      %v988 = vld [vmem:[%s303 + $0x69] sm:$0xff]
      %v989 = vld [vmem:[%s303 + $0x79] sm:$0xff]
      %v990 = vld [vmem:[%s303 + $0x81] sm:$0xff]
      %v991 = vld [vmem:[%s303 + $0x91] sm:$0xff]
      %v992 = vld [vmem:[%s303 + $0x99] sm:$0xff]
      %v993 = vld [vmem:[%s303 + $0xa9] sm:$0xff]
      %v994 = vld [vmem:[%s303 + $0xb1] sm:$0xff]
      %v995 = vld [vmem:[%s303 + $0xc1] sm:$0xff]
      %v996 = vld [vmem:[%s303 + $0xc9] sm:$0xff]
      %v997 = vld [vmem:[%s303 + $0xd9] sm:$0xff]
      %v998 = vld [vmem:[%s303 + $0xe1] sm:$0xff]
      %v999 = vld [vmem:[%s303 + $0xf1] sm:$0xff]
      %v1000 = vld [vmem:[%s303 + $0xf9] sm:$0xff]
      %v1001 = vld [vmem:[%s303 + $0x109] sm:$0xff]
      %v1002 = vld [vmem:[%s303 + $0x111] sm:$0xff]
      %v1003 = vld [vmem:[%s303 + $0x121] sm:$0xff]
      %v1004 = vld [vmem:[%s303 + $0x129] sm:$0xff]
      %v1005 = vld [vmem:[%s303 + $0x139] sm:$0xff]
      %v1006 = vld [vmem:[%s303 + $0x141] sm:$0xff]
      %v1007 = vld [vmem:[%s303 + $0x151] sm:$0xff]
      %v1008 = vld [vmem:[%s303 + $0x159] sm:$0xff]
      %v1009 = vld [vmem:[%s303 + $0x169] sm:$0xff]
      %v1010 = vld [vmem:[%s303 + $0x171] sm:$0xff]
      %1043 = vrot.lane.b32.xlu0 %v979, 16
      %v1044 = vpop.permute.xlu0 %1043
      %1045 = vrot.lane.b32.xlu0 %v980, 16
      %v1046 = vpop.permute.xlu0 %1045
      %1047 = vrot.lane.b32.xlu0 %v981, 16
      %v1048 = vpop.permute.xlu0 %1047
      %1049 = vrot.lane.b32.xlu0 %v982, 16
      %v1050 = vpop.permute.xlu0 %1049
      %1051 = vrot.lane.b32.xlu0 %v983, 16
      %v1052 = vpop.permute.xlu0 %1051
      %1053 = vrot.lane.b32.xlu0 %v984, 16
      %v1054 = vpop.permute.xlu0 %1053
      %1055 = vrot.lane.b32.xlu0 %v985, 16
      %v1056 = vpop.permute.xlu0 %1055
      %1057 = vrot.lane.b32.xlu0 %v986, 16
      %v1058 = vpop.permute.xlu0 %1057
      %1059 = vrot.lane.b32.xlu0 %v987, 16
      %v1060 = vpop.permute.xlu0 %1059
      %1061 = vrot.lane.b32.xlu0 %v988, 16
      %v1062 = vpop.permute.xlu0 %1061
      %1063 = vrot.lane.b32.xlu0 %v989, 16
      %v1064 = vpop.permute.xlu0 %1063
      %1065 = vrot.lane.b32.xlu0 %v990, 16
      %v1066 = vpop.permute.xlu0 %1065
      %1067 = vrot.lane.b32.xlu0 %v991, 16
      %v1068 = vpop.permute.xlu0 %1067
      %1069 = vrot.lane.b32.xlu0 %v992, 16
      %v1070 = vpop.permute.xlu0 %1069
      %1071 = vrot.lane.b32.xlu0 %v993, 16
      %v1072 = vpop.permute.xlu0 %1071
      %1073 = vrot.lane.b32.xlu0 %v994, 16
      %v1074 = vpop.permute.xlu0 %1073
      %1075 = vrot.lane.b32.xlu0 %v995, 16
      %v1076 = vpop.permute.xlu0 %1075
      %1077 = vrot.lane.b32.xlu0 %v996, 16
      %v1078 = vpop.permute.xlu0 %1077
      %1079 = vrot.lane.b32.xlu0 %v997, 16
      %v1080 = vpop.permute.xlu0 %1079
      %1081 = vrot.lane.b32.xlu0 %v998, 16
      %v1082 = vpop.permute.xlu0 %1081
      %1083 = vrot.lane.b32.xlu0 %v999, 16
      %v1084 = vpop.permute.xlu0 %1083
      %1085 = vrot.lane.b32.xlu0 %v1000, 16
      %v1086 = vpop.permute.xlu0 %1085
      %1087 = vrot.lane.b32.xlu0 %v1001, 16
      %v1088 = vpop.permute.xlu0 %1087
      %1089 = vrot.lane.b32.xlu0 %v1002, 16
      %v1090 = vpop.permute.xlu0 %1089
      %1091 = vrot.lane.b32.xlu0 %v1003, 16
      %v1092 = vpop.permute.xlu0 %1091
      %1093 = vrot.lane.b32.xlu0 %v1004, 16
      %v1094 = vpop.permute.xlu0 %1093
      %1095 = vrot.lane.b32.xlu0 %v1005, 16
      %v1096 = vpop.permute.xlu0 %1095
      %1097 = vrot.lane.b32.xlu0 %v1006, 16
      %v1098 = vpop.permute.xlu0 %1097
      %1099 = vrot.lane.b32.xlu0 %v1007, 16
      %v1100 = vpop.permute.xlu0 %1099
      %1101 = vrot.lane.b32.xlu0 %v1008, 16
      %v1102 = vpop.permute.xlu0 %1101
      %1103 = vrot.lane.b32.xlu0 %v1009, 16
      %v1104 = vpop.permute.xlu0 %1103
      %1105 = vrot.lane.b32.xlu0 %v1010, 16
      %v1106 = vpop.permute.xlu0 %1105
      %vm1139 = vcmask 162944
      %1140 = vst.msk [vmem:[#allocation3] sm:$0xff] %vm1139, %v1044
      %1141 = vst.msk [vmem:[#allocation3 + $0x8] sm:$0xff] %vm1139, %v1046
      %1142 = vst.msk [vmem:[#allocation3 + $0x10] sm:$0xff] %vm1139, %v1048
      %1143 = vst.msk [vmem:[#allocation3 + $0x18] sm:$0xff] %vm1139, %v1050
      %1144 = vst.msk [vmem:[#allocation3 + $0x20] sm:$0xff] %vm1139, %v1052
      %1145 = vst.msk [vmem:[#allocation3 + $0x28] sm:$0xff] %vm1139, %v1054
      %1146 = vst.msk [vmem:[#allocation3 + $0x30] sm:$0xff] %vm1139, %v1056
      %1147 = vst.msk [vmem:[#allocation3 + $0x38] sm:$0xff] %vm1139, %v1058
      %1148 = vst.msk [vmem:[#allocation3 + $0x40] sm:$0xff] %vm1139, %v1060
      %1149 = vst.msk [vmem:[#allocation3 + $0x48] sm:$0xff] %vm1139, %v1062
      %1150 = vst.msk [vmem:[#allocation3 + $0x50] sm:$0xff] %vm1139, %v1064
      %1151 = vst.msk [vmem:[#allocation3 + $0x58] sm:$0xff] %vm1139, %v1066
      %1152 = vst.msk [vmem:[#allocation3 + $0x60] sm:$0xff] %vm1139, %v1068
      %1153 = vst.msk [vmem:[#allocation3 + $0x68] sm:$0xff] %vm1139, %v1070
      %1154 = vst.msk [vmem:[#allocation3 + $0x70] sm:$0xff] %vm1139, %v1072
      %1155 = vst.msk [vmem:[#allocation3 + $0x78] sm:$0xff] %vm1139, %v1074
      %1156 = vst.msk [vmem:[#allocation3 + $0x80] sm:$0xff] %vm1139, %v1076
      %1157 = vst.msk [vmem:[#allocation3 + $0x88] sm:$0xff] %vm1139, %v1078
      %1158 = vst.msk [vmem:[#allocation3 + $0x90] sm:$0xff] %vm1139, %v1080
      %1159 = vst.msk [vmem:[#allocation3 + $0x98] sm:$0xff] %vm1139, %v1082
      %1160 = vst.msk [vmem:[#allocation3 + $0xa0] sm:$0xff] %vm1139, %v1084
      %1161 = vst.msk [vmem:[#allocation3 + $0xa8] sm:$0xff] %vm1139, %v1086
      %1162 = vst.msk [vmem:[#allocation3 + $0xb0] sm:$0xff] %vm1139, %v1088
      %1163 = vst.msk [vmem:[#allocation3 + $0xb8] sm:$0xff] %vm1139, %v1090
      %1164 = vst.msk [vmem:[#allocation3 + $0xc0] sm:$0xff] %vm1139, %v1092
      %1165 = vst.msk [vmem:[#allocation3 + $0xc8] sm:$0xff] %vm1139, %v1094
      %1166 = vst.msk [vmem:[#allocation3 + $0xd0] sm:$0xff] %vm1139, %v1096
      %1167 = vst.msk [vmem:[#allocation3 + $0xd8] sm:$0xff] %vm1139, %v1098
      %1168 = vst.msk [vmem:[#allocation3 + $0xe0] sm:$0xff] %vm1139, %v1100
      %1169 = vst.msk [vmem:[#allocation3 + $0xe8] sm:$0xff] %vm1139, %v1102
      %1170 = vst.msk [vmem:[#allocation3 + $0xf0] sm:$0xff] %vm1139, %v1104
      %1171 = vst.msk [vmem:[#allocation3 + $0xf8] sm:$0xff] %vm1139, %v1106
      %v1172 = vld [vmem:[%s303 + $0x2] sm:$0xff]
      %v1173 = vld [vmem:[%s303 + $0xa] sm:$0xff]
      %v1174 = vld [vmem:[%s303 + $0x1a] sm:$0xff]
      %v1175 = vld [vmem:[%s303 + $0x22] sm:$0xff]
      %v1176 = vld [vmem:[%s303 + $0x32] sm:$0xff]
      %v1177 = vld [vmem:[%s303 + $0x3a] sm:$0xff]
      %v1178 = vld [vmem:[%s303 + $0x4a] sm:$0xff]
      %v1179 = vld [vmem:[%s303 + $0x52] sm:$0xff]
      %v1180 = vld [vmem:[%s303 + $0x62] sm:$0xff]
      %v1181 = vld [vmem:[%s303 + $0x6a] sm:$0xff]
      %v1182 = vld [vmem:[%s303 + $0x7a] sm:$0xff]
      %v1183 = vld [vmem:[%s303 + $0x82] sm:$0xff]
      %v1184 = vld [vmem:[%s303 + $0x92] sm:$0xff]
      %v1185 = vld [vmem:[%s303 + $0x9a] sm:$0xff]
      %v1186 = vld [vmem:[%s303 + $0xaa] sm:$0xff]
      %v1187 = vld [vmem:[%s303 + $0xb2] sm:$0xff]
      %v1188 = vld [vmem:[%s303 + $0xc2] sm:$0xff]
      %v1189 = vld [vmem:[%s303 + $0xca] sm:$0xff]
      %v1190 = vld [vmem:[%s303 + $0xda] sm:$0xff]
      %v1191 = vld [vmem:[%s303 + $0xe2] sm:$0xff]
      %v1192 = vld [vmem:[%s303 + $0xf2] sm:$0xff]
      %v1193 = vld [vmem:[%s303 + $0xfa] sm:$0xff]
      %v1194 = vld [vmem:[%s303 + $0x10a] sm:$0xff]
      %v1195 = vld [vmem:[%s303 + $0x112] sm:$0xff]
      %v1196 = vld [vmem:[%s303 + $0x122] sm:$0xff]
      %v1197 = vld [vmem:[%s303 + $0x12a] sm:$0xff]
      %v1198 = vld [vmem:[%s303 + $0x13a] sm:$0xff]
      %v1199 = vld [vmem:[%s303 + $0x142] sm:$0xff]
      %v1200 = vld [vmem:[%s303 + $0x152] sm:$0xff]
      %v1201 = vld [vmem:[%s303 + $0x15a] sm:$0xff]
      %v1202 = vld [vmem:[%s303 + $0x16a] sm:$0xff]
      %v1203 = vld [vmem:[%s303 + $0x172] sm:$0xff]
      %1236 = vrot.lane.b32.xlu0 %v1172, 20
      %v1237 = vpop.permute.xlu0 %1236
      %1238 = vrot.lane.b32.xlu0 %v1173, 20
      %v1239 = vpop.permute.xlu0 %1238
      %1240 = vrot.lane.b32.xlu0 %v1174, 20
      %v1241 = vpop.permute.xlu0 %1240
      %1242 = vrot.lane.b32.xlu0 %v1175, 20
      %v1243 = vpop.permute.xlu0 %1242
      %1244 = vrot.lane.b32.xlu0 %v1176, 20
      %v1245 = vpop.permute.xlu0 %1244
      %1246 = vrot.lane.b32.xlu0 %v1177, 20
      %v1247 = vpop.permute.xlu0 %1246
      %1248 = vrot.lane.b32.xlu0 %v1178, 20
      %v1249 = vpop.permute.xlu0 %1248
      %1250 = vrot.lane.b32.xlu0 %v1179, 20
      %v1251 = vpop.permute.xlu0 %1250
      %1252 = vrot.lane.b32.xlu0 %v1180, 20
      %v1253 = vpop.permute.xlu0 %1252
      %1254 = vrot.lane.b32.xlu0 %v1181, 20
      %v1255 = vpop.permute.xlu0 %1254
      %1256 = vrot.lane.b32.xlu0 %v1182, 20
      %v1257 = vpop.permute.xlu0 %1256
      %1258 = vrot.lane.b32.xlu0 %v1183, 20
      %v1259 = vpop.permute.xlu0 %1258
      %1260 = vrot.lane.b32.xlu0 %v1184, 20
      %v1261 = vpop.permute.xlu0 %1260
      %1262 = vrot.lane.b32.xlu0 %v1185, 20
      %v1263 = vpop.permute.xlu0 %1262
      %1264 = vrot.lane.b32.xlu0 %v1186, 20
      %v1265 = vpop.permute.xlu0 %1264
      %1266 = vrot.lane.b32.xlu0 %v1187, 20
      %v1267 = vpop.permute.xlu0 %1266
      %1268 = vrot.lane.b32.xlu0 %v1188, 20
      %v1269 = vpop.permute.xlu0 %1268
      %1270 = vrot.lane.b32.xlu0 %v1189, 20
      %v1271 = vpop.permute.xlu0 %1270
      %1272 = vrot.lane.b32.xlu0 %v1190, 20
      %v1273 = vpop.permute.xlu0 %1272
      %1274 = vrot.lane.b32.xlu0 %v1191, 20
      %v1275 = vpop.permute.xlu0 %1274
      %1276 = vrot.lane.b32.xlu0 %v1192, 20
      %v1277 = vpop.permute.xlu0 %1276
      %1278 = vrot.lane.b32.xlu0 %v1193, 20
      %v1279 = vpop.permute.xlu0 %1278
      %1280 = vrot.lane.b32.xlu0 %v1194, 20
      %v1281 = vpop.permute.xlu0 %1280
      %1282 = vrot.lane.b32.xlu0 %v1195, 20
      %v1283 = vpop.permute.xlu0 %1282
      %1284 = vrot.lane.b32.xlu0 %v1196, 20
      %v1285 = vpop.permute.xlu0 %1284
      %1286 = vrot.lane.b32.xlu0 %v1197, 20
      %v1287 = vpop.permute.xlu0 %1286
      %1288 = vrot.lane.b32.xlu0 %v1198, 20
      %v1289 = vpop.permute.xlu0 %1288
      %1290 = vrot.lane.b32.xlu0 %v1199, 20
      %v1291 = vpop.permute.xlu0 %1290
      %1292 = vrot.lane.b32.xlu0 %v1200, 20
      %v1293 = vpop.permute.xlu0 %1292
      %1294 = vrot.lane.b32.xlu0 %v1201, 20
      %v1295 = vpop.permute.xlu0 %1294
      %1296 = vrot.lane.b32.xlu0 %v1202, 20
      %v1297 = vpop.permute.xlu0 %1296
      %1298 = vrot.lane.b32.xlu0 %v1203, 20
      %v1299 = vpop.permute.xlu0 %1298
      %vm1332 = vcmask 195744
      %1333 = vst.msk [vmem:[#allocation3] sm:$0xff] %vm1332, %v1237
      %1334 = vst.msk [vmem:[#allocation3 + $0x8] sm:$0xff] %vm1332, %v1239
      %1335 = vst.msk [vmem:[#allocation3 + $0x10] sm:$0xff] %vm1332, %v1241
      %1336 = vst.msk [vmem:[#allocation3 + $0x18] sm:$0xff] %vm1332, %v1243
      %1337 = vst.msk [vmem:[#allocation3 + $0x20] sm:$0xff] %vm1332, %v1245
      %1338 = vst.msk [vmem:[#allocation3 + $0x28] sm:$0xff] %vm1332, %v1247
      %1339 = vst.msk [vmem:[#allocation3 + $0x30] sm:$0xff] %vm1332, %v1249
      %1340 = vst.msk [vmem:[#allocation3 + $0x38] sm:$0xff] %vm1332, %v1251
      %1341 = vst.msk [vmem:[#allocation3 + $0x40] sm:$0xff] %vm1332, %v1253
      %1342 = vst.msk [vmem:[#allocation3 + $0x48] sm:$0xff] %vm1332, %v1255
      %1343 = vst.msk [vmem:[#allocation3 + $0x50] sm:$0xff] %vm1332, %v1257
      %1344 = vst.msk [vmem:[#allocation3 + $0x58] sm:$0xff] %vm1332, %v1259
      %1345 = vst.msk [vmem:[#allocation3 + $0x60] sm:$0xff] %vm1332, %v1261
      %1346 = vst.msk [vmem:[#allocation3 + $0x68] sm:$0xff] %vm1332, %v1263
      %1347 = vst.msk [vmem:[#allocation3 + $0x70] sm:$0xff] %vm1332, %v1265
      %1348 = vst.msk [vmem:[#allocation3 + $0x78] sm:$0xff] %vm1332, %v1267
      %1349 = vst.msk [vmem:[#allocation3 + $0x80] sm:$0xff] %vm1332, %v1269
      %1350 = vst.msk [vmem:[#allocation3 + $0x88] sm:$0xff] %vm1332, %v1271
      %1351 = vst.msk [vmem:[#allocation3 + $0x90] sm:$0xff] %vm1332, %v1273
      %1352 = vst.msk [vmem:[#allocation3 + $0x98] sm:$0xff] %vm1332, %v1275
      %1353 = vst.msk [vmem:[#allocation3 + $0xa0] sm:$0xff] %vm1332, %v1277
      %1354 = vst.msk [vmem:[#allocation3 + $0xa8] sm:$0xff] %vm1332, %v1279
      %1355 = vst.msk [vmem:[#allocation3 + $0xb0] sm:$0xff] %vm1332, %v1281
      %1356 = vst.msk [vmem:[#allocation3 + $0xb8] sm:$0xff] %vm1332, %v1283
      %1357 = vst.msk [vmem:[#allocation3 + $0xc0] sm:$0xff] %vm1332, %v1285
      %1358 = vst.msk [vmem:[#allocation3 + $0xc8] sm:$0xff] %vm1332, %v1287
      %1359 = vst.msk [vmem:[#allocation3 + $0xd0] sm:$0xff] %vm1332, %v1289
      %1360 = vst.msk [vmem:[#allocation3 + $0xd8] sm:$0xff] %vm1332, %v1291
      %1361 = vst.msk [vmem:[#allocation3 + $0xe0] sm:$0xff] %vm1332, %v1293
      %1362 = vst.msk [vmem:[#allocation3 + $0xe8] sm:$0xff] %vm1332, %v1295
      %1363 = vst.msk [vmem:[#allocation3 + $0xf0] sm:$0xff] %vm1332, %v1297
      %1364 = vst.msk [vmem:[#allocation3 + $0xf8] sm:$0xff] %vm1332, %v1299
      %s1365 = scalar_lea.vmem [#allocation2], 48
      %v1366 = vld [vmem:[%s1365] sm:$0xff]
      %v1367 = vld [vmem:[%s1365 + $0x8] sm:$0xff]
      %v1368 = vld [vmem:[%s1365 + $0x18] sm:$0xff]
      %v1369 = vld [vmem:[%s1365 + $0x20] sm:$0xff]
      %v1370 = vld [vmem:[%s1365 + $0x30] sm:$0xff]
      %v1371 = vld [vmem:[%s1365 + $0x38] sm:$0xff]
      %v1372 = vld [vmem:[%s1365 + $0x48] sm:$0xff]
      %v1373 = vld [vmem:[%s1365 + $0x50] sm:$0xff]
      %v1374 = vld [vmem:[%s1365 + $0x60] sm:$0xff]
      %v1375 = vld [vmem:[%s1365 + $0x68] sm:$0xff]
      %v1376 = vld [vmem:[%s1365 + $0x78] sm:$0xff]
      %v1377 = vld [vmem:[%s1365 + $0x80] sm:$0xff]
      %v1378 = vld [vmem:[%s1365 + $0x90] sm:$0xff]
      %v1379 = vld [vmem:[%s1365 + $0x98] sm:$0xff]
      %v1380 = vld [vmem:[%s1365 + $0xa8] sm:$0xff]
      %v1381 = vld [vmem:[%s1365 + $0xb0] sm:$0xff]
      %v1382 = vld [vmem:[%s1365 + $0xc0] sm:$0xff]
      %v1383 = vld [vmem:[%s1365 + $0xc8] sm:$0xff]
      %v1384 = vld [vmem:[%s1365 + $0xd8] sm:$0xff]
      %v1385 = vld [vmem:[%s1365 + $0xe0] sm:$0xff]
      %v1386 = vld [vmem:[%s1365 + $0xf0] sm:$0xff]
      %v1387 = vld [vmem:[%s1365 + $0xf8] sm:$0xff]
      %v1388 = vld [vmem:[%s1365 + $0x108] sm:$0xff]
      %v1389 = vld [vmem:[%s1365 + $0x110] sm:$0xff]
      %v1390 = vld [vmem:[%s1365 + $0x120] sm:$0xff]
      %v1391 = vld [vmem:[%s1365 + $0x128] sm:$0xff]
      %v1392 = vld [vmem:[%s1365 + $0x138] sm:$0xff]
      %v1393 = vld [vmem:[%s1365 + $0x140] sm:$0xff]
      %v1394 = vld [vmem:[%s1365 + $0x150] sm:$0xff]
      %v1395 = vld [vmem:[%s1365 + $0x158] sm:$0xff]
      %v1396 = vld [vmem:[%s1365 + $0x168] sm:$0xff]
      %v1397 = vld [vmem:[%s1365 + $0x170] sm:$0xff]
      %1430 = vrot.lane.b32.xlu0 %v1366, 24
      %v1431 = vpop.permute.xlu0 %1430
      %1432 = vrot.lane.b32.xlu0 %v1367, 24
      %v1433 = vpop.permute.xlu0 %1432
      %1434 = vrot.lane.b32.xlu0 %v1368, 24
      %v1435 = vpop.permute.xlu0 %1434
      %1436 = vrot.lane.b32.xlu0 %v1369, 24
      %v1437 = vpop.permute.xlu0 %1436
      %1438 = vrot.lane.b32.xlu0 %v1370, 24
      %v1439 = vpop.permute.xlu0 %1438
      %1440 = vrot.lane.b32.xlu0 %v1371, 24
      %v1441 = vpop.permute.xlu0 %1440
      %1442 = vrot.lane.b32.xlu0 %v1372, 24
      %v1443 = vpop.permute.xlu0 %1442
      %1444 = vrot.lane.b32.xlu0 %v1373, 24
      %v1445 = vpop.permute.xlu0 %1444
      %1446 = vrot.lane.b32.xlu0 %v1374, 24
      %v1447 = vpop.permute.xlu0 %1446
      %1448 = vrot.lane.b32.xlu0 %v1375, 24
      %v1449 = vpop.permute.xlu0 %1448
      %1450 = vrot.lane.b32.xlu0 %v1376, 24
      %v1451 = vpop.permute.xlu0 %1450
      %1452 = vrot.lane.b32.xlu0 %v1377, 24
      %v1453 = vpop.permute.xlu0 %1452
      %1454 = vrot.lane.b32.xlu0 %v1378, 24
      %v1455 = vpop.permute.xlu0 %1454
      %1456 = vrot.lane.b32.xlu0 %v1379, 24
      %v1457 = vpop.permute.xlu0 %1456
      %1458 = vrot.lane.b32.xlu0 %v1380, 24
      %v1459 = vpop.permute.xlu0 %1458
      %1460 = vrot.lane.b32.xlu0 %v1381, 24
      %v1461 = vpop.permute.xlu0 %1460
      %1462 = vrot.lane.b32.xlu0 %v1382, 24
      %v1463 = vpop.permute.xlu0 %1462
      %1464 = vrot.lane.b32.xlu0 %v1383, 24
      %v1465 = vpop.permute.xlu0 %1464
      %1466 = vrot.lane.b32.xlu0 %v1384, 24
      %v1467 = vpop.permute.xlu0 %1466
      %1468 = vrot.lane.b32.xlu0 %v1385, 24
      %v1469 = vpop.permute.xlu0 %1468
      %1470 = vrot.lane.b32.xlu0 %v1386, 24
      %v1471 = vpop.permute.xlu0 %1470
      %1472 = vrot.lane.b32.xlu0 %v1387, 24
      %v1473 = vpop.permute.xlu0 %1472
      %1474 = vrot.lane.b32.xlu0 %v1388, 24
      %v1475 = vpop.permute.xlu0 %1474
      %1476 = vrot.lane.b32.xlu0 %v1389, 24
      %v1477 = vpop.permute.xlu0 %1476
      %1478 = vrot.lane.b32.xlu0 %v1390, 24
      %v1479 = vpop.permute.xlu0 %1478
      %1480 = vrot.lane.b32.xlu0 %v1391, 24
      %v1481 = vpop.permute.xlu0 %1480
      %1482 = vrot.lane.b32.xlu0 %v1392, 24
      %v1483 = vpop.permute.xlu0 %1482
      %1484 = vrot.lane.b32.xlu0 %v1393, 24
      %v1485 = vpop.permute.xlu0 %1484
      %1486 = vrot.lane.b32.xlu0 %v1394, 24
      %v1487 = vpop.permute.xlu0 %1486
      %1488 = vrot.lane.b32.xlu0 %v1395, 24
      %v1489 = vpop.permute.xlu0 %1488
      %1490 = vrot.lane.b32.xlu0 %v1396, 24
      %v1491 = vpop.permute.xlu0 %1490
      %1492 = vrot.lane.b32.xlu0 %v1397, 24
      %v1493 = vpop.permute.xlu0 %1492
      %vm1526 = vcmask 228544
      %1527 = vst.msk [vmem:[#allocation3] sm:$0xff] %vm1526, %v1431
      %1528 = vst.msk [vmem:[#allocation3 + $0x8] sm:$0xff] %vm1526, %v1433
      %1529 = vst.msk [vmem:[#allocation3 + $0x10] sm:$0xff] %vm1526, %v1435
      %1530 = vst.msk [vmem:[#allocation3 + $0x18] sm:$0xff] %vm1526, %v1437
      %1531 = vst.msk [vmem:[#allocation3 + $0x20] sm:$0xff] %vm1526, %v1439
      %1532 = vst.msk [vmem:[#allocation3 + $0x28] sm:$0xff] %vm1526, %v1441
      %1533 = vst.msk [vmem:[#allocation3 + $0x30] sm:$0xff] %vm1526, %v1443
      %1534 = vst.msk [vmem:[#allocation3 + $0x38] sm:$0xff] %vm1526, %v1445
      %1535 = vst.msk [vmem:[#allocation3 + $0x40] sm:$0xff] %vm1526, %v1447
      %1536 = vst.msk [vmem:[#allocation3 + $0x48] sm:$0xff] %vm1526, %v1449
      %1537 = vst.msk [vmem:[#allocation3 + $0x50] sm:$0xff] %vm1526, %v1451
      %1538 = vst.msk [vmem:[#allocation3 + $0x58] sm:$0xff] %vm1526, %v1453
      %1539 = vst.msk [vmem:[#allocation3 + $0x60] sm:$0xff] %vm1526, %v1455
      %1540 = vst.msk [vmem:[#allocation3 + $0x68] sm:$0xff] %vm1526, %v1457
      %1541 = vst.msk [vmem:[#allocation3 + $0x70] sm:$0xff] %vm1526, %v1459
      %1542 = vst.msk [vmem:[#allocation3 + $0x78] sm:$0xff] %vm1526, %v1461
      %1543 = vst.msk [vmem:[#allocation3 + $0x80] sm:$0xff] %vm1526, %v1463
      %1544 = vst.msk [vmem:[#allocation3 + $0x88] sm:$0xff] %vm1526, %v1465
      %1545 = vst.msk [vmem:[#allocation3 + $0x90] sm:$0xff] %vm1526, %v1467
      %1546 = vst.msk [vmem:[#allocation3 + $0x98] sm:$0xff] %vm1526, %v1469
      %1547 = vst.msk [vmem:[#allocation3 + $0xa0] sm:$0xff] %vm1526, %v1471
      %1548 = vst.msk [vmem:[#allocation3 + $0xa8] sm:$0xff] %vm1526, %v1473
      %1549 = vst.msk [vmem:[#allocation3 + $0xb0] sm:$0xff] %vm1526, %v1475
      %1550 = vst.msk [vmem:[#allocation3 + $0xb8] sm:$0xff] %vm1526, %v1477
      %1551 = vst.msk [vmem:[#allocation3 + $0xc0] sm:$0xff] %vm1526, %v1479
      %1552 = vst.msk [vmem:[#allocation3 + $0xc8] sm:$0xff] %vm1526, %v1481
      %1553 = vst.msk [vmem:[#allocation3 + $0xd0] sm:$0xff] %vm1526, %v1483
      %1554 = vst.msk [vmem:[#allocation3 + $0xd8] sm:$0xff] %vm1526, %v1485
      %1555 = vst.msk [vmem:[#allocation3 + $0xe0] sm:$0xff] %vm1526, %v1487
      %1556 = vst.msk [vmem:[#allocation3 + $0xe8] sm:$0xff] %vm1526, %v1489
      %1557 = vst.msk [vmem:[#allocation3 + $0xf0] sm:$0xff] %vm1526, %v1491
      %1558 = vst.msk [vmem:[#allocation3 + $0xf8] sm:$0xff] %vm1526, %v1493
      %v1559 = vld [vmem:[%s1365 + $0x1] sm:$0xff]
      %v1560 = vld [vmem:[%s1365 + $0x9] sm:$0xff]
      %v1561 = vld [vmem:[%s1365 + $0x19] sm:$0xff]
      %v1562 = vld [vmem:[%s1365 + $0x21] sm:$0xff]
      %v1563 = vld [vmem:[%s1365 + $0x31] sm:$0xff]
      %v1564 = vld [vmem:[%s1365 + $0x39] sm:$0xff]
      %v1565 = vld [vmem:[%s1365 + $0x49] sm:$0xff]
      %v1566 = vld [vmem:[%s1365 + $0x51] sm:$0xff]
      %v1567 = vld [vmem:[%s1365 + $0x61] sm:$0xff]
      %v1568 = vld [vmem:[%s1365 + $0x69] sm:$0xff]
      %v1569 = vld [vmem:[%s1365 + $0x79] sm:$0xff]
      %v1570 = vld [vmem:[%s1365 + $0x81] sm:$0xff]
      %v1571 = vld [vmem:[%s1365 + $0x91] sm:$0xff]
      %v1572 = vld [vmem:[%s1365 + $0x99] sm:$0xff]
      %v1573 = vld [vmem:[%s1365 + $0xa9] sm:$0xff]
      %v1574 = vld [vmem:[%s1365 + $0xb1] sm:$0xff]
      %v1575 = vld [vmem:[%s1365 + $0xc1] sm:$0xff]
      %v1576 = vld [vmem:[%s1365 + $0xc9] sm:$0xff]
      %v1577 = vld [vmem:[%s1365 + $0xd9] sm:$0xff]
      %v1578 = vld [vmem:[%s1365 + $0xe1] sm:$0xff]
      %v1579 = vld [vmem:[%s1365 + $0xf1] sm:$0xff]
      %v1580 = vld [vmem:[%s1365 + $0xf9] sm:$0xff]
      %v1581 = vld [vmem:[%s1365 + $0x109] sm:$0xff]
      %v1582 = vld [vmem:[%s1365 + $0x111] sm:$0xff]
      %v1583 = vld [vmem:[%s1365 + $0x121] sm:$0xff]
      %v1584 = vld [vmem:[%s1365 + $0x129] sm:$0xff]
      %v1585 = vld [vmem:[%s1365 + $0x139] sm:$0xff]
      %v1586 = vld [vmem:[%s1365 + $0x141] sm:$0xff]
      %v1587 = vld [vmem:[%s1365 + $0x151] sm:$0xff]
      %v1588 = vld [vmem:[%s1365 + $0x159] sm:$0xff]
      %v1589 = vld [vmem:[%s1365 + $0x169] sm:$0xff]
      %v1590 = vld [vmem:[%s1365 + $0x171] sm:$0xff]
      %1623 = vrot.lane.b32.xlu0 %v1559, 28
      %v1624 = vpop.permute.xlu0 %1623
      %1625 = vrot.lane.b32.xlu0 %v1560, 28
      %v1626 = vpop.permute.xlu0 %1625
      %1627 = vrot.lane.b32.xlu0 %v1561, 28
      %v1628 = vpop.permute.xlu0 %1627
      %1629 = vrot.lane.b32.xlu0 %v1562, 28
      %v1630 = vpop.permute.xlu0 %1629
      %1631 = vrot.lane.b32.xlu0 %v1563, 28
      %v1632 = vpop.permute.xlu0 %1631
      %1633 = vrot.lane.b32.xlu0 %v1564, 28
      %v1634 = vpop.permute.xlu0 %1633
      %1635 = vrot.lane.b32.xlu0 %v1565, 28
      %v1636 = vpop.permute.xlu0 %1635
      %1637 = vrot.lane.b32.xlu0 %v1566, 28
      %v1638 = vpop.permute.xlu0 %1637
      %1639 = vrot.lane.b32.xlu0 %v1567, 28
      %v1640 = vpop.permute.xlu0 %1639
      %1641 = vrot.lane.b32.xlu0 %v1568, 28
      %v1642 = vpop.permute.xlu0 %1641
      %1643 = vrot.lane.b32.xlu0 %v1569, 28
      %v1644 = vpop.permute.xlu0 %1643
      %1645 = vrot.lane.b32.xlu0 %v1570, 28
      %v1646 = vpop.permute.xlu0 %1645
      %1647 = vrot.lane.b32.xlu0 %v1571, 28
      %v1648 = vpop.permute.xlu0 %1647
      %1649 = vrot.lane.b32.xlu0 %v1572, 28
      %v1650 = vpop.permute.xlu0 %1649
      %1651 = vrot.lane.b32.xlu0 %v1573, 28
      %v1652 = vpop.permute.xlu0 %1651
      %1653 = vrot.lane.b32.xlu0 %v1574, 28
      %v1654 = vpop.permute.xlu0 %1653
      %1655 = vrot.lane.b32.xlu0 %v1575, 28
      %v1656 = vpop.permute.xlu0 %1655
      %1657 = vrot.lane.b32.xlu0 %v1576, 28
      %v1658 = vpop.permute.xlu0 %1657
      %1659 = vrot.lane.b32.xlu0 %v1577, 28
      %v1660 = vpop.permute.xlu0 %1659
      %1661 = vrot.lane.b32.xlu0 %v1578, 28
      %v1662 = vpop.permute.xlu0 %1661
      %1663 = vrot.lane.b32.xlu0 %v1579, 28
      %v1664 = vpop.permute.xlu0 %1663
      %1665 = vrot.lane.b32.xlu0 %v1580, 28
      %v1666 = vpop.permute.xlu0 %1665
      %1667 = vrot.lane.b32.xlu0 %v1581, 28
      %v1668 = vpop.permute.xlu0 %1667
      %1669 = vrot.lane.b32.xlu0 %v1582, 28
      %v1670 = vpop.permute.xlu0 %1669
      %1671 = vrot.lane.b32.xlu0 %v1583, 28
      %v1672 = vpop.permute.xlu0 %1671
      %1673 = vrot.lane.b32.xlu0 %v1584, 28
      %v1674 = vpop.permute.xlu0 %1673
      %1675 = vrot.lane.b32.xlu0 %v1585, 28
      %v1676 = vpop.permute.xlu0 %1675
      %1677 = vrot.lane.b32.xlu0 %v1586, 28
      %v1678 = vpop.permute.xlu0 %1677
      %1679 = vrot.lane.b32.xlu0 %v1587, 28
      %v1680 = vpop.permute.xlu0 %1679
      %1681 = vrot.lane.b32.xlu0 %v1588, 28
      %v1682 = vpop.permute.xlu0 %1681
      %1683 = vrot.lane.b32.xlu0 %v1589, 28
      %v1684 = vpop.permute.xlu0 %1683
      %1685 = vrot.lane.b32.xlu0 %v1590, 28
      %v1686 = vpop.permute.xlu0 %1685
      %vm1719 = vcmask 261344
      %1720 = vst.msk [vmem:[#allocation3] sm:$0xff] %vm1719, %v1624
      %1721 = vst.msk [vmem:[#allocation3 + $0x8] sm:$0xff] %vm1719, %v1626
      %1722 = vst.msk [vmem:[#allocation3 + $0x10] sm:$0xff] %vm1719, %v1628
      %1723 = vst.msk [vmem:[#allocation3 + $0x18] sm:$0xff] %vm1719, %v1630
      %1724 = vst.msk [vmem:[#allocation3 + $0x20] sm:$0xff] %vm1719, %v1632
      %1725 = vst.msk [vmem:[#allocation3 + $0x28] sm:$0xff] %vm1719, %v1634
      %1726 = vst.msk [vmem:[#allocation3 + $0x30] sm:$0xff] %vm1719, %v1636
      %1727 = vst.msk [vmem:[#allocation3 + $0x38] sm:$0xff] %vm1719, %v1638
      %1728 = vst.msk [vmem:[#allocation3 + $0x40] sm:$0xff] %vm1719, %v1640
      %1729 = vst.msk [vmem:[#allocation3 + $0x48] sm:$0xff] %vm1719, %v1642
      %1730 = vst.msk [vmem:[#allocation3 + $0x50] sm:$0xff] %vm1719, %v1644
      %1731 = vst.msk [vmem:[#allocation3 + $0x58] sm:$0xff] %vm1719, %v1646
      %1732 = vst.msk [vmem:[#allocation3 + $0x60] sm:$0xff] %vm1719, %v1648
      %1733 = vst.msk [vmem:[#allocation3 + $0x68] sm:$0xff] %vm1719, %v1650
      %1734 = vst.msk [vmem:[#allocation3 + $0x70] sm:$0xff] %vm1719, %v1652
      %1735 = vst.msk [vmem:[#allocation3 + $0x78] sm:$0xff] %vm1719, %v1654
      %1736 = vst.msk [vmem:[#allocation3 + $0x80] sm:$0xff] %vm1719, %v1656
      %1737 = vst.msk [vmem:[#allocation3 + $0x88] sm:$0xff] %vm1719, %v1658
      %1738 = vst.msk [vmem:[#allocation3 + $0x90] sm:$0xff] %vm1719, %v1660
      %1739 = vst.msk [vmem:[#allocation3 + $0x98] sm:$0xff] %vm1719, %v1662
      %1740 = vst.msk [vmem:[#allocation3 + $0xa0] sm:$0xff] %vm1719, %v1664
      %1741 = vst.msk [vmem:[#allocation3 + $0xa8] sm:$0xff] %vm1719, %v1666
      %1742 = vst.msk [vmem:[#allocation3 + $0xb0] sm:$0xff] %vm1719, %v1668
      %1743 = vst.msk [vmem:[#allocation3 + $0xb8] sm:$0xff] %vm1719, %v1670
      %1744 = vst.msk [vmem:[#allocation3 + $0xc0] sm:$0xff] %vm1719, %v1672
      %1745 = vst.msk [vmem:[#allocation3 + $0xc8] sm:$0xff] %vm1719, %v1674
      %1746 = vst.msk [vmem:[#allocation3 + $0xd0] sm:$0xff] %vm1719, %v1676
      %1747 = vst.msk [vmem:[#allocation3 + $0xd8] sm:$0xff] %vm1719, %v1678
      %1748 = vst.msk [vmem:[#allocation3 + $0xe0] sm:$0xff] %vm1719, %v1680
      %1749 = vst.msk [vmem:[#allocation3 + $0xe8] sm:$0xff] %vm1719, %v1682
      %1750 = vst.msk [vmem:[#allocation3 + $0xf0] sm:$0xff] %vm1719, %v1684
      %1751 = vst.msk [vmem:[#allocation3 + $0xf8] sm:$0xff] %vm1719, %v1686
      %v1752 = vld [vmem:[%s1365 + $0x2] sm:$0xff]
      %v1753 = vld [vmem:[%s1365 + $0xa] sm:$0xff]
      %v1754 = vld [vmem:[%s1365 + $0x1a] sm:$0xff]
      %v1755 = vld [vmem:[%s1365 + $0x22] sm:$0xff]
      %v1756 = vld [vmem:[%s1365 + $0x32] sm:$0xff]
      %v1757 = vld [vmem:[%s1365 + $0x3a] sm:$0xff]
      %v1758 = vld [vmem:[%s1365 + $0x4a] sm:$0xff]
      %v1759 = vld [vmem:[%s1365 + $0x52] sm:$0xff]
      %v1760 = vld [vmem:[%s1365 + $0x62] sm:$0xff]
      %v1761 = vld [vmem:[%s1365 + $0x6a] sm:$0xff]
      %v1762 = vld [vmem:[%s1365 + $0x7a] sm:$0xff]
      %v1763 = vld [vmem:[%s1365 + $0x82] sm:$0xff]
      %v1764 = vld [vmem:[%s1365 + $0x92] sm:$0xff]
      %v1765 = vld [vmem:[%s1365 + $0x9a] sm:$0xff]
      %v1766 = vld [vmem:[%s1365 + $0xaa] sm:$0xff]
      %v1767 = vld [vmem:[%s1365 + $0xb2] sm:$0xff]
      %v1768 = vld [vmem:[%s1365 + $0xc2] sm:$0xff]
      %v1769 = vld [vmem:[%s1365 + $0xca] sm:$0xff]
      %v1770 = vld [vmem:[%s1365 + $0xda] sm:$0xff]
      %v1771 = vld [vmem:[%s1365 + $0xe2] sm:$0xff]
      %v1772 = vld [vmem:[%s1365 + $0xf2] sm:$0xff]
      %v1773 = vld [vmem:[%s1365 + $0xfa] sm:$0xff]
      %v1774 = vld [vmem:[%s1365 + $0x10a] sm:$0xff]
      %v1775 = vld [vmem:[%s1365 + $0x112] sm:$0xff]
      %v1776 = vld [vmem:[%s1365 + $0x122] sm:$0xff]
      %v1777 = vld [vmem:[%s1365 + $0x12a] sm:$0xff]
      %v1778 = vld [vmem:[%s1365 + $0x13a] sm:$0xff]
      %v1779 = vld [vmem:[%s1365 + $0x142] sm:$0xff]
      %v1780 = vld [vmem:[%s1365 + $0x152] sm:$0xff]
      %v1781 = vld [vmem:[%s1365 + $0x15a] sm:$0xff]
      %v1782 = vld [vmem:[%s1365 + $0x16a] sm:$0xff]
      %v1783 = vld [vmem:[%s1365 + $0x172] sm:$0xff]
      %1816 = vrot.lane.b32.xlu0 %v1752, 32
      %v1817 = vpop.permute.xlu0 %1816
      %1818 = vrot.lane.b32.xlu0 %v1753, 32
      %v1819 = vpop.permute.xlu0 %1818
      %1820 = vrot.lane.b32.xlu0 %v1754, 32
      %v1821 = vpop.permute.xlu0 %1820
      %1822 = vrot.lane.b32.xlu0 %v1755, 32
      %v1823 = vpop.permute.xlu0 %1822
      %1824 = vrot.lane.b32.xlu0 %v1756, 32
      %v1825 = vpop.permute.xlu0 %1824
      %1826 = vrot.lane.b32.xlu0 %v1757, 32
      %v1827 = vpop.permute.xlu0 %1826
      %1828 = vrot.lane.b32.xlu0 %v1758, 32
      %v1829 = vpop.permute.xlu0 %1828
      %1830 = vrot.lane.b32.xlu0 %v1759, 32
      %v1831 = vpop.permute.xlu0 %1830
      %1832 = vrot.lane.b32.xlu0 %v1760, 32
      %v1833 = vpop.permute.xlu0 %1832
      %1834 = vrot.lane.b32.xlu0 %v1761, 32
      %v1835 = vpop.permute.xlu0 %1834
      %1836 = vrot.lane.b32.xlu0 %v1762, 32
      %v1837 = vpop.permute.xlu0 %1836
      %1838 = vrot.lane.b32.xlu0 %v1763, 32
      %v1839 = vpop.permute.xlu0 %1838
      %1840 = vrot.lane.b32.xlu0 %v1764, 32
      %v1841 = vpop.permute.xlu0 %1840
      %1842 = vrot.lane.b32.xlu0 %v1765, 32
      %v1843 = vpop.permute.xlu0 %1842
      %1844 = vrot.lane.b32.xlu0 %v1766, 32
      %v1845 = vpop.permute.xlu0 %1844
      %1846 = vrot.lane.b32.xlu0 %v1767, 32
      %v1847 = vpop.permute.xlu0 %1846
      %1848 = vrot.lane.b32.xlu0 %v1768, 32
      %v1849 = vpop.permute.xlu0 %1848
      %1850 = vrot.lane.b32.xlu0 %v1769, 32
      %v1851 = vpop.permute.xlu0 %1850
      %1852 = vrot.lane.b32.xlu0 %v1770, 32
      %v1853 = vpop.permute.xlu0 %1852
      %1854 = vrot.lane.b32.xlu0 %v1771, 32
      %v1855 = vpop.permute.xlu0 %1854
      %1856 = vrot.lane.b32.xlu0 %v1772, 32
      %v1857 = vpop.permute.xlu0 %1856
      %1858 = vrot.lane.b32.xlu0 %v1773, 32
      %v1859 = vpop.permute.xlu0 %1858
      %1860 = vrot.lane.b32.xlu0 %v1774, 32
      %v1861 = vpop.permute.xlu0 %1860
      %1862 = vrot.lane.b32.xlu0 %v1775, 32
      %v1863 = vpop.permute.xlu0 %1862
      %1864 = vrot.lane.b32.xlu0 %v1776, 32
      %v1865 = vpop.permute.xlu0 %1864
      %1866 = vrot.lane.b32.xlu0 %v1777, 32
      %v1867 = vpop.permute.xlu0 %1866
      %1868 = vrot.lane.b32.xlu0 %v1778, 32
      %v1869 = vpop.permute.xlu0 %1868
      %1870 = vrot.lane.b32.xlu0 %v1779, 32
      %v1871 = vpop.permute.xlu0 %1870
      %1872 = vrot.lane.b32.xlu0 %v1780, 32
      %v1873 = vpop.permute.xlu0 %1872
      %1874 = vrot.lane.b32.xlu0 %v1781, 32
      %v1875 = vpop.permute.xlu0 %1874
      %1876 = vrot.lane.b32.xlu0 %v1782, 32
      %v1877 = vpop.permute.xlu0 %1876
      %1878 = vrot.lane.b32.xlu0 %v1783, 32
      %v1879 = vpop.permute.xlu0 %1878
      %vm1912 = vcmask 294144
      %1913 = vst.msk [vmem:[#allocation3] sm:$0xff] %vm1912, %v1817
      %1914 = vst.msk [vmem:[#allocation3 + $0x8] sm:$0xff] %vm1912, %v1819
      %1915 = vst.msk [vmem:[#allocation3 + $0x10] sm:$0xff] %vm1912, %v1821
      %1916 = vst.msk [vmem:[#allocation3 + $0x18] sm:$0xff] %vm1912, %v1823
      %1917 = vst.msk [vmem:[#allocation3 + $0x20] sm:$0xff] %vm1912, %v1825
      %1918 = vst.msk [vmem:[#allocation3 + $0x28] sm:$0xff] %vm1912, %v1827
      %1919 = vst.msk [vmem:[#allocation3 + $0x30] sm:$0xff] %vm1912, %v1829
      %1920 = vst.msk [vmem:[#allocation3 + $0x38] sm:$0xff] %vm1912, %v1831
      %1921 = vst.msk [vmem:[#allocation3 + $0x40] sm:$0xff] %vm1912, %v1833
      %1922 = vst.msk [vmem:[#allocation3 + $0x48] sm:$0xff] %vm1912, %v1835
      %1923 = vst.msk [vmem:[#allocation3 + $0x50] sm:$0xff] %vm1912, %v1837
      %1924 = vst.msk [vmem:[#allocation3 + $0x58] sm:$0xff] %vm1912, %v1839
      %1925 = vst.msk [vmem:[#allocation3 + $0x60] sm:$0xff] %vm1912, %v1841
      %1926 = vst.msk [vmem:[#allocation3 + $0x68] sm:$0xff] %vm1912, %v1843
      %1927 = vst.msk [vmem:[#allocation3 + $0x70] sm:$0xff] %vm1912, %v1845
      %1928 = vst.msk [vmem:[#allocation3 + $0x78] sm:$0xff] %vm1912, %v1847
      %1929 = vst.msk [vmem:[#allocation3 + $0x80] sm:$0xff] %vm1912, %v1849
      %1930 = vst.msk [vmem:[#allocation3 + $0x88] sm:$0xff] %vm1912, %v1851
      %1931 = vst.msk [vmem:[#allocation3 + $0x90] sm:$0xff] %vm1912, %v1853
      %1932 = vst.msk [vmem:[#allocation3 + $0x98] sm:$0xff] %vm1912, %v1855
      %1933 = vst.msk [vmem:[#allocation3 + $0xa0] sm:$0xff] %vm1912, %v1857
      %1934 = vst.msk [vmem:[#allocation3 + $0xa8] sm:$0xff] %vm1912, %v1859
      %1935 = vst.msk [vmem:[#allocation3 + $0xb0] sm:$0xff] %vm1912, %v1861
      %1936 = vst.msk [vmem:[#allocation3 + $0xb8] sm:$0xff] %vm1912, %v1863
      %1937 = vst.msk [vmem:[#allocation3 + $0xc0] sm:$0xff] %vm1912, %v1865
      %1938 = vst.msk [vmem:[#allocation3 + $0xc8] sm:$0xff] %vm1912, %v1867
      %1939 = vst.msk [vmem:[#allocation3 + $0xd0] sm:$0xff] %vm1912, %v1869
      %1940 = vst.msk [vmem:[#allocation3 + $0xd8] sm:$0xff] %vm1912, %v1871
      %1941 = vst.msk [vmem:[#allocation3 + $0xe0] sm:$0xff] %vm1912, %v1873
      %1942 = vst.msk [vmem:[#allocation3 + $0xe8] sm:$0xff] %vm1912, %v1875
      %1943 = vst.msk [vmem:[#allocation3 + $0xf0] sm:$0xff] %vm1912, %v1877
      %1944 = vst.msk [vmem:[#allocation3 + $0xf8] sm:$0xff] %vm1912, %v1879
      %v1945 = vld [vmem:[#allocation3] sm:$0xff]
      %v1946 = vld [vmem:[#allocation3 + $0x8] sm:$0xff]
      %v1947 = vld [vmem:[#allocation3 + $0x10] sm:$0xff]
      %v1948 = vld [vmem:[#allocation3 + $0x18] sm:$0xff]
      %v1949 = vld [vmem:[#allocation3 + $0x20] sm:$0xff]
      %v1950 = vld [vmem:[#allocation3 + $0x28] sm:$0xff]
      %v1951 = vld [vmem:[#allocation3 + $0x30] sm:$0xff]
      %v1952 = vld [vmem:[#allocation3 + $0x38] sm:$0xff]
      %v1953 = vld [vmem:[#allocation3 + $0x40] sm:$0xff]
      %v1954 = vld [vmem:[#allocation3 + $0x48] sm:$0xff]
      %v1955 = vld [vmem:[#allocation3 + $0x50] sm:$0xff]
      %v1956 = vld [vmem:[#allocation3 + $0x58] sm:$0xff]
      %v1957 = vld [vmem:[#allocation3 + $0x60] sm:$0xff]
      %v1958 = vld [vmem:[#allocation3 + $0x68] sm:$0xff]
      %v1959 = vld [vmem:[#allocation3 + $0x70] sm:$0xff]
      %v1960 = vld [vmem:[#allocation3 + $0x78] sm:$0xff]
      %v1961 = vld [vmem:[#allocation3 + $0x80] sm:$0xff]
      %v1962 = vld [vmem:[#allocation3 + $0x88] sm:$0xff]
      %v1963 = vld [vmem:[#allocation3 + $0x90] sm:$0xff]
      %v1964 = vld [vmem:[#allocation3 + $0x98] sm:$0xff]
      %v1965 = vld [vmem:[#allocation3 + $0xa0] sm:$0xff]
      %v1966 = vld [vmem:[#allocation3 + $0xa8] sm:$0xff]
      %v1967 = vld [vmem:[#allocation3 + $0xb0] sm:$0xff]
      %v1968 = vld [vmem:[#allocation3 + $0xb8] sm:$0xff]
      %v1969 = vld [vmem:[#allocation3 + $0xc0] sm:$0xff]
      %v1970 = vld [vmem:[#allocation3 + $0xc8] sm:$0xff]
      %v1971 = vld [vmem:[#allocation3 + $0xd0] sm:$0xff]
      %v1972 = vld [vmem:[#allocation3 + $0xd8] sm:$0xff]
      %v1973 = vld [vmem:[#allocation3 + $0xe0] sm:$0xff]
      %v1974 = vld [vmem:[#allocation3 + $0xe8] sm:$0xff]
      %v1975 = vld [vmem:[#allocation3 + $0xf0] sm:$0xff]
      %v1976 = vld [vmem:[#allocation3 + $0xf8] sm:$0xff]
      %v1977 = vld [vmem:[%s1] sm:$0xff]
      %v1978 = vld [vmem:[%s1 + $0x8] sm:$0xff]
      %v1979 = vld [vmem:[%s1 + $0x10] sm:$0xff]
      %v1980 = vld [vmem:[%s1 + $0x18] sm:$0xff]
      %v1981 = vld [vmem:[%s1 + $0x20] sm:$0xf]
      %v1982 = vld [vmem:[%s2] sm:$0x1]
      %v1984 = vlaneseq
      %v1985 = vshrl.u32 %v1984, 7
      %v1986 = vsub.s32 0, %v1985
      %v1987 = vrot.slane %v1982, %v1986
      %vm1989 = vcmask 293888
      %v1991 = vsel %vm1989, %v1945, 0
      %v1994 = vsel %vm1989, %v1946, 0
      %v1997 = vsel %vm1989, %v1947, 0
      %v2000 = vsel %vm1989, %v1948, 0
      %v2003 = vsel %vm1989, %v1949, 0
      %v2006 = vsel %vm1989, %v1950, 0
      %v2009 = vsel %vm1989, %v1951, 0
      %v2012 = vsel %vm1989, %v1952, 0
      %v2015 = vsel %vm1989, %v1953, 0
      %v2018 = vsel %vm1989, %v1954, 0
      %v2021 = vsel %vm1989, %v1955, 0
      %v2024 = vsel %vm1989, %v1956, 0
      %v2027 = vsel %vm1989, %v1957, 0
      %v2030 = vsel %vm1989, %v1958, 0
      %v2033 = vsel %vm1989, %v1959, 0
      %v2036 = vsel %vm1989, %v1960, 0
      %v2039 = vsel %vm1989, %v1961, 0
      %v2042 = vsel %vm1989, %v1962, 0
      %v2045 = vsel %vm1989, %v1963, 0
      %v2048 = vsel %vm1989, %v1964, 0
      %v2051 = vsel %vm1989, %v1965, 0
      %v2054 = vsel %vm1989, %v1966, 0
      %v2057 = vsel %vm1989, %v1967, 0
      %v2060 = vsel %vm1989, %v1968, 0
      %v2063 = vsel %vm1989, %v1969, 0
      %v2066 = vsel %vm1989, %v1970, 0
      %v2069 = vsel %vm1989, %v1971, 0
      %v2072 = vsel %vm1989, %v1972, 0
      %v2075 = vsel %vm1989, %v1973, 0
      %v2078 = vsel %vm1989, %v1974, 0
      %v2081 = vsel %vm1989, %v1975, 0
      %v2084 = vsel %vm1989, %v1976, 0
      %vm2086 = vcmask 1043456
      %v2088 = vsel %vm2086, %v1981, 0
      %2090 = vmatprep.subr.mxu0 0.0
      %2091 = vmatpush1.msra.mxu0 %v1977
      %2092 = vmatprep.subr.mxu0 0.0
      %2093 = vmatpush1.msra.mxu0 %v1978
      %2094 = vmatprep.subr.mxu0 0.0
      %2095 = vmatpush1.msra.mxu0 %v1979
      %2096 = vmatprep.subr.mxu0 0.0
      %2097 = vmatpush1.msra.mxu0 %v1980
      %2098 = vmatprep.subr.mxu0 0.0
      %2099 = vmatpush1.msra.mxu0 %v2088
      %2100 = vmatprep.subr.mxu0 0.0
      %2101 = vmatpush1.msra.mxu0 0.0
      %2102 = vmatprep.subr.mxu0 0.0
      %2103 = vmatpush1.msra.mxu0 0.0
      %2104 = vmatprep.subr.mxu0 0.0
      %2105 = vmatpush1.msra.mxu0 0.0
      %2106 = vmatprep.subr.mxu0 0.0
      %2107 = vmatpush1.msra.mxu0 0.0
      %2108 = vmatprep.subr.mxu0 0.0
      %2109 = vmatpush1.msra.mxu0 0.0
      %2110 = vmatprep.subr.mxu0 0.0
      %2111 = vmatpush1.msra.mxu0 0.0
      %2112 = vmatprep.subr.mxu0 0.0
      %2113 = vmatpush1.msra.mxu0 0.0
      %2114 = vmatprep.subr.mxu0 0.0
      %2115 = vmatpush1.msra.mxu0 0.0
      %2116 = vmatprep.subr.mxu0 0.0
      %2117 = vmatpush1.msra.mxu0 0.0
      %2118 = vmatprep.subr.mxu0 0.0
      %2119 = vmatpush1.msra.mxu0 0.0
      %2120 = vmatprep.subr.mxu0 0.0
      %2121 = vmatpush1.msra.mxu0 0.0
      %2122 = vmatprep.subr.mxu0 0.0
      %2123 = vmatpush1.msra.mxu0 0.0
      %2124 = vmatprep.subr.mxu0 0.0
      %2125 = vmatpush1.msra.mxu0 0.0
      %2126 = vmatprep.subr.mxu0 0.0
      %2127 = vmatpush1.msra.mxu0 0.0
      %2128 = vmatprep.subr.mxu0 0.0
      %2129 = vmatpush1.msra.mxu0 0.0
      %2130 = vmatprep.subr.mxu0 0.0
      %2131 = vmatpush1.msra.mxu0 0.0
      %2132 = vmatprep.subr.mxu0 0.0
      %2133 = vmatpush1.msra.mxu0 0.0
      %2134 = vmatprep.subr.mxu0 0.0
      %2135 = vmatpush1.msra.mxu0 0.0
      %2136 = vmatprep.subr.mxu0 0.0
      %2137 = vmatpush1.msra.mxu0 0.0
      %2138 = vmatprep.subr.mxu0 0.0
      %2139 = vmatpush1.msra.mxu0 0.0
      %2140 = vmatprep.subr.mxu0 0.0
      %2141 = vmatpush1.msra.mxu0 0.0
      %2142 = vmatprep.subr.mxu0 0.0
      %2143 = vmatpush1.msra.mxu0 0.0
      %2144 = vmatprep.subr.mxu0 0.0
      %2145 = vmatpush1.msra.mxu0 0.0
      %2146 = vmatprep.subr.mxu0 0.0
      %2147 = vmatpush1.msra.mxu0 0.0
      %2148 = vmatprep.subr.mxu0 0.0
      %2149 = vmatpush1.msra.mxu0 0.0
      %2150 = vmatprep.subr.mxu0 0.0
      %2151 = vmatpush1.msra.mxu0 0.0
      %2152 = vmatprep.subr.mxu0 0.0
      %2153 = vmatpush1.msra.mxu0 0.0
      %2154 = vmatprep.mubr.f32.mxu0 0.0
      %2155 = vmatmul.mubr.f32.gmra.mrb[0].mxu0 %v1991
      %v2156 = vpop.f32.mrb[0].mxu0
      %v2157 = vadd.f32 %v1987, %v2156
      %v2158 = vpop.f32.mrb[0].mxu0
      %2159 = vmatprep.mubr.f32.mxu0 0.0
      %2160 = vmatmul.mubr.f32.gmra.mrb[0].mxu0 %v1994
      %v2161 = vpop.f32.mrb[0].mxu0
      %v2162 = vadd.f32 %v1987, %v2161
      %v2163 = vpop.f32.mrb[0].mxu0
      %2164 = vmatprep.mubr.f32.mxu0 0.0
      %2165 = vmatmul.mubr.f32.gmra.mrb[0].mxu0 %v1997
      %v2166 = vpop.f32.mrb[0].mxu0
      %v2167 = vadd.f32 %v1987, %v2166
      %v2168 = vpop.f32.mrb[0].mxu0
      %2169 = vmatprep.mubr.f32.mxu0 0.0
      %2170 = vmatmul.mubr.f32.gmra.mrb[0].mxu0 %v2000
      %v2171 = vpop.f32.mrb[0].mxu0
      %v2172 = vadd.f32 %v1987, %v2171
      %v2173 = vpop.f32.mrb[0].mxu0
      %2174 = vmatprep.mubr.f32.mxu0 0.0
      %2175 = vmatmul.mubr.f32.gmra.mrb[0].mxu0 %v2003
      %v2176 = vpop.f32.mrb[0].mxu0
      %v2177 = vadd.f32 %v1987, %v2176
      %v2178 = vpop.f32.mrb[0].mxu0
      %2179 = vmatprep.mubr.f32.mxu0 0.0
      %2180 = vmatmul.mubr.f32.gmra.mrb[0].mxu0 %v2006
      %v2181 = vpop.f32.mrb[0].mxu0
      %v2182 = vadd.f32 %v1987, %v2181
      %v2183 = vpop.f32.mrb[0].mxu0
      %2184 = vmatprep.mubr.f32.mxu0 0.0
      %2185 = vmatmul.mubr.f32.gmra.mrb[0].mxu0 %v2009
      %v2186 = vpop.f32.mrb[0].mxu0
      %v2187 = vadd.f32 %v1987, %v2186
      %v2188 = vpop.f32.mrb[0].mxu0
      %2189 = vmatprep.mubr.f32.mxu0 0.0
      %2190 = vmatmul.mubr.f32.gmra.mrb[0].mxu0 %v2012
      %v2191 = vpop.f32.mrb[0].mxu0
      %v2192 = vadd.f32 %v1987, %v2191
      %v2193 = vpop.f32.mrb[0].mxu0
      %2194 = vmatprep.mubr.f32.mxu0 0.0
      %2195 = vmatmul.mubr.f32.gmra.mrb[0].mxu0 %v2015
      %v2196 = vpop.f32.mrb[0].mxu0
      %v2197 = vadd.f32 %v1987, %v2196
      %v2198 = vpop.f32.mrb[0].mxu0
      %2199 = vmatprep.mubr.f32.mxu0 0.0
      %2200 = vmatmul.mubr.f32.gmra.mrb[0].mxu0 %v2018
      %v2201 = vpop.f32.mrb[0].mxu0
      %v2202 = vadd.f32 %v1987, %v2201
      %v2203 = vpop.f32.mrb[0].mxu0
      %2204 = vmatprep.mubr.f32.mxu0 0.0
      %2205 = vmatmul.mubr.f32.gmra.mrb[0].mxu0 %v2021
      %v2206 = vpop.f32.mrb[0].mxu0
      %v2207 = vadd.f32 %v1987, %v2206
      %v2208 = vpop.f32.mrb[0].mxu0
      %2209 = vmatprep.mubr.f32.mxu0 0.0
      %2210 = vmatmul.mubr.f32.gmra.mrb[0].mxu0 %v2024
      %v2211 = vpop.f32.mrb[0].mxu0
      %v2212 = vadd.f32 %v1987, %v2211
      %v2213 = vpop.f32.mrb[0].mxu0
      %2214 = vmatprep.mubr.f32.mxu0 0.0
      %2215 = vmatmul.mubr.f32.gmra.mrb[0].mxu0 %v2027
      %v2216 = vpop.f32.mrb[0].mxu0
      %v2217 = vadd.f32 %v1987, %v2216
      %v2218 = vpop.f32.mrb[0].mxu0
      %2219 = vmatprep.mubr.f32.mxu0 0.0
      %2220 = vmatmul.mubr.f32.gmra.mrb[0].mxu0 %v2030
      %v2221 = vpop.f32.mrb[0].mxu0
      %v2222 = vadd.f32 %v1987, %v2221
      %v2223 = vpop.f32.mrb[0].mxu0
      %2224 = vmatprep.mubr.f32.mxu0 0.0
      %2225 = vmatmul.mubr.f32.gmra.mrb[0].mxu0 %v2033
      %v2226 = vpop.f32.mrb[0].mxu0
      %v2227 = vadd.f32 %v1987, %v2226
      %v2228 = vpop.f32.mrb[0].mxu0
      %2229 = vmatprep.mubr.f32.mxu0 0.0
      %2230 = vmatmul.mubr.f32.gmra.mrb[0].mxu0 %v2036
      %v2231 = vpop.f32.mrb[0].mxu0
      %v2232 = vadd.f32 %v1987, %v2231
      %v2233 = vpop.f32.mrb[0].mxu0
      %2234 = vmatprep.mubr.f32.mxu0 0.0
      %2235 = vmatmul.mubr.f32.gmra.mrb[0].mxu0 %v2039
      %v2236 = vpop.f32.mrb[0].mxu0
      %v2237 = vadd.f32 %v1987, %v2236
      %v2238 = vpop.f32.mrb[0].mxu0
      %2239 = vmatprep.mubr.f32.mxu0 0.0
      %2240 = vmatmul.mubr.f32.gmra.mrb[0].mxu0 %v2042
      %v2241 = vpop.f32.mrb[0].mxu0
      %v2242 = vadd.f32 %v1987, %v2241
      %v2243 = vpop.f32.mrb[0].mxu0
      %2244 = vmatprep.mubr.f32.mxu0 0.0
      %2245 = vmatmul.mubr.f32.gmra.mrb[0].mxu0 %v2045
      %v2246 = vpop.f32.mrb[0].mxu0
      %v2247 = vadd.f32 %v1987, %v2246
      %v2248 = vpop.f32.mrb[0].mxu0
      %2249 = vmatprep.mubr.f32.mxu0 0.0
      %2250 = vmatmul.mubr.f32.gmra.mrb[0].mxu0 %v2048
      %v2251 = vpop.f32.mrb[0].mxu0
      %v2252 = vadd.f32 %v1987, %v2251
      %v2253 = vpop.f32.mrb[0].mxu0
      %2254 = vmatprep.mubr.f32.mxu0 0.0
      %2255 = vmatmul.mubr.f32.gmra.mrb[0].mxu0 %v2051
      %v2256 = vpop.f32.mrb[0].mxu0
      %v2257 = vadd.f32 %v1987, %v2256
      %v2258 = vpop.f32.mrb[0].mxu0
      %2259 = vmatprep.mubr.f32.mxu0 0.0
      %2260 = vmatmul.mubr.f32.gmra.mrb[0].mxu0 %v2054
      %v2261 = vpop.f32.mrb[0].mxu0
      %v2262 = vadd.f32 %v1987, %v2261
      %v2263 = vpop.f32.mrb[0].mxu0
      %2264 = vmatprep.mubr.f32.mxu0 0.0
      %2265 = vmatmul.mubr.f32.gmra.mrb[0].mxu0 %v2057
      %v2266 = vpop.f32.mrb[0].mxu0
      %v2267 = vadd.f32 %v1987, %v2266
      %v2268 = vpop.f32.mrb[0].mxu0
      %2269 = vmatprep.mubr.f32.mxu0 0.0
      %2270 = vmatmul.mubr.f32.gmra.mrb[0].mxu0 %v2060
      %v2271 = vpop.f32.mrb[0].mxu0
      %v2272 = vadd.f32 %v1987, %v2271
      %v2273 = vpop.f32.mrb[0].mxu0
      %2274 = vmatprep.mubr.f32.mxu0 0.0
      %2275 = vmatmul.mubr.f32.gmra.mrb[0].mxu0 %v2063
      %v2276 = vpop.f32.mrb[0].mxu0
      %v2277 = vadd.f32 %v1987, %v2276
      %v2278 = vpop.f32.mrb[0].mxu0
      %2279 = vmatprep.mubr.f32.mxu0 0.0
      %2280 = vmatmul.mubr.f32.gmra.mrb[0].mxu0 %v2066
      %v2281 = vpop.f32.mrb[0].mxu0
      %v2282 = vadd.f32 %v1987, %v2281
      %v2283 = vpop.f32.mrb[0].mxu0
      %2284 = vmatprep.mubr.f32.mxu0 0.0
      %2285 = vmatmul.mubr.f32.gmra.mrb[0].mxu0 %v2069
      %v2286 = vpop.f32.mrb[0].mxu0
      %v2287 = vadd.f32 %v1987, %v2286
      %v2288 = vpop.f32.mrb[0].mxu0
      %2289 = vmatprep.mubr.f32.mxu0 0.0
      %2290 = vmatmul.mubr.f32.gmra.mrb[0].mxu0 %v2072
      %v2291 = vpop.f32.mrb[0].mxu0
      %v2292 = vadd.f32 %v1987, %v2291
      %v2293 = vpop.f32.mrb[0].mxu0
      %2294 = vmatprep.mubr.f32.mxu0 0.0
      %2295 = vmatmul.mubr.f32.gmra.mrb[0].mxu0 %v2075
      %v2296 = vpop.f32.mrb[0].mxu0
      %v2297 = vadd.f32 %v1987, %v2296
      %v2298 = vpop.f32.mrb[0].mxu0
      %2299 = vmatprep.mubr.f32.mxu0 0.0
      %2300 = vmatmul.mubr.f32.gmra.mrb[0].mxu0 %v2078
      %v2301 = vpop.f32.mrb[0].mxu0
      %v2302 = vadd.f32 %v1987, %v2301
      %v2303 = vpop.f32.mrb[0].mxu0
      %2304 = vmatprep.mubr.f32.mxu0 0.0
      %2305 = vmatmul.mubr.f32.gmra.mrb[0].mxu0 %v2081
      %v2306 = vpop.f32.mrb[0].mxu0
      %v2307 = vadd.f32 %v1987, %v2306
      %v2308 = vpop.f32.mrb[0].mxu0
      %2309 = vmatprep.mubr.f32.mxu0 0.0
      %2310 = vmatmul.mubr.f32.gmra.mrb[0].mxu0 %v2084
      %v2311 = vpop.f32.mrb[0].mxu0
      %v2312 = vadd.f32 %v1987, %v2311
      %v2313 = vpop.f32.mrb[0].mxu0
      %2314 = vdwg.mxu0
      %v2315 = vmax.f32 %v2157, 0.0
      %v2316 = vmax.f32 %v2162, 0.0
      %v2317 = vmax.f32 %v2167, 0.0
      %v2318 = vmax.f32 %v2172, 0.0
      %v2319 = vmax.f32 %v2177, 0.0
      %v2320 = vmax.f32 %v2182, 0.0
      %v2321 = vmax.f32 %v2187, 0.0
      %v2322 = vmax.f32 %v2192, 0.0
      %v2323 = vmax.f32 %v2197, 0.0
      %v2324 = vmax.f32 %v2202, 0.0
      %v2325 = vmax.f32 %v2207, 0.0
      %v2326 = vmax.f32 %v2212, 0.0
      %v2327 = vmax.f32 %v2217, 0.0
      %v2328 = vmax.f32 %v2222, 0.0
      %v2329 = vmax.f32 %v2227, 0.0
      %v2330 = vmax.f32 %v2232, 0.0
      %v2331 = vmax.f32 %v2237, 0.0
      %v2332 = vmax.f32 %v2242, 0.0
      %v2333 = vmax.f32 %v2247, 0.0
      %v2334 = vmax.f32 %v2252, 0.0
      %v2335 = vmax.f32 %v2257, 0.0
      %v2336 = vmax.f32 %v2262, 0.0
      %v2337 = vmax.f32 %v2267, 0.0
      %v2338 = vmax.f32 %v2272, 0.0
      %v2339 = vmax.f32 %v2277, 0.0
      %v2340 = vmax.f32 %v2282, 0.0
      %v2341 = vmax.f32 %v2287, 0.0
      %v2342 = vmax.f32 %v2292, 0.0
      %v2343 = vmax.f32 %v2297, 0.0
      %v2344 = vmax.f32 %v2302, 0.0
      %v2345 = vmax.f32 %v2307, 0.0
      %v2346 = vmax.f32 %v2312, 0.0
      %2347 = vst.msk [vmem:[%s303 + $0x1] sm:$0xff] %vm225, %v2315
      %2348 = vst.msk [vmem:[%s303 + $0x9] sm:$0xff] %vm225, %v2316
      %2349 = vst.msk [vmem:[%s303 + $0x19] sm:$0xff] %vm225, %v2317
      %2350 = vst.msk [vmem:[%s303 + $0x21] sm:$0xff] %vm225, %v2318
      %2351 = vst.msk [vmem:[%s303 + $0x31] sm:$0xff] %vm225, %v2319
      %2352 = vst.msk [vmem:[%s303 + $0x39] sm:$0xff] %vm225, %v2320
      %2353 = vst.msk [vmem:[%s303 + $0x49] sm:$0xff] %vm225, %v2321
      %2354 = vst.msk [vmem:[%s303 + $0x51] sm:$0xff] %vm225, %v2322
      %2355 = vst.msk [vmem:[%s303 + $0x61] sm:$0xff] %vm225, %v2323
      %2356 = vst.msk [vmem:[%s303 + $0x69] sm:$0xff] %vm225, %v2324
      %2357 = vst.msk [vmem:[%s303 + $0x79] sm:$0xff] %vm225, %v2325
      %2358 = vst.msk [vmem:[%s303 + $0x81] sm:$0xff] %vm225, %v2326
      %2359 = vst.msk [vmem:[%s303 + $0x91] sm:$0xff] %vm225, %v2327
      %2360 = vst.msk [vmem:[%s303 + $0x99] sm:$0xff] %vm225, %v2328
      %2361 = vst.msk [vmem:[%s303 + $0xa9] sm:$0xff] %vm225, %v2329
      %2362 = vst.msk [vmem:[%s303 + $0xb1] sm:$0xff] %vm225, %v2330
      %2363 = vst.msk [vmem:[%s303 + $0xc1] sm:$0xff] %vm225, %v2331
      %2364 = vst.msk [vmem:[%s303 + $0xc9] sm:$0xff] %vm225, %v2332
      %2365 = vst.msk [vmem:[%s303 + $0xd9] sm:$0xff] %vm225, %v2333
      %2366 = vst.msk [vmem:[%s303 + $0xe1] sm:$0xff] %vm225, %v2334
      %2367 = vst.msk [vmem:[%s303 + $0xf1] sm:$0xff] %vm225, %v2335
      %2368 = vst.msk [vmem:[%s303 + $0xf9] sm:$0xff] %vm225, %v2336
      %2369 = vst.msk [vmem:[%s303 + $0x109] sm:$0xff] %vm225, %v2337
      %2370 = vst.msk [vmem:[%s303 + $0x111] sm:$0xff] %vm225, %v2338
      %2371 = vst.msk [vmem:[%s303 + $0x121] sm:$0xff] %vm225, %v2339
      %2372 = vst.msk [vmem:[%s303 + $0x129] sm:$0xff] %vm225, %v2340
      %2373 = vst.msk [vmem:[%s303 + $0x139] sm:$0xff] %vm225, %v2341
      %2374 = vst.msk [vmem:[%s303 + $0x141] sm:$0xff] %vm225, %v2342
      %2375 = vst.msk [vmem:[%s303 + $0x151] sm:$0xff] %vm225, %v2343
      %2376 = vst.msk [vmem:[%s303 + $0x159] sm:$0xff] %vm225, %v2344
      %2377 = vst.msk [vmem:[%s303 + $0x169] sm:$0xff] %vm225, %v2345
      %2378 = vst.msk [vmem:[%s303 + $0x171] sm:$0xff] %vm225, %v2346
      %v2379 = vld [vmem:[#allocation2] sm:$0xff]
      %v2380 = vld [vmem:[#allocation2 + $0x8] sm:$0xff]
      %v2381 = vld [vmem:[#allocation2 + $0x18] sm:$0xff]
      %v2382 = vld [vmem:[#allocation2 + $0x20] sm:$0xff]
      %v2383 = vld [vmem:[#allocation2 + $0x30] sm:$0xff]
      %v2384 = vld [vmem:[#allocation2 + $0x38] sm:$0xff]
      %v2385 = vld [vmem:[#allocation2 + $0x48] sm:$0xff]
      %v2386 = vld [vmem:[#allocation2 + $0x50] sm:$0xff]
      %v2387 = vld [vmem:[#allocation2 + $0x60] sm:$0xff]
      %v2388 = vld [vmem:[#allocation2 + $0x68] sm:$0xff]
      %v2389 = vld [vmem:[#allocation2 + $0x78] sm:$0xff]
      %v2390 = vld [vmem:[#allocation2 + $0x80] sm:$0xff]
      %v2391 = vld [vmem:[#allocation2 + $0x90] sm:$0xff]
      %v2392 = vld [vmem:[#allocation2 + $0x98] sm:$0xff]
      %v2393 = vld [vmem:[#allocation2 + $0xa8] sm:$0xff]
      %v2394 = vld [vmem:[#allocation2 + $0xb0] sm:$0xff]
      %v2395 = vld [vmem:[#allocation2 + $0xc0] sm:$0xff]
      %v2396 = vld [vmem:[#allocation2 + $0xc8] sm:$0xff]
      %v2397 = vld [vmem:[#allocation2 + $0xd8] sm:$0xff]
      %v2398 = vld [vmem:[#allocation2 + $0xe0] sm:$0xff]
      %v2399 = vld [vmem:[#allocation2 + $0xf0] sm:$0xff]
      %v2400 = vld [vmem:[#allocation2 + $0xf8] sm:$0xff]
      %v2401 = vld [vmem:[#allocation2 + $0x108] sm:$0xff]
      %v2402 = vld [vmem:[#allocation2 + $0x110] sm:$0xff]
      %v2403 = vld [vmem:[#allocation2 + $0x120] sm:$0xff]
      %v2404 = vld [vmem:[#allocation2 + $0x128] sm:$0xff]
      %v2405 = vld [vmem:[#allocation2 + $0x138] sm:$0xff]
      %v2406 = vld [vmem:[#allocation2 + $0x140] sm:$0xff]
      %v2407 = vld [vmem:[#allocation2 + $0x150] sm:$0xff]
      %v2408 = vld [vmem:[#allocation2 + $0x158] sm:$0xff]
      %v2409 = vld [vmem:[#allocation2 + $0x168] sm:$0xff]
      %v2410 = vld [vmem:[#allocation2 + $0x170] sm:$0xff]
      %2411 = vst.msk [vmem:[#allocation3] sm:$0xff] %vm225, %v2379
      %2412 = vst.msk [vmem:[#allocation3 + $0x8] sm:$0xff] %vm225, %v2380
      %2413 = vst.msk [vmem:[#allocation3 + $0x10] sm:$0xff] %vm225, %v2381
      %2414 = vst.msk [vmem:[#allocation3 + $0x18] sm:$0xff] %vm225, %v2382
      %2415 = vst.msk [vmem:[#allocation3 + $0x20] sm:$0xff] %vm225, %v2383
      %2416 = vst.msk [vmem:[#allocation3 + $0x28] sm:$0xff] %vm225, %v2384
      %2417 = vst.msk [vmem:[#allocation3 + $0x30] sm:$0xff] %vm225, %v2385
      %2418 = vst.msk [vmem:[#allocation3 + $0x38] sm:$0xff] %vm225, %v2386
      %2419 = vst.msk [vmem:[#allocation3 + $0x40] sm:$0xff] %vm225, %v2387
      %2420 = vst.msk [vmem:[#allocation3 + $0x48] sm:$0xff] %vm225, %v2388
      %2421 = vst.msk [vmem:[#allocation3 + $0x50] sm:$0xff] %vm225, %v2389
      %2422 = vst.msk [vmem:[#allocation3 + $0x58] sm:$0xff] %vm225, %v2390
      %2423 = vst.msk [vmem:[#allocation3 + $0x60] sm:$0xff] %vm225, %v2391
      %2424 = vst.msk [vmem:[#allocation3 + $0x68] sm:$0xff] %vm225, %v2392
      %2425 = vst.msk [vmem:[#allocation3 + $0x70] sm:$0xff] %vm225, %v2393
      %2426 = vst.msk [vmem:[#allocation3 + $0x78] sm:$0xff] %vm225, %v2394
      %2427 = vst.msk [vmem:[#allocation3 + $0x80] sm:$0xff] %vm225, %v2395
      %2428 = vst.msk [vmem:[#allocation3 + $0x88] sm:$0xff] %vm225, %v2396
      %2429 = vst.msk [vmem:[#allocation3 + $0x90] sm:$0xff] %vm225, %v2397
      %2430 = vst.msk [vmem:[#allocation3 + $0x98] sm:$0xff] %vm225, %v2398
      %2431 = vst.msk [vmem:[#allocation3 + $0xa0] sm:$0xff] %vm225, %v2399
      %2432 = vst.msk [vmem:[#allocation3 + $0xa8] sm:$0xff] %vm225, %v2400
      %2433 = vst.msk [vmem:[#allocation3 + $0xb0] sm:$0xff] %vm225, %v2401
      %2434 = vst.msk [vmem:[#allocation3 + $0xb8] sm:$0xff] %vm225, %v2402
      %2435 = vst.msk [vmem:[#allocation3 + $0xc0] sm:$0xff] %vm225, %v2403
      %2436 = vst.msk [vmem:[#allocation3 + $0xc8] sm:$0xff] %vm225, %v2404
      %2437 = vst.msk [vmem:[#allocation3 + $0xd0] sm:$0xff] %vm225, %v2405
      %2438 = vst.msk [vmem:[#allocation3 + $0xd8] sm:$0xff] %vm225, %v2406
      %2439 = vst.msk [vmem:[#allocation3 + $0xe0] sm:$0xff] %vm225, %v2407
      %2440 = vst.msk [vmem:[#allocation3 + $0xe8] sm:$0xff] %vm225, %v2408
      %2441 = vst.msk [vmem:[#allocation3 + $0xf0] sm:$0xff] %vm225, %v2409
      %2442 = vst.msk [vmem:[#allocation3 + $0xf8] sm:$0xff] %vm225, %v2410
      %v2443 = vld [vmem:[#allocation2 + $0x1] sm:$0xff]
      %v2444 = vld [vmem:[#allocation2 + $0x9] sm:$0xff]
      %v2445 = vld [vmem:[#allocation2 + $0x19] sm:$0xff]
      %v2446 = vld [vmem:[#allocation2 + $0x21] sm:$0xff]
      %v2447 = vld [vmem:[#allocation2 + $0x31] sm:$0xff]
      %v2448 = vld [vmem:[#allocation2 + $0x39] sm:$0xff]
      %v2449 = vld [vmem:[#allocation2 + $0x49] sm:$0xff]
      %v2450 = vld [vmem:[#allocation2 + $0x51] sm:$0xff]
      %v2451 = vld [vmem:[#allocation2 + $0x61] sm:$0xff]
      %v2452 = vld [vmem:[#allocation2 + $0x69] sm:$0xff]
      %v2453 = vld [vmem:[#allocation2 + $0x79] sm:$0xff]
      %v2454 = vld [vmem:[#allocation2 + $0x81] sm:$0xff]
      %v2455 = vld [vmem:[#allocation2 + $0x91] sm:$0xff]
      %v2456 = vld [vmem:[#allocation2 + $0x99] sm:$0xff]
      %v2457 = vld [vmem:[#allocation2 + $0xa9] sm:$0xff]
      %v2458 = vld [vmem:[#allocation2 + $0xb1] sm:$0xff]
      %v2459 = vld [vmem:[#allocation2 + $0xc1] sm:$0xff]
      %v2460 = vld [vmem:[#allocation2 + $0xc9] sm:$0xff]
      %v2461 = vld [vmem:[#allocation2 + $0xd9] sm:$0xff]
      %v2462 = vld [vmem:[#allocation2 + $0xe1] sm:$0xff]
      %v2463 = vld [vmem:[#allocation2 + $0xf1] sm:$0xff]
      %v2464 = vld [vmem:[#allocation2 + $0xf9] sm:$0xff]
      %v2465 = vld [vmem:[#allocation2 + $0x109] sm:$0xff]
      %v2466 = vld [vmem:[#allocation2 + $0x111] sm:$0xff]
      %v2467 = vld [vmem:[#allocation2 + $0x121] sm:$0xff]
      %v2468 = vld [vmem:[#allocation2 + $0x129] sm:$0xff]
      %v2469 = vld [vmem:[#allocation2 + $0x139] sm:$0xff]
      %v2470 = vld [vmem:[#allocation2 + $0x141] sm:$0xff]
      %v2471 = vld [vmem:[#allocation2 + $0x151] sm:$0xff]
      %v2472 = vld [vmem:[#allocation2 + $0x159] sm:$0xff]
      %v2473 = vld [vmem:[#allocation2 + $0x169] sm:$0xff]
      %v2474 = vld [vmem:[#allocation2 + $0x171] sm:$0xff]
      %2507 = vrot.lane.b32.xlu0 %v2443, 4
      %v2508 = vpop.permute.xlu0 %2507
      %2509 = vrot.lane.b32.xlu0 %v2444, 4
      %v2510 = vpop.permute.xlu0 %2509
      %2511 = vrot.lane.b32.xlu0 %v2445, 4
      %v2512 = vpop.permute.xlu0 %2511
      %2513 = vrot.lane.b32.xlu0 %v2446, 4
      %v2514 = vpop.permute.xlu0 %2513
      %2515 = vrot.lane.b32.xlu0 %v2447, 4
      %v2516 = vpop.permute.xlu0 %2515
      %2517 = vrot.lane.b32.xlu0 %v2448, 4
      %v2518 = vpop.permute.xlu0 %2517
      %2519 = vrot.lane.b32.xlu0 %v2449, 4
      %v2520 = vpop.permute.xlu0 %2519
      %2521 = vrot.lane.b32.xlu0 %v2450, 4
      %v2522 = vpop.permute.xlu0 %2521
      %2523 = vrot.lane.b32.xlu0 %v2451, 4
      %v2524 = vpop.permute.xlu0 %2523
      %2525 = vrot.lane.b32.xlu0 %v2452, 4
      %v2526 = vpop.permute.xlu0 %2525
      %2527 = vrot.lane.b32.xlu0 %v2453, 4
      %v2528 = vpop.permute.xlu0 %2527
      %2529 = vrot.lane.b32.xlu0 %v2454, 4
      %v2530 = vpop.permute.xlu0 %2529
      %2531 = vrot.lane.b32.xlu0 %v2455, 4
      %v2532 = vpop.permute.xlu0 %2531
      %2533 = vrot.lane.b32.xlu0 %v2456, 4
      %v2534 = vpop.permute.xlu0 %2533
      %2535 = vrot.lane.b32.xlu0 %v2457, 4
      %v2536 = vpop.permute.xlu0 %2535
      %2537 = vrot.lane.b32.xlu0 %v2458, 4
      %v2538 = vpop.permute.xlu0 %2537
      %2539 = vrot.lane.b32.xlu0 %v2459, 4
      %v2540 = vpop.permute.xlu0 %2539
      %2541 = vrot.lane.b32.xlu0 %v2460, 4
      %v2542 = vpop.permute.xlu0 %2541
      %2543 = vrot.lane.b32.xlu0 %v2461, 4
      %v2544 = vpop.permute.xlu0 %2543
      %2545 = vrot.lane.b32.xlu0 %v2462, 4
      %v2546 = vpop.permute.xlu0 %2545
      %2547 = vrot.lane.b32.xlu0 %v2463, 4
      %v2548 = vpop.permute.xlu0 %2547
      %2549 = vrot.lane.b32.xlu0 %v2464, 4
      %v2550 = vpop.permute.xlu0 %2549
      %2551 = vrot.lane.b32.xlu0 %v2465, 4
      %v2552 = vpop.permute.xlu0 %2551
      %2553 = vrot.lane.b32.xlu0 %v2466, 4
      %v2554 = vpop.permute.xlu0 %2553
      %2555 = vrot.lane.b32.xlu0 %v2467, 4
      %v2556 = vpop.permute.xlu0 %2555
      %2557 = vrot.lane.b32.xlu0 %v2468, 4
      %v2558 = vpop.permute.xlu0 %2557
      %2559 = vrot.lane.b32.xlu0 %v2469, 4
      %v2560 = vpop.permute.xlu0 %2559
      %2561 = vrot.lane.b32.xlu0 %v2470, 4
      %v2562 = vpop.permute.xlu0 %2561
      %2563 = vrot.lane.b32.xlu0 %v2471, 4
      %v2564 = vpop.permute.xlu0 %2563
      %2565 = vrot.lane.b32.xlu0 %v2472, 4
      %v2566 = vpop.permute.xlu0 %2565
      %2567 = vrot.lane.b32.xlu0 %v2473, 4
      %v2568 = vpop.permute.xlu0 %2567
      %2569 = vrot.lane.b32.xlu0 %v2474, 4
      %v2570 = vpop.permute.xlu0 %2569
      %2603 = vst.msk [vmem:[#allocation3] sm:$0xff] %vm560, %v2508
      %2604 = vst.msk [vmem:[#allocation3 + $0x8] sm:$0xff] %vm560, %v2510
      %2605 = vst.msk [vmem:[#allocation3 + $0x10] sm:$0xff] %vm560, %v2512
      %2606 = vst.msk [vmem:[#allocation3 + $0x18] sm:$0xff] %vm560, %v2514
      %2607 = vst.msk [vmem:[#allocation3 + $0x20] sm:$0xff] %vm560, %v2516
      %2608 = vst.msk [vmem:[#allocation3 + $0x28] sm:$0xff] %vm560, %v2518
      %2609 = vst.msk [vmem:[#allocation3 + $0x30] sm:$0xff] %vm560, %v2520
      %2610 = vst.msk [vmem:[#allocation3 + $0x38] sm:$0xff] %vm560, %v2522
      %2611 = vst.msk [vmem:[#allocation3 + $0x40] sm:$0xff] %vm560, %v2524
      %2612 = vst.msk [vmem:[#allocation3 + $0x48] sm:$0xff] %vm560, %v2526
      %2613 = vst.msk [vmem:[#allocation3 + $0x50] sm:$0xff] %vm560, %v2528
      %2614 = vst.msk [vmem:[#allocation3 + $0x58] sm:$0xff] %vm560, %v2530
      %2615 = vst.msk [vmem:[#allocation3 + $0x60] sm:$0xff] %vm560, %v2532
      %2616 = vst.msk [vmem:[#allocation3 + $0x68] sm:$0xff] %vm560, %v2534
      %2617 = vst.msk [vmem:[#allocation3 + $0x70] sm:$0xff] %vm560, %v2536
      %2618 = vst.msk [vmem:[#allocation3 + $0x78] sm:$0xff] %vm560, %v2538
      %2619 = vst.msk [vmem:[#allocation3 + $0x80] sm:$0xff] %vm560, %v2540
      %2620 = vst.msk [vmem:[#allocation3 + $0x88] sm:$0xff] %vm560, %v2542
      %2621 = vst.msk [vmem:[#allocation3 + $0x90] sm:$0xff] %vm560, %v2544
      %2622 = vst.msk [vmem:[#allocation3 + $0x98] sm:$0xff] %vm560, %v2546
      %2623 = vst.msk [vmem:[#allocation3 + $0xa0] sm:$0xff] %vm560, %v2548
      %2624 = vst.msk [vmem:[#allocation3 + $0xa8] sm:$0xff] %vm560, %v2550
      %2625 = vst.msk [vmem:[#allocation3 + $0xb0] sm:$0xff] %vm560, %v2552
      %2626 = vst.msk [vmem:[#allocation3 + $0xb8] sm:$0xff] %vm560, %v2554
      %2627 = vst.msk [vmem:[#allocation3 + $0xc0] sm:$0xff] %vm560, %v2556
      %2628 = vst.msk [vmem:[#allocation3 + $0xc8] sm:$0xff] %vm560, %v2558
      %2629 = vst.msk [vmem:[#allocation3 + $0xd0] sm:$0xff] %vm560, %v2560
      %2630 = vst.msk [vmem:[#allocation3 + $0xd8] sm:$0xff] %vm560, %v2562
      %2631 = vst.msk [vmem:[#allocation3 + $0xe0] sm:$0xff] %vm560, %v2564
      %2632 = vst.msk [vmem:[#allocation3 + $0xe8] sm:$0xff] %vm560, %v2566
      %2633 = vst.msk [vmem:[#allocation3 + $0xf0] sm:$0xff] %vm560, %v2568
      %2634 = vst.msk [vmem:[#allocation3 + $0xf8] sm:$0xff] %vm560, %v2570
      %v2635 = vld [vmem:[#allocation2 + $0x2] sm:$0xff]
      %v2636 = vld [vmem:[#allocation2 + $0xa] sm:$0xff]
      %v2637 = vld [vmem:[#allocation2 + $0x1a] sm:$0xff]
      %v2638 = vld [vmem:[#allocation2 + $0x22] sm:$0xff]
      %v2639 = vld [vmem:[#allocation2 + $0x32] sm:$0xff]
      %v2640 = vld [vmem:[#allocation2 + $0x3a] sm:$0xff]
      %v2641 = vld [vmem:[#allocation2 + $0x4a] sm:$0xff]
      %v2642 = vld [vmem:[#allocation2 + $0x52] sm:$0xff]
      %v2643 = vld [vmem:[#allocation2 + $0x62] sm:$0xff]
      %v2644 = vld [vmem:[#allocation2 + $0x6a] sm:$0xff]
      %v2645 = vld [vmem:[#allocation2 + $0x7a] sm:$0xff]
      %v2646 = vld [vmem:[#allocation2 + $0x82] sm:$0xff]
      %v2647 = vld [vmem:[#allocation2 + $0x92] sm:$0xff]
      %v2648 = vld [vmem:[#allocation2 + $0x9a] sm:$0xff]
      %v2649 = vld [vmem:[#allocation2 + $0xaa] sm:$0xff]
      %v2650 = vld [vmem:[#allocation2 + $0xb2] sm:$0xff]
      %v2651 = vld [vmem:[#allocation2 + $0xc2] sm:$0xff]
      %v2652 = vld [vmem:[#allocation2 + $0xca] sm:$0xff]
      %v2653 = vld [vmem:[#allocation2 + $0xda] sm:$0xff]
      %v2654 = vld [vmem:[#allocation2 + $0xe2] sm:$0xff]
      %v2655 = vld [vmem:[#allocation2 + $0xf2] sm:$0xff]
      %v2656 = vld [vmem:[#allocation2 + $0xfa] sm:$0xff]
      %v2657 = vld [vmem:[#allocation2 + $0x10a] sm:$0xff]
      %v2658 = vld [vmem:[#allocation2 + $0x112] sm:$0xff]
      %v2659 = vld [vmem:[#allocation2 + $0x122] sm:$0xff]
      %v2660 = vld [vmem:[#allocation2 + $0x12a] sm:$0xff]
      %v2661 = vld [vmem:[#allocation2 + $0x13a] sm:$0xff]
      %v2662 = vld [vmem:[#allocation2 + $0x142] sm:$0xff]
      %v2663 = vld [vmem:[#allocation2 + $0x152] sm:$0xff]
      %v2664 = vld [vmem:[#allocation2 + $0x15a] sm:$0xff]
      %v2665 = vld [vmem:[#allocation2 + $0x16a] sm:$0xff]
      %v2666 = vld [vmem:[#allocation2 + $0x172] sm:$0xff]
      %2699 = vrot.lane.b32.xlu0 %v2635, 8
      %v2700 = vpop.permute.xlu0 %2699
      %2701 = vrot.lane.b32.xlu0 %v2636, 8
      %v2702 = vpop.permute.xlu0 %2701
      %2703 = vrot.lane.b32.xlu0 %v2637, 8
      %v2704 = vpop.permute.xlu0 %2703
      %2705 = vrot.lane.b32.xlu0 %v2638, 8
      %v2706 = vpop.permute.xlu0 %2705
      %2707 = vrot.lane.b32.xlu0 %v2639, 8
      %v2708 = vpop.permute.xlu0 %2707
      %2709 = vrot.lane.b32.xlu0 %v2640, 8
      %v2710 = vpop.permute.xlu0 %2709
      %2711 = vrot.lane.b32.xlu0 %v2641, 8
      %v2712 = vpop.permute.xlu0 %2711
      %2713 = vrot.lane.b32.xlu0 %v2642, 8
      %v2714 = vpop.permute.xlu0 %2713
      %2715 = vrot.lane.b32.xlu0 %v2643, 8
      %v2716 = vpop.permute.xlu0 %2715
      %2717 = vrot.lane.b32.xlu0 %v2644, 8
      %v2718 = vpop.permute.xlu0 %2717
      %2719 = vrot.lane.b32.xlu0 %v2645, 8
      %v2720 = vpop.permute.xlu0 %2719
      %2721 = vrot.lane.b32.xlu0 %v2646, 8
      %v2722 = vpop.permute.xlu0 %2721
      %2723 = vrot.lane.b32.xlu0 %v2647, 8
      %v2724 = vpop.permute.xlu0 %2723
      %2725 = vrot.lane.b32.xlu0 %v2648, 8
      %v2726 = vpop.permute.xlu0 %2725
      %2727 = vrot.lane.b32.xlu0 %v2649, 8
      %v2728 = vpop.permute.xlu0 %2727
      %2729 = vrot.lane.b32.xlu0 %v2650, 8
      %v2730 = vpop.permute.xlu0 %2729
      %2731 = vrot.lane.b32.xlu0 %v2651, 8
      %v2732 = vpop.permute.xlu0 %2731
      %2733 = vrot.lane.b32.xlu0 %v2652, 8
      %v2734 = vpop.permute.xlu0 %2733
      %2735 = vrot.lane.b32.xlu0 %v2653, 8
      %v2736 = vpop.permute.xlu0 %2735
      %2737 = vrot.lane.b32.xlu0 %v2654, 8
      %v2738 = vpop.permute.xlu0 %2737
      %2739 = vrot.lane.b32.xlu0 %v2655, 8
      %v2740 = vpop.permute.xlu0 %2739
      %2741 = vrot.lane.b32.xlu0 %v2656, 8
      %v2742 = vpop.permute.xlu0 %2741
      %2743 = vrot.lane.b32.xlu0 %v2657, 8
      %v2744 = vpop.permute.xlu0 %2743
      %2745 = vrot.lane.b32.xlu0 %v2658, 8
      %v2746 = vpop.permute.xlu0 %2745
      %2747 = vrot.lane.b32.xlu0 %v2659, 8
      %v2748 = vpop.permute.xlu0 %2747
      %2749 = vrot.lane.b32.xlu0 %v2660, 8
      %v2750 = vpop.permute.xlu0 %2749
      %2751 = vrot.lane.b32.xlu0 %v2661, 8
      %v2752 = vpop.permute.xlu0 %2751
      %2753 = vrot.lane.b32.xlu0 %v2662, 8
      %v2754 = vpop.permute.xlu0 %2753
      %2755 = vrot.lane.b32.xlu0 %v2663, 8
      %v2756 = vpop.permute.xlu0 %2755
      %2757 = vrot.lane.b32.xlu0 %v2664, 8
      %v2758 = vpop.permute.xlu0 %2757
      %2759 = vrot.lane.b32.xlu0 %v2665, 8
      %v2760 = vpop.permute.xlu0 %2759
      %2761 = vrot.lane.b32.xlu0 %v2666, 8
      %v2762 = vpop.permute.xlu0 %2761
      %2795 = vst.msk [vmem:[#allocation3] sm:$0xff] %vm753, %v2700
      %2796 = vst.msk [vmem:[#allocation3 + $0x8] sm:$0xff] %vm753, %v2702
      %2797 = vst.msk [vmem:[#allocation3 + $0x10] sm:$0xff] %vm753, %v2704
      %2798 = vst.msk [vmem:[#allocation3 + $0x18] sm:$0xff] %vm753, %v2706
      %2799 = vst.msk [vmem:[#allocation3 + $0x20] sm:$0xff] %vm753, %v2708
      %2800 = vst.msk [vmem:[#allocation3 + $0x28] sm:$0xff] %vm753, %v2710
      %2801 = vst.msk [vmem:[#allocation3 + $0x30] sm:$0xff] %vm753, %v2712
      %2802 = vst.msk [vmem:[#allocation3 + $0x38] sm:$0xff] %vm753, %v2714
      %2803 = vst.msk [vmem:[#allocation3 + $0x40] sm:$0xff] %vm753, %v2716
      %2804 = vst.msk [vmem:[#allocation3 + $0x48] sm:$0xff] %vm753, %v2718
      %2805 = vst.msk [vmem:[#allocation3 + $0x50] sm:$0xff] %vm753, %v2720
      %2806 = vst.msk [vmem:[#allocation3 + $0x58] sm:$0xff] %vm753, %v2722
      %2807 = vst.msk [vmem:[#allocation3 + $0x60] sm:$0xff] %vm753, %v2724
      %2808 = vst.msk [vmem:[#allocation3 + $0x68] sm:$0xff] %vm753, %v2726
      %2809 = vst.msk [vmem:[#allocation3 + $0x70] sm:$0xff] %vm753, %v2728
      %2810 = vst.msk [vmem:[#allocation3 + $0x78] sm:$0xff] %vm753, %v2730
      %2811 = vst.msk [vmem:[#allocation3 + $0x80] sm:$0xff] %vm753, %v2732
      %2812 = vst.msk [vmem:[#allocation3 + $0x88] sm:$0xff] %vm753, %v2734
      %2813 = vst.msk [vmem:[#allocation3 + $0x90] sm:$0xff] %vm753, %v2736
      %2814 = vst.msk [vmem:[#allocation3 + $0x98] sm:$0xff] %vm753, %v2738
      %2815 = vst.msk [vmem:[#allocation3 + $0xa0] sm:$0xff] %vm753, %v2740
      %2816 = vst.msk [vmem:[#allocation3 + $0xa8] sm:$0xff] %vm753, %v2742
      %2817 = vst.msk [vmem:[#allocation3 + $0xb0] sm:$0xff] %vm753, %v2744
      %2818 = vst.msk [vmem:[#allocation3 + $0xb8] sm:$0xff] %vm753, %v2746
      %2819 = vst.msk [vmem:[#allocation3 + $0xc0] sm:$0xff] %vm753, %v2748
      %2820 = vst.msk [vmem:[#allocation3 + $0xc8] sm:$0xff] %vm753, %v2750
      %2821 = vst.msk [vmem:[#allocation3 + $0xd0] sm:$0xff] %vm753, %v2752
      %2822 = vst.msk [vmem:[#allocation3 + $0xd8] sm:$0xff] %vm753, %v2754
      %2823 = vst.msk [vmem:[#allocation3 + $0xe0] sm:$0xff] %vm753, %v2756
      %2824 = vst.msk [vmem:[#allocation3 + $0xe8] sm:$0xff] %vm753, %v2758
      %2825 = vst.msk [vmem:[#allocation3 + $0xf0] sm:$0xff] %vm753, %v2760
      %2826 = vst.msk [vmem:[#allocation3 + $0xf8] sm:$0xff] %vm753, %v2762
      %v2827 = vld [vmem:[%s303] sm:$0xff]
      %v2828 = vld [vmem:[%s303 + $0x8] sm:$0xff]
      %v2829 = vld [vmem:[%s303 + $0x18] sm:$0xff]
      %v2830 = vld [vmem:[%s303 + $0x20] sm:$0xff]
      %v2831 = vld [vmem:[%s303 + $0x30] sm:$0xff]
      %v2832 = vld [vmem:[%s303 + $0x38] sm:$0xff]
      %v2833 = vld [vmem:[%s303 + $0x48] sm:$0xff]
      %v2834 = vld [vmem:[%s303 + $0x50] sm:$0xff]
      %v2835 = vld [vmem:[%s303 + $0x60] sm:$0xff]
      %v2836 = vld [vmem:[%s303 + $0x68] sm:$0xff]
      %v2837 = vld [vmem:[%s303 + $0x78] sm:$0xff]
      %v2838 = vld [vmem:[%s303 + $0x80] sm:$0xff]
      %v2839 = vld [vmem:[%s303 + $0x90] sm:$0xff]
      %v2840 = vld [vmem:[%s303 + $0x98] sm:$0xff]
      %v2841 = vld [vmem:[%s303 + $0xa8] sm:$0xff]
      %v2842 = vld [vmem:[%s303 + $0xb0] sm:$0xff]
      %v2843 = vld [vmem:[%s303 + $0xc0] sm:$0xff]
      %v2844 = vld [vmem:[%s303 + $0xc8] sm:$0xff]
      %v2845 = vld [vmem:[%s303 + $0xd8] sm:$0xff]
      %v2846 = vld [vmem:[%s303 + $0xe0] sm:$0xff]
      %v2847 = vld [vmem:[%s303 + $0xf0] sm:$0xff]
      %v2848 = vld [vmem:[%s303 + $0xf8] sm:$0xff]
      %v2849 = vld [vmem:[%s303 + $0x108] sm:$0xff]
      %v2850 = vld [vmem:[%s303 + $0x110] sm:$0xff]
      %v2851 = vld [vmem:[%s303 + $0x120] sm:$0xff]
      %v2852 = vld [vmem:[%s303 + $0x128] sm:$0xff]
      %v2853 = vld [vmem:[%s303 + $0x138] sm:$0xff]
      %v2854 = vld [vmem:[%s303 + $0x140] sm:$0xff]
      %v2855 = vld [vmem:[%s303 + $0x150] sm:$0xff]
      %v2856 = vld [vmem:[%s303 + $0x158] sm:$0xff]
      %v2857 = vld [vmem:[%s303 + $0x168] sm:$0xff]
      %v2858 = vld [vmem:[%s303 + $0x170] sm:$0xff]
      %2891 = vrot.lane.b32.xlu0 %v2827, 12
      %v2892 = vpop.permute.xlu0 %2891
      %2893 = vrot.lane.b32.xlu0 %v2828, 12
      %v2894 = vpop.permute.xlu0 %2893
      %2895 = vrot.lane.b32.xlu0 %v2829, 12
      %v2896 = vpop.permute.xlu0 %2895
      %2897 = vrot.lane.b32.xlu0 %v2830, 12
      %v2898 = vpop.permute.xlu0 %2897
      %2899 = vrot.lane.b32.xlu0 %v2831, 12
      %v2900 = vpop.permute.xlu0 %2899
      %2901 = vrot.lane.b32.xlu0 %v2832, 12
      %v2902 = vpop.permute.xlu0 %2901
      %2903 = vrot.lane.b32.xlu0 %v2833, 12
      %v2904 = vpop.permute.xlu0 %2903
      %2905 = vrot.lane.b32.xlu0 %v2834, 12
      %v2906 = vpop.permute.xlu0 %2905
      %2907 = vrot.lane.b32.xlu0 %v2835, 12
      %v2908 = vpop.permute.xlu0 %2907
      %2909 = vrot.lane.b32.xlu0 %v2836, 12
      %v2910 = vpop.permute.xlu0 %2909
      %2911 = vrot.lane.b32.xlu0 %v2837, 12
      %v2912 = vpop.permute.xlu0 %2911
      %2913 = vrot.lane.b32.xlu0 %v2838, 12
      %v2914 = vpop.permute.xlu0 %2913
      %2915 = vrot.lane.b32.xlu0 %v2839, 12
      %v2916 = vpop.permute.xlu0 %2915
      %2917 = vrot.lane.b32.xlu0 %v2840, 12
      %v2918 = vpop.permute.xlu0 %2917
      %2919 = vrot.lane.b32.xlu0 %v2841, 12
      %v2920 = vpop.permute.xlu0 %2919
      %2921 = vrot.lane.b32.xlu0 %v2842, 12
      %v2922 = vpop.permute.xlu0 %2921
      %2923 = vrot.lane.b32.xlu0 %v2843, 12
      %v2924 = vpop.permute.xlu0 %2923
      %2925 = vrot.lane.b32.xlu0 %v2844, 12
      %v2926 = vpop.permute.xlu0 %2925
      %2927 = vrot.lane.b32.xlu0 %v2845, 12
      %v2928 = vpop.permute.xlu0 %2927
      %2929 = vrot.lane.b32.xlu0 %v2846, 12
      %v2930 = vpop.permute.xlu0 %2929
      %2931 = vrot.lane.b32.xlu0 %v2847, 12
      %v2932 = vpop.permute.xlu0 %2931
      %2933 = vrot.lane.b32.xlu0 %v2848, 12
      %v2934 = vpop.permute.xlu0 %2933
      %2935 = vrot.lane.b32.xlu0 %v2849, 12
      %v2936 = vpop.permute.xlu0 %2935
      %2937 = vrot.lane.b32.xlu0 %v2850, 12
      %v2938 = vpop.permute.xlu0 %2937
      %2939 = vrot.lane.b32.xlu0 %v2851, 12
      %v2940 = vpop.permute.xlu0 %2939
      %2941 = vrot.lane.b32.xlu0 %v2852, 12
      %v2942 = vpop.permute.xlu0 %2941
      %2943 = vrot.lane.b32.xlu0 %v2853, 12
      %v2944 = vpop.permute.xlu0 %2943
      %2945 = vrot.lane.b32.xlu0 %v2854, 12
      %v2946 = vpop.permute.xlu0 %2945
      %2947 = vrot.lane.b32.xlu0 %v2855, 12
      %v2948 = vpop.permute.xlu0 %2947
      %2949 = vrot.lane.b32.xlu0 %v2856, 12
      %v2950 = vpop.permute.xlu0 %2949
      %2951 = vrot.lane.b32.xlu0 %v2857, 12
      %v2952 = vpop.permute.xlu0 %2951
      %2953 = vrot.lane.b32.xlu0 %v2858, 12
      %v2954 = vpop.permute.xlu0 %2953
      %2987 = vst.msk [vmem:[#allocation3] sm:$0xff] %vm946, %v2892
      %2988 = vst.msk [vmem:[#allocation3 + $0x8] sm:$0xff] %vm946, %v2894
      %2989 = vst.msk [vmem:[#allocation3 + $0x10] sm:$0xff] %vm946, %v2896
      %2990 = vst.msk [vmem:[#allocation3 + $0x18] sm:$0xff] %vm946, %v2898
      %2991 = vst.msk [vmem:[#allocation3 + $0x20] sm:$0xff] %vm946, %v2900
      %2992 = vst.msk [vmem:[#allocation3 + $0x28] sm:$0xff] %vm946, %v2902
      %2993 = vst.msk [vmem:[#allocation3 + $0x30] sm:$0xff] %vm946, %v2904
      %2994 = vst.msk [vmem:[#allocation3 + $0x38] sm:$0xff] %vm946, %v2906
      %2995 = vst.msk [vmem:[#allocation3 + $0x40] sm:$0xff] %vm946, %v2908
      %2996 = vst.msk [vmem:[#allocation3 + $0x48] sm:$0xff] %vm946, %v2910
      %2997 = vst.msk [vmem:[#allocation3 + $0x50] sm:$0xff] %vm946, %v2912
      %2998 = vst.msk [vmem:[#allocation3 + $0x58] sm:$0xff] %vm946, %v2914
      %2999 = vst.msk [vmem:[#allocation3 + $0x60] sm:$0xff] %vm946, %v2916
      %3000 = vst.msk [vmem:[#allocation3 + $0x68] sm:$0xff] %vm946, %v2918
      %3001 = vst.msk [vmem:[#allocation3 + $0x70] sm:$0xff] %vm946, %v2920
      %3002 = vst.msk [vmem:[#allocation3 + $0x78] sm:$0xff] %vm946, %v2922
      %3003 = vst.msk [vmem:[#allocation3 + $0x80] sm:$0xff] %vm946, %v2924
      %3004 = vst.msk [vmem:[#allocation3 + $0x88] sm:$0xff] %vm946, %v2926
      %3005 = vst.msk [vmem:[#allocation3 + $0x90] sm:$0xff] %vm946, %v2928
      %3006 = vst.msk [vmem:[#allocation3 + $0x98] sm:$0xff] %vm946, %v2930
      %3007 = vst.msk [vmem:[#allocation3 + $0xa0] sm:$0xff] %vm946, %v2932
      %3008 = vst.msk [vmem:[#allocation3 + $0xa8] sm:$0xff] %vm946, %v2934
      %3009 = vst.msk [vmem:[#allocation3 + $0xb0] sm:$0xff] %vm946, %v2936
      %3010 = vst.msk [vmem:[#allocation3 + $0xb8] sm:$0xff] %vm946, %v2938
      %3011 = vst.msk [vmem:[#allocation3 + $0xc0] sm:$0xff] %vm946, %v2940
      %3012 = vst.msk [vmem:[#allocation3 + $0xc8] sm:$0xff] %vm946, %v2942
      %3013 = vst.msk [vmem:[#allocation3 + $0xd0] sm:$0xff] %vm946, %v2944
      %3014 = vst.msk [vmem:[#allocation3 + $0xd8] sm:$0xff] %vm946, %v2946
      %3015 = vst.msk [vmem:[#allocation3 + $0xe0] sm:$0xff] %vm946, %v2948
      %3016 = vst.msk [vmem:[#allocation3 + $0xe8] sm:$0xff] %vm946, %v2950
      %3017 = vst.msk [vmem:[#allocation3 + $0xf0] sm:$0xff] %vm946, %v2952
      %3018 = vst.msk [vmem:[#allocation3 + $0xf8] sm:$0xff] %vm946, %v2954
      %v3019 = vld [vmem:[%s303 + $0x1] sm:$0xff]
      %v3020 = vld [vmem:[%s303 + $0x9] sm:$0xff]
      %v3021 = vld [vmem:[%s303 + $0x19] sm:$0xff]
      %v3022 = vld [vmem:[%s303 + $0x21] sm:$0xff]
      %v3023 = vld [vmem:[%s303 + $0x31] sm:$0xff]
      %v3024 = vld [vmem:[%s303 + $0x39] sm:$0xff]
      %v3025 = vld [vmem:[%s303 + $0x49] sm:$0xff]
      %v3026 = vld [vmem:[%s303 + $0x51] sm:$0xff]
      %v3027 = vld [vmem:[%s303 + $0x61] sm:$0xff]
      %v3028 = vld [vmem:[%s303 + $0x69] sm:$0xff]
      %v3029 = vld [vmem:[%s303 + $0x79] sm:$0xff]
      %v3030 = vld [vmem:[%s303 + $0x81] sm:$0xff]
      %v3031 = vld [vmem:[%s303 + $0x91] sm:$0xff]
      %v3032 = vld [vmem:[%s303 + $0x99] sm:$0xff]
      %v3033 = vld [vmem:[%s303 + $0xa9] sm:$0xff]
      %v3034 = vld [vmem:[%s303 + $0xb1] sm:$0xff]
      %v3035 = vld [vmem:[%s303 + $0xc1] sm:$0xff]
      %v3036 = vld [vmem:[%s303 + $0xc9] sm:$0xff]
      %v3037 = vld [vmem:[%s303 + $0xd9] sm:$0xff]
      %v3038 = vld [vmem:[%s303 + $0xe1] sm:$0xff]
      %v3039 = vld [vmem:[%s303 + $0xf1] sm:$0xff]
      %v3040 = vld [vmem:[%s303 + $0xf9] sm:$0xff]
      %v3041 = vld [vmem:[%s303 + $0x109] sm:$0xff]
      %v3042 = vld [vmem:[%s303 + $0x111] sm:$0xff]
      %v3043 = vld [vmem:[%s303 + $0x121] sm:$0xff]
      %v3044 = vld [vmem:[%s303 + $0x129] sm:$0xff]
      %v3045 = vld [vmem:[%s303 + $0x139] sm:$0xff]
      %v3046 = vld [vmem:[%s303 + $0x141] sm:$0xff]
      %v3047 = vld [vmem:[%s303 + $0x151] sm:$0xff]
      %v3048 = vld [vmem:[%s303 + $0x159] sm:$0xff]
      %v3049 = vld [vmem:[%s303 + $0x169] sm:$0xff]
      %v3050 = vld [vmem:[%s303 + $0x171] sm:$0xff]
      %3083 = vrot.lane.b32.xlu0 %v3019, 16
      %v3084 = vpop.permute.xlu0 %3083
      %3085 = vrot.lane.b32.xlu0 %v3020, 16
      %v3086 = vpop.permute.xlu0 %3085
      %3087 = vrot.lane.b32.xlu0 %v3021, 16
      %v3088 = vpop.permute.xlu0 %3087
      %3089 = vrot.lane.b32.xlu0 %v3022, 16
      %v3090 = vpop.permute.xlu0 %3089
      %3091 = vrot.lane.b32.xlu0 %v3023, 16
      %v3092 = vpop.permute.xlu0 %3091
      %3093 = vrot.lane.b32.xlu0 %v3024, 16
      %v3094 = vpop.permute.xlu0 %3093
      %3095 = vrot.lane.b32.xlu0 %v3025, 16
      %v3096 = vpop.permute.xlu0 %3095
      %3097 = vrot.lane.b32.xlu0 %v3026, 16
      %v3098 = vpop.permute.xlu0 %3097
      %3099 = vrot.lane.b32.xlu0 %v3027, 16
      %v3100 = vpop.permute.xlu0 %3099
      %3101 = vrot.lane.b32.xlu0 %v3028, 16
      %v3102 = vpop.permute.xlu0 %3101
      %3103 = vrot.lane.b32.xlu0 %v3029, 16
      %v3104 = vpop.permute.xlu0 %3103
      %3105 = vrot.lane.b32.xlu0 %v3030, 16
      %v3106 = vpop.permute.xlu0 %3105
      %3107 = vrot.lane.b32.xlu0 %v3031, 16
      %v3108 = vpop.permute.xlu0 %3107
      %3109 = vrot.lane.b32.xlu0 %v3032, 16
      %v3110 = vpop.permute.xlu0 %3109
      %3111 = vrot.lane.b32.xlu0 %v3033, 16
      %v3112 = vpop.permute.xlu0 %3111
      %3113 = vrot.lane.b32.xlu0 %v3034, 16
      %v3114 = vpop.permute.xlu0 %3113
      %3115 = vrot.lane.b32.xlu0 %v3035, 16
      %v3116 = vpop.permute.xlu0 %3115
      %3117 = vrot.lane.b32.xlu0 %v3036, 16
      %v3118 = vpop.permute.xlu0 %3117
      %3119 = vrot.lane.b32.xlu0 %v3037, 16
      %v3120 = vpop.permute.xlu0 %3119
      %3121 = vrot.lane.b32.xlu0 %v3038, 16
      %v3122 = vpop.permute.xlu0 %3121
      %3123 = vrot.lane.b32.xlu0 %v3039, 16
      %v3124 = vpop.permute.xlu0 %3123
      %3125 = vrot.lane.b32.xlu0 %v3040, 16
      %v3126 = vpop.permute.xlu0 %3125
      %3127 = vrot.lane.b32.xlu0 %v3041, 16
      %v3128 = vpop.permute.xlu0 %3127
      %3129 = vrot.lane.b32.xlu0 %v3042, 16
      %v3130 = vpop.permute.xlu0 %3129
      %3131 = vrot.lane.b32.xlu0 %v3043, 16
      %v3132 = vpop.permute.xlu0 %3131
      %3133 = vrot.lane.b32.xlu0 %v3044, 16
      %v3134 = vpop.permute.xlu0 %3133
      %3135 = vrot.lane.b32.xlu0 %v3045, 16
      %v3136 = vpop.permute.xlu0 %3135
      %3137 = vrot.lane.b32.xlu0 %v3046, 16
      %v3138 = vpop.permute.xlu0 %3137
      %3139 = vrot.lane.b32.xlu0 %v3047, 16
      %v3140 = vpop.permute.xlu0 %3139
      %3141 = vrot.lane.b32.xlu0 %v3048, 16
      %v3142 = vpop.permute.xlu0 %3141
      %3143 = vrot.lane.b32.xlu0 %v3049, 16
      %v3144 = vpop.permute.xlu0 %3143
      %3145 = vrot.lane.b32.xlu0 %v3050, 16
      %v3146 = vpop.permute.xlu0 %3145
      %3179 = vst.msk [vmem:[#allocation3] sm:$0xff] %vm1139, %v3084
      %3180 = vst.msk [vmem:[#allocation3 + $0x8] sm:$0xff] %vm1139, %v3086
      %3181 = vst.msk [vmem:[#allocation3 + $0x10] sm:$0xff] %vm1139, %v3088
      %3182 = vst.msk [vmem:[#allocation3 + $0x18] sm:$0xff] %vm1139, %v3090
      %3183 = vst.msk [vmem:[#allocation3 + $0x20] sm:$0xff] %vm1139, %v3092
      %3184 = vst.msk [vmem:[#allocation3 + $0x28] sm:$0xff] %vm1139, %v3094
      %3185 = vst.msk [vmem:[#allocation3 + $0x30] sm:$0xff] %vm1139, %v3096
      %3186 = vst.msk [vmem:[#allocation3 + $0x38] sm:$0xff] %vm1139, %v3098
      %3187 = vst.msk [vmem:[#allocation3 + $0x40] sm:$0xff] %vm1139, %v3100
      %3188 = vst.msk [vmem:[#allocation3 + $0x48] sm:$0xff] %vm1139, %v3102
      %3189 = vst.msk [vmem:[#allocation3 + $0x50] sm:$0xff] %vm1139, %v3104
      %3190 = vst.msk [vmem:[#allocation3 + $0x58] sm:$0xff] %vm1139, %v3106
      %3191 = vst.msk [vmem:[#allocation3 + $0x60] sm:$0xff] %vm1139, %v3108
      %3192 = vst.msk [vmem:[#allocation3 + $0x68] sm:$0xff] %vm1139, %v3110
      %3193 = vst.msk [vmem:[#allocation3 + $0x70] sm:$0xff] %vm1139, %v3112
      %3194 = vst.msk [vmem:[#allocation3 + $0x78] sm:$0xff] %vm1139, %v3114
      %3195 = vst.msk [vmem:[#allocation3 + $0x80] sm:$0xff] %vm1139, %v3116
      %3196 = vst.msk [vmem:[#allocation3 + $0x88] sm:$0xff] %vm1139, %v3118
      %3197 = vst.msk [vmem:[#allocation3 + $0x90] sm:$0xff] %vm1139, %v3120
      %3198 = vst.msk [vmem:[#allocation3 + $0x98] sm:$0xff] %vm1139, %v3122
      %3199 = vst.msk [vmem:[#allocation3 + $0xa0] sm:$0xff] %vm1139, %v3124
      %3200 = vst.msk [vmem:[#allocation3 + $0xa8] sm:$0xff] %vm1139, %v3126
      %3201 = vst.msk [vmem:[#allocation3 + $0xb0] sm:$0xff] %vm1139, %v3128
      %3202 = vst.msk [vmem:[#allocation3 + $0xb8] sm:$0xff] %vm1139, %v3130
      %3203 = vst.msk [vmem:[#allocation3 + $0xc0] sm:$0xff] %vm1139, %v3132
      %3204 = vst.msk [vmem:[#allocation3 + $0xc8] sm:$0xff] %vm1139, %v3134
      %3205 = vst.msk [vmem:[#allocation3 + $0xd0] sm:$0xff] %vm1139, %v3136
      %3206 = vst.msk [vmem:[#allocation3 + $0xd8] sm:$0xff] %vm1139, %v3138
      %3207 = vst.msk [vmem:[#allocation3 + $0xe0] sm:$0xff] %vm1139, %v3140
      %3208 = vst.msk [vmem:[#allocation3 + $0xe8] sm:$0xff] %vm1139, %v3142
      %3209 = vst.msk [vmem:[#allocation3 + $0xf0] sm:$0xff] %vm1139, %v3144
      %3210 = vst.msk [vmem:[#allocation3 + $0xf8] sm:$0xff] %vm1139, %v3146
      %v3211 = vld [vmem:[%s303 + $0x2] sm:$0xff]
      %v3212 = vld [vmem:[%s303 + $0xa] sm:$0xff]
      %v3213 = vld [vmem:[%s303 + $0x1a] sm:$0xff]
      %v3214 = vld [vmem:[%s303 + $0x22] sm:$0xff]
      %v3215 = vld [vmem:[%s303 + $0x32] sm:$0xff]
      %v3216 = vld [vmem:[%s303 + $0x3a] sm:$0xff]
      %v3217 = vld [vmem:[%s303 + $0x4a] sm:$0xff]
      %v3218 = vld [vmem:[%s303 + $0x52] sm:$0xff]
      %v3219 = vld [vmem:[%s303 + $0x62] sm:$0xff]
      %v3220 = vld [vmem:[%s303 + $0x6a] sm:$0xff]
      %v3221 = vld [vmem:[%s303 + $0x7a] sm:$0xff]
      %v3222 = vld [vmem:[%s303 + $0x82] sm:$0xff]
      %v3223 = vld [vmem:[%s303 + $0x92] sm:$0xff]
      %v3224 = vld [vmem:[%s303 + $0x9a] sm:$0xff]
      %v3225 = vld [vmem:[%s303 + $0xaa] sm:$0xff]
      %v3226 = vld [vmem:[%s303 + $0xb2] sm:$0xff]
      %v3227 = vld [vmem:[%s303 + $0xc2] sm:$0xff]
      %v3228 = vld [vmem:[%s303 + $0xca] sm:$0xff]
      %v3229 = vld [vmem:[%s303 + $0xda] sm:$0xff]
      %v3230 = vld [vmem:[%s303 + $0xe2] sm:$0xff]
      %v3231 = vld [vmem:[%s303 + $0xf2] sm:$0xff]
      %v3232 = vld [vmem:[%s303 + $0xfa] sm:$0xff]
      %v3233 = vld [vmem:[%s303 + $0x10a] sm:$0xff]
      %v3234 = vld [vmem:[%s303 + $0x112] sm:$0xff]
      %v3235 = vld [vmem:[%s303 + $0x122] sm:$0xff]
      %v3236 = vld [vmem:[%s303 + $0x12a] sm:$0xff]
      %v3237 = vld [vmem:[%s303 + $0x13a] sm:$0xff]
      %v3238 = vld [vmem:[%s303 + $0x142] sm:$0xff]
      %v3239 = vld [vmem:[%s303 + $0x152] sm:$0xff]
      %v3240 = vld [vmem:[%s303 + $0x15a] sm:$0xff]
      %v3241 = vld [vmem:[%s303 + $0x16a] sm:$0xff]
      %v3242 = vld [vmem:[%s303 + $0x172] sm:$0xff]
      %3275 = vrot.lane.b32.xlu0 %v3211, 20
      %v3276 = vpop.permute.xlu0 %3275
      %3277 = vrot.lane.b32.xlu0 %v3212, 20
      %v3278 = vpop.permute.xlu0 %3277
      %3279 = vrot.lane.b32.xlu0 %v3213, 20
      %v3280 = vpop.permute.xlu0 %3279
      %3281 = vrot.lane.b32.xlu0 %v3214, 20
      %v3282 = vpop.permute.xlu0 %3281
      %3283 = vrot.lane.b32.xlu0 %v3215, 20
      %v3284 = vpop.permute.xlu0 %3283
      %3285 = vrot.lane.b32.xlu0 %v3216, 20
      %v3286 = vpop.permute.xlu0 %3285
      %3287 = vrot.lane.b32.xlu0 %v3217, 20
      %v3288 = vpop.permute.xlu0 %3287
      %3289 = vrot.lane.b32.xlu0 %v3218, 20
      %v3290 = vpop.permute.xlu0 %3289
      %3291 = vrot.lane.b32.xlu0 %v3219, 20
      %v3292 = vpop.permute.xlu0 %3291
      %3293 = vrot.lane.b32.xlu0 %v3220, 20
      %v3294 = vpop.permute.xlu0 %3293
      %3295 = vrot.lane.b32.xlu0 %v3221, 20
      %v3296 = vpop.permute.xlu0 %3295
      %3297 = vrot.lane.b32.xlu0 %v3222, 20
      %v3298 = vpop.permute.xlu0 %3297
      %3299 = vrot.lane.b32.xlu0 %v3223, 20
      %v3300 = vpop.permute.xlu0 %3299
      %3301 = vrot.lane.b32.xlu0 %v3224, 20
      %v3302 = vpop.permute.xlu0 %3301
      %3303 = vrot.lane.b32.xlu0 %v3225, 20
      %v3304 = vpop.permute.xlu0 %3303
      %3305 = vrot.lane.b32.xlu0 %v3226, 20
      %v3306 = vpop.permute.xlu0 %3305
      %3307 = vrot.lane.b32.xlu0 %v3227, 20
      %v3308 = vpop.permute.xlu0 %3307
      %3309 = vrot.lane.b32.xlu0 %v3228, 20
      %v3310 = vpop.permute.xlu0 %3309
      %3311 = vrot.lane.b32.xlu0 %v3229, 20
      %v3312 = vpop.permute.xlu0 %3311
      %3313 = vrot.lane.b32.xlu0 %v3230, 20
      %v3314 = vpop.permute.xlu0 %3313
      %3315 = vrot.lane.b32.xlu0 %v3231, 20
      %v3316 = vpop.permute.xlu0 %3315
      %3317 = vrot.lane.b32.xlu0 %v3232, 20
      %v3318 = vpop.permute.xlu0 %3317
      %3319 = vrot.lane.b32.xlu0 %v3233, 20
      %v3320 = vpop.permute.xlu0 %3319
      %3321 = vrot.lane.b32.xlu0 %v3234, 20
      %v3322 = vpop.permute.xlu0 %3321
      %3323 = vrot.lane.b32.xlu0 %v3235, 20
      %v3324 = vpop.permute.xlu0 %3323
      %3325 = vrot.lane.b32.xlu0 %v3236, 20
      %v3326 = vpop.permute.xlu0 %3325
      %3327 = vrot.lane.b32.xlu0 %v3237, 20
      %v3328 = vpop.permute.xlu0 %3327
      %3329 = vrot.lane.b32.xlu0 %v3238, 20
      %v3330 = vpop.permute.xlu0 %3329
      %3331 = vrot.lane.b32.xlu0 %v3239, 20
      %v3332 = vpop.permute.xlu0 %3331
      %3333 = vrot.lane.b32.xlu0 %v3240, 20
      %v3334 = vpop.permute.xlu0 %3333
      %3335 = vrot.lane.b32.xlu0 %v3241, 20
      %v3336 = vpop.permute.xlu0 %3335
      %3337 = vrot.lane.b32.xlu0 %v3242, 20
      %v3338 = vpop.permute.xlu0 %3337
      %3371 = vst.msk [vmem:[#allocation3] sm:$0xff] %vm1332, %v3276
      %3372 = vst.msk [vmem:[#allocation3 + $0x8] sm:$0xff] %vm1332, %v3278
      %3373 = vst.msk [vmem:[#allocation3 + $0x10] sm:$0xff] %vm1332, %v3280
      %3374 = vst.msk [vmem:[#allocation3 + $0x18] sm:$0xff] %vm1332, %v3282
      %3375 = vst.msk [vmem:[#allocation3 + $0x20] sm:$0xff] %vm1332, %v3284
      %3376 = vst.msk [vmem:[#allocation3 + $0x28] sm:$0xff] %vm1332, %v3286
      %3377 = vst.msk [vmem:[#allocation3 + $0x30] sm:$0xff] %vm1332, %v3288
      %3378 = vst.msk [vmem:[#allocation3 + $0x38] sm:$0xff] %vm1332, %v3290
      %3379 = vst.msk [vmem:[#allocation3 + $0x40] sm:$0xff] %vm1332, %v3292
      %3380 = vst.msk [vmem:[#allocation3 + $0x48] sm:$0xff] %vm1332, %v3294
      %3381 = vst.msk [vmem:[#allocation3 + $0x50] sm:$0xff] %vm1332, %v3296
      %3382 = vst.msk [vmem:[#allocation3 + $0x58] sm:$0xff] %vm1332, %v3298
      %3383 = vst.msk [vmem:[#allocation3 + $0x60] sm:$0xff] %vm1332, %v3300
      %3384 = vst.msk [vmem:[#allocation3 + $0x68] sm:$0xff] %vm1332, %v3302
      %3385 = vst.msk [vmem:[#allocation3 + $0x70] sm:$0xff] %vm1332, %v3304
      %3386 = vst.msk [vmem:[#allocation3 + $0x78] sm:$0xff] %vm1332, %v3306
      %3387 = vst.msk [vmem:[#allocation3 + $0x80] sm:$0xff] %vm1332, %v3308
      %3388 = vst.msk [vmem:[#allocation3 + $0x88] sm:$0xff] %vm1332, %v3310
      %3389 = vst.msk [vmem:[#allocation3 + $0x90] sm:$0xff] %vm1332, %v3312
      %3390 = vst.msk [vmem:[#allocation3 + $0x98] sm:$0xff] %vm1332, %v3314
      %3391 = vst.msk [vmem:[#allocation3 + $0xa0] sm:$0xff] %vm1332, %v3316
      %3392 = vst.msk [vmem:[#allocation3 + $0xa8] sm:$0xff] %vm1332, %v3318
      %3393 = vst.msk [vmem:[#allocation3 + $0xb0] sm:$0xff] %vm1332, %v3320
      %3394 = vst.msk [vmem:[#allocation3 + $0xb8] sm:$0xff] %vm1332, %v3322
      %3395 = vst.msk [vmem:[#allocation3 + $0xc0] sm:$0xff] %vm1332, %v3324
      %3396 = vst.msk [vmem:[#allocation3 + $0xc8] sm:$0xff] %vm1332, %v3326
      %3397 = vst.msk [vmem:[#allocation3 + $0xd0] sm:$0xff] %vm1332, %v3328
      %3398 = vst.msk [vmem:[#allocation3 + $0xd8] sm:$0xff] %vm1332, %v3330
      %3399 = vst.msk [vmem:[#allocation3 + $0xe0] sm:$0xff] %vm1332, %v3332
      %3400 = vst.msk [vmem:[#allocation3 + $0xe8] sm:$0xff] %vm1332, %v3334
      %3401 = vst.msk [vmem:[#allocation3 + $0xf0] sm:$0xff] %vm1332, %v3336
      %3402 = vst.msk [vmem:[#allocation3 + $0xf8] sm:$0xff] %vm1332, %v3338
      %v3403 = vld [vmem:[%s1365] sm:$0xff]
      %v3404 = vld [vmem:[%s1365 + $0x8] sm:$0xff]
      %v3405 = vld [vmem:[%s1365 + $0x18] sm:$0xff]
      %v3406 = vld [vmem:[%s1365 + $0x20] sm:$0xff]
      %v3407 = vld [vmem:[%s1365 + $0x30] sm:$0xff]
      %v3408 = vld [vmem:[%s1365 + $0x38] sm:$0xff]
      %v3409 = vld [vmem:[%s1365 + $0x48] sm:$0xff]
      %v3410 = vld [vmem:[%s1365 + $0x50] sm:$0xff]
      %v3411 = vld [vmem:[%s1365 + $0x60] sm:$0xff]
      %v3412 = vld [vmem:[%s1365 + $0x68] sm:$0xff]
      %v3413 = vld [vmem:[%s1365 + $0x78] sm:$0xff]
      %v3414 = vld [vmem:[%s1365 + $0x80] sm:$0xff]
      %v3415 = vld [vmem:[%s1365 + $0x90] sm:$0xff]
      %v3416 = vld [vmem:[%s1365 + $0x98] sm:$0xff]
      %v3417 = vld [vmem:[%s1365 + $0xa8] sm:$0xff]
      %v3418 = vld [vmem:[%s1365 + $0xb0] sm:$0xff]
      %v3419 = vld [vmem:[%s1365 + $0xc0] sm:$0xff]
      %v3420 = vld [vmem:[%s1365 + $0xc8] sm:$0xff]
      %v3421 = vld [vmem:[%s1365 + $0xd8] sm:$0xff]
      %v3422 = vld [vmem:[%s1365 + $0xe0] sm:$0xff]
      %v3423 = vld [vmem:[%s1365 + $0xf0] sm:$0xff]
      %v3424 = vld [vmem:[%s1365 + $0xf8] sm:$0xff]
      %v3425 = vld [vmem:[%s1365 + $0x108] sm:$0xff]
      %v3426 = vld [vmem:[%s1365 + $0x110] sm:$0xff]
      %v3427 = vld [vmem:[%s1365 + $0x120] sm:$0xff]
      %v3428 = vld [vmem:[%s1365 + $0x128] sm:$0xff]
      %v3429 = vld [vmem:[%s1365 + $0x138] sm:$0xff]
      %v3430 = vld [vmem:[%s1365 + $0x140] sm:$0xff]
      %v3431 = vld [vmem:[%s1365 + $0x150] sm:$0xff]
      %v3432 = vld [vmem:[%s1365 + $0x158] sm:$0xff]
      %v3433 = vld [vmem:[%s1365 + $0x168] sm:$0xff]
      %v3434 = vld [vmem:[%s1365 + $0x170] sm:$0xff]
      %3467 = vrot.lane.b32.xlu0 %v3403, 24
      %v3468 = vpop.permute.xlu0 %3467
      %3469 = vrot.lane.b32.xlu0 %v3404, 24
      %v3470 = vpop.permute.xlu0 %3469
      %3471 = vrot.lane.b32.xlu0 %v3405, 24
      %v3472 = vpop.permute.xlu0 %3471
      %3473 = vrot.lane.b32.xlu0 %v3406, 24
      %v3474 = vpop.permute.xlu0 %3473
      %3475 = vrot.lane.b32.xlu0 %v3407, 24
      %v3476 = vpop.permute.xlu0 %3475
      %3477 = vrot.lane.b32.xlu0 %v3408, 24
      %v3478 = vpop.permute.xlu0 %3477
      %3479 = vrot.lane.b32.xlu0 %v3409, 24
      %v3480 = vpop.permute.xlu0 %3479
      %3481 = vrot.lane.b32.xlu0 %v3410, 24
      %v3482 = vpop.permute.xlu0 %3481
      %3483 = vrot.lane.b32.xlu0 %v3411, 24
      %v3484 = vpop.permute.xlu0 %3483
      %3485 = vrot.lane.b32.xlu0 %v3412, 24
      %v3486 = vpop.permute.xlu0 %3485
      %3487 = vrot.lane.b32.xlu0 %v3413, 24
      %v3488 = vpop.permute.xlu0 %3487
      %3489 = vrot.lane.b32.xlu0 %v3414, 24
      %v3490 = vpop.permute.xlu0 %3489
      %3491 = vrot.lane.b32.xlu0 %v3415, 24
      %v3492 = vpop.permute.xlu0 %3491
      %3493 = vrot.lane.b32.xlu0 %v3416, 24
      %v3494 = vpop.permute.xlu0 %3493
      %3495 = vrot.lane.b32.xlu0 %v3417, 24
      %v3496 = vpop.permute.xlu0 %3495
      %3497 = vrot.lane.b32.xlu0 %v3418, 24
      %v3498 = vpop.permute.xlu0 %3497
      %3499 = vrot.lane.b32.xlu0 %v3419, 24
      %v3500 = vpop.permute.xlu0 %3499
      %3501 = vrot.lane.b32.xlu0 %v3420, 24
      %v3502 = vpop.permute.xlu0 %3501
      %3503 = vrot.lane.b32.xlu0 %v3421, 24
      %v3504 = vpop.permute.xlu0 %3503
      %3505 = vrot.lane.b32.xlu0 %v3422, 24
      %v3506 = vpop.permute.xlu0 %3505
      %3507 = vrot.lane.b32.xlu0 %v3423, 24
      %v3508 = vpop.permute.xlu0 %3507
      %3509 = vrot.lane.b32.xlu0 %v3424, 24
      %v3510 = vpop.permute.xlu0 %3509
      %3511 = vrot.lane.b32.xlu0 %v3425, 24
      %v3512 = vpop.permute.xlu0 %3511
      %3513 = vrot.lane.b32.xlu0 %v3426, 24
      %v3514 = vpop.permute.xlu0 %3513
      %3515 = vrot.lane.b32.xlu0 %v3427, 24
      %v3516 = vpop.permute.xlu0 %3515
      %3517 = vrot.lane.b32.xlu0 %v3428, 24
      %v3518 = vpop.permute.xlu0 %3517
      %3519 = vrot.lane.b32.xlu0 %v3429, 24
      %v3520 = vpop.permute.xlu0 %3519
      %3521 = vrot.lane.b32.xlu0 %v3430, 24
      %v3522 = vpop.permute.xlu0 %3521
      %3523 = vrot.lane.b32.xlu0 %v3431, 24
      %v3524 = vpop.permute.xlu0 %3523
      %3525 = vrot.lane.b32.xlu0 %v3432, 24
      %v3526 = vpop.permute.xlu0 %3525
      %3527 = vrot.lane.b32.xlu0 %v3433, 24
      %v3528 = vpop.permute.xlu0 %3527
      %3529 = vrot.lane.b32.xlu0 %v3434, 24
      %v3530 = vpop.permute.xlu0 %3529
      %3563 = vst.msk [vmem:[#allocation3] sm:$0xff] %vm1526, %v3468
      %3564 = vst.msk [vmem:[#allocation3 + $0x8] sm:$0xff] %vm1526, %v3470
      %3565 = vst.msk [vmem:[#allocation3 + $0x10] sm:$0xff] %vm1526, %v3472
      %3566 = vst.msk [vmem:[#allocation3 + $0x18] sm:$0xff] %vm1526, %v3474
      %3567 = vst.msk [vmem:[#allocation3 + $0x20] sm:$0xff] %vm1526, %v3476
      %3568 = vst.msk [vmem:[#allocation3 + $0x28] sm:$0xff] %vm1526, %v3478
      %3569 = vst.msk [vmem:[#allocation3 + $0x30] sm:$0xff] %vm1526, %v3480
      %3570 = vst.msk [vmem:[#allocation3 + $0x38] sm:$0xff] %vm1526, %v3482
      %3571 = vst.msk [vmem:[#allocation3 + $0x40] sm:$0xff] %vm1526, %v3484
      %3572 = vst.msk [vmem:[#allocation3 + $0x48] sm:$0xff] %vm1526, %v3486
      %3573 = vst.msk [vmem:[#allocation3 + $0x50] sm:$0xff] %vm1526, %v3488
      %3574 = vst.msk [vmem:[#allocation3 + $0x58] sm:$0xff] %vm1526, %v3490
      %3575 = vst.msk [vmem:[#allocation3 + $0x60] sm:$0xff] %vm1526, %v3492
      %3576 = vst.msk [vmem:[#allocation3 + $0x68] sm:$0xff] %vm1526, %v3494
      %3577 = vst.msk [vmem:[#allocation3 + $0x70] sm:$0xff] %vm1526, %v3496
      %3578 = vst.msk [vmem:[#allocation3 + $0x78] sm:$0xff] %vm1526, %v3498
      %3579 = vst.msk [vmem:[#allocation3 + $0x80] sm:$0xff] %vm1526, %v3500
      %3580 = vst.msk [vmem:[#allocation3 + $0x88] sm:$0xff] %vm1526, %v3502
      %3581 = vst.msk [vmem:[#allocation3 + $0x90] sm:$0xff] %vm1526, %v3504
      %3582 = vst.msk [vmem:[#allocation3 + $0x98] sm:$0xff] %vm1526, %v3506
      %3583 = vst.msk [vmem:[#allocation3 + $0xa0] sm:$0xff] %vm1526, %v3508
      %3584 = vst.msk [vmem:[#allocation3 + $0xa8] sm:$0xff] %vm1526, %v3510
      %3585 = vst.msk [vmem:[#allocation3 + $0xb0] sm:$0xff] %vm1526, %v3512
      %3586 = vst.msk [vmem:[#allocation3 + $0xb8] sm:$0xff] %vm1526, %v3514
      %3587 = vst.msk [vmem:[#allocation3 + $0xc0] sm:$0xff] %vm1526, %v3516
      %3588 = vst.msk [vmem:[#allocation3 + $0xc8] sm:$0xff] %vm1526, %v3518
      %3589 = vst.msk [vmem:[#allocation3 + $0xd0] sm:$0xff] %vm1526, %v3520
      %3590 = vst.msk [vmem:[#allocation3 + $0xd8] sm:$0xff] %vm1526, %v3522
      %3591 = vst.msk [vmem:[#allocation3 + $0xe0] sm:$0xff] %vm1526, %v3524
      %3592 = vst.msk [vmem:[#allocation3 + $0xe8] sm:$0xff] %vm1526, %v3526
      %3593 = vst.msk [vmem:[#allocation3 + $0xf0] sm:$0xff] %vm1526, %v3528
      %3594 = vst.msk [vmem:[#allocation3 + $0xf8] sm:$0xff] %vm1526, %v3530
      %v3595 = vld [vmem:[%s1365 + $0x1] sm:$0xff]
      %v3596 = vld [vmem:[%s1365 + $0x9] sm:$0xff]
      %v3597 = vld [vmem:[%s1365 + $0x19] sm:$0xff]
      %v3598 = vld [vmem:[%s1365 + $0x21] sm:$0xff]
      %v3599 = vld [vmem:[%s1365 + $0x31] sm:$0xff]
      %v3600 = vld [vmem:[%s1365 + $0x39] sm:$0xff]
      %v3601 = vld [vmem:[%s1365 + $0x49] sm:$0xff]
      %v3602 = vld [vmem:[%s1365 + $0x51] sm:$0xff]
      %v3603 = vld [vmem:[%s1365 + $0x61] sm:$0xff]
      %v3604 = vld [vmem:[%s1365 + $0x69] sm:$0xff]
      %v3605 = vld [vmem:[%s1365 + $0x79] sm:$0xff]
      %v3606 = vld [vmem:[%s1365 + $0x81] sm:$0xff]
      %v3607 = vld [vmem:[%s1365 + $0x91] sm:$0xff]
      %v3608 = vld [vmem:[%s1365 + $0x99] sm:$0xff]
      %v3609 = vld [vmem:[%s1365 + $0xa9] sm:$0xff]
      %v3610 = vld [vmem:[%s1365 + $0xb1] sm:$0xff]
      %v3611 = vld [vmem:[%s1365 + $0xc1] sm:$0xff]
      %v3612 = vld [vmem:[%s1365 + $0xc9] sm:$0xff]
      %v3613 = vld [vmem:[%s1365 + $0xd9] sm:$0xff]
      %v3614 = vld [vmem:[%s1365 + $0xe1] sm:$0xff]
      %v3615 = vld [vmem:[%s1365 + $0xf1] sm:$0xff]
      %v3616 = vld [vmem:[%s1365 + $0xf9] sm:$0xff]
      %v3617 = vld [vmem:[%s1365 + $0x109] sm:$0xff]
      %v3618 = vld [vmem:[%s1365 + $0x111] sm:$0xff]
      %v3619 = vld [vmem:[%s1365 + $0x121] sm:$0xff]
      %v3620 = vld [vmem:[%s1365 + $0x129] sm:$0xff]
      %v3621 = vld [vmem:[%s1365 + $0x139] sm:$0xff]
      %v3622 = vld [vmem:[%s1365 + $0x141] sm:$0xff]
      %v3623 = vld [vmem:[%s1365 + $0x151] sm:$0xff]
      %v3624 = vld [vmem:[%s1365 + $0x159] sm:$0xff]
      %v3625 = vld [vmem:[%s1365 + $0x169] sm:$0xff]
      %v3626 = vld [vmem:[%s1365 + $0x171] sm:$0xff]
      %3659 = vrot.lane.b32.xlu0 %v3595, 28
      %v3660 = vpop.permute.xlu0 %3659
      %3661 = vrot.lane.b32.xlu0 %v3596, 28
      %v3662 = vpop.permute.xlu0 %3661
      %3663 = vrot.lane.b32.xlu0 %v3597, 28
      %v3664 = vpop.permute.xlu0 %3663
      %3665 = vrot.lane.b32.xlu0 %v3598, 28
      %v3666 = vpop.permute.xlu0 %3665
      %3667 = vrot.lane.b32.xlu0 %v3599, 28
      %v3668 = vpop.permute.xlu0 %3667
      %3669 = vrot.lane.b32.xlu0 %v3600, 28
      %v3670 = vpop.permute.xlu0 %3669
      %3671 = vrot.lane.b32.xlu0 %v3601, 28
      %v3672 = vpop.permute.xlu0 %3671
      %3673 = vrot.lane.b32.xlu0 %v3602, 28
      %v3674 = vpop.permute.xlu0 %3673
      %3675 = vrot.lane.b32.xlu0 %v3603, 28
      %v3676 = vpop.permute.xlu0 %3675
      %3677 = vrot.lane.b32.xlu0 %v3604, 28
      %v3678 = vpop.permute.xlu0 %3677
      %3679 = vrot.lane.b32.xlu0 %v3605, 28
      %v3680 = vpop.permute.xlu0 %3679
      %3681 = vrot.lane.b32.xlu0 %v3606, 28
      %v3682 = vpop.permute.xlu0 %3681
      %3683 = vrot.lane.b32.xlu0 %v3607, 28
      %v3684 = vpop.permute.xlu0 %3683
      %3685 = vrot.lane.b32.xlu0 %v3608, 28
      %v3686 = vpop.permute.xlu0 %3685
      %3687 = vrot.lane.b32.xlu0 %v3609, 28
      %v3688 = vpop.permute.xlu0 %3687
      %3689 = vrot.lane.b32.xlu0 %v3610, 28
      %v3690 = vpop.permute.xlu0 %3689
      %3691 = vrot.lane.b32.xlu0 %v3611, 28
      %v3692 = vpop.permute.xlu0 %3691
      %3693 = vrot.lane.b32.xlu0 %v3612, 28
      %v3694 = vpop.permute.xlu0 %3693
      %3695 = vrot.lane.b32.xlu0 %v3613, 28
      %v3696 = vpop.permute.xlu0 %3695
      %3697 = vrot.lane.b32.xlu0 %v3614, 28
      %v3698 = vpop.permute.xlu0 %3697
      %3699 = vrot.lane.b32.xlu0 %v3615, 28
      %v3700 = vpop.permute.xlu0 %3699
      %3701 = vrot.lane.b32.xlu0 %v3616, 28
      %v3702 = vpop.permute.xlu0 %3701
      %3703 = vrot.lane.b32.xlu0 %v3617, 28
      %v3704 = vpop.permute.xlu0 %3703
      %3705 = vrot.lane.b32.xlu0 %v3618, 28
      %v3706 = vpop.permute.xlu0 %3705
      %3707 = vrot.lane.b32.xlu0 %v3619, 28
      %v3708 = vpop.permute.xlu0 %3707
      %3709 = vrot.lane.b32.xlu0 %v3620, 28
      %v3710 = vpop.permute.xlu0 %3709
      %3711 = vrot.lane.b32.xlu0 %v3621, 28
      %v3712 = vpop.permute.xlu0 %3711
      %3713 = vrot.lane.b32.xlu0 %v3622, 28
      %v3714 = vpop.permute.xlu0 %3713
      %3715 = vrot.lane.b32.xlu0 %v3623, 28
      %v3716 = vpop.permute.xlu0 %3715
      %3717 = vrot.lane.b32.xlu0 %v3624, 28
      %v3718 = vpop.permute.xlu0 %3717
      %3719 = vrot.lane.b32.xlu0 %v3625, 28
      %v3720 = vpop.permute.xlu0 %3719
      %3721 = vrot.lane.b32.xlu0 %v3626, 28
      %v3722 = vpop.permute.xlu0 %3721
      %3755 = vst.msk [vmem:[#allocation3] sm:$0xff] %vm1719, %v3660
      %3756 = vst.msk [vmem:[#allocation3 + $0x8] sm:$0xff] %vm1719, %v3662
      %3757 = vst.msk [vmem:[#allocation3 + $0x10] sm:$0xff] %vm1719, %v3664
      %3758 = vst.msk [vmem:[#allocation3 + $0x18] sm:$0xff] %vm1719, %v3666
      %3759 = vst.msk [vmem:[#allocation3 + $0x20] sm:$0xff] %vm1719, %v3668
      %3760 = vst.msk [vmem:[#allocation3 + $0x28] sm:$0xff] %vm1719, %v3670
      %3761 = vst.msk [vmem:[#allocation3 + $0x30] sm:$0xff] %vm1719, %v3672
      %3762 = vst.msk [vmem:[#allocation3 + $0x38] sm:$0xff] %vm1719, %v3674
      %3763 = vst.msk [vmem:[#allocation3 + $0x40] sm:$0xff] %vm1719, %v3676
      %3764 = vst.msk [vmem:[#allocation3 + $0x48] sm:$0xff] %vm1719, %v3678
      %3765 = vst.msk [vmem:[#allocation3 + $0x50] sm:$0xff] %vm1719, %v3680
      %3766 = vst.msk [vmem:[#allocation3 + $0x58] sm:$0xff] %vm1719, %v3682
      %3767 = vst.msk [vmem:[#allocation3 + $0x60] sm:$0xff] %vm1719, %v3684
      %3768 = vst.msk [vmem:[#allocation3 + $0x68] sm:$0xff] %vm1719, %v3686
      %3769 = vst.msk [vmem:[#allocation3 + $0x70] sm:$0xff] %vm1719, %v3688
      %3770 = vst.msk [vmem:[#allocation3 + $0x78] sm:$0xff] %vm1719, %v3690
      %3771 = vst.msk [vmem:[#allocation3 + $0x80] sm:$0xff] %vm1719, %v3692
      %3772 = vst.msk [vmem:[#allocation3 + $0x88] sm:$0xff] %vm1719, %v3694
      %3773 = vst.msk [vmem:[#allocation3 + $0x90] sm:$0xff] %vm1719, %v3696
      %3774 = vst.msk [vmem:[#allocation3 + $0x98] sm:$0xff] %vm1719, %v3698
      %3775 = vst.msk [vmem:[#allocation3 + $0xa0] sm:$0xff] %vm1719, %v3700
      %3776 = vst.msk [vmem:[#allocation3 + $0xa8] sm:$0xff] %vm1719, %v3702
      %3777 = vst.msk [vmem:[#allocation3 + $0xb0] sm:$0xff] %vm1719, %v3704
      %3778 = vst.msk [vmem:[#allocation3 + $0xb8] sm:$0xff] %vm1719, %v3706
      %3779 = vst.msk [vmem:[#allocation3 + $0xc0] sm:$0xff] %vm1719, %v3708
      %3780 = vst.msk [vmem:[#allocation3 + $0xc8] sm:$0xff] %vm1719, %v3710
      %3781 = vst.msk [vmem:[#allocation3 + $0xd0] sm:$0xff] %vm1719, %v3712
      %3782 = vst.msk [vmem:[#allocation3 + $0xd8] sm:$0xff] %vm1719, %v3714
      %3783 = vst.msk [vmem:[#allocation3 + $0xe0] sm:$0xff] %vm1719, %v3716
      %3784 = vst.msk [vmem:[#allocation3 + $0xe8] sm:$0xff] %vm1719, %v3718
      %3785 = vst.msk [vmem:[#allocation3 + $0xf0] sm:$0xff] %vm1719, %v3720
      %3786 = vst.msk [vmem:[#allocation3 + $0xf8] sm:$0xff] %vm1719, %v3722
      %v3787 = vld [vmem:[%s1365 + $0x2] sm:$0xff]
      %v3788 = vld [vmem:[%s1365 + $0xa] sm:$0xff]
      %v3789 = vld [vmem:[%s1365 + $0x1a] sm:$0xff]
      %v3790 = vld [vmem:[%s1365 + $0x22] sm:$0xff]
      %v3791 = vld [vmem:[%s1365 + $0x32] sm:$0xff]
      %v3792 = vld [vmem:[%s1365 + $0x3a] sm:$0xff]
      %v3793 = vld [vmem:[%s1365 + $0x4a] sm:$0xff]
      %v3794 = vld [vmem:[%s1365 + $0x52] sm:$0xff]
      %v3795 = vld [vmem:[%s1365 + $0x62] sm:$0xff]
      %v3796 = vld [vmem:[%s1365 + $0x6a] sm:$0xff]
      %v3797 = vld [vmem:[%s1365 + $0x7a] sm:$0xff]
      %v3798 = vld [vmem:[%s1365 + $0x82] sm:$0xff]
      %v3799 = vld [vmem:[%s1365 + $0x92] sm:$0xff]
      %v3800 = vld [vmem:[%s1365 + $0x9a] sm:$0xff]
      %v3801 = vld [vmem:[%s1365 + $0xaa] sm:$0xff]
      %v3802 = vld [vmem:[%s1365 + $0xb2] sm:$0xff]
      %v3803 = vld [vmem:[%s1365 + $0xc2] sm:$0xff]
      %v3804 = vld [vmem:[%s1365 + $0xca] sm:$0xff]
      %v3805 = vld [vmem:[%s1365 + $0xda] sm:$0xff]
      %v3806 = vld [vmem:[%s1365 + $0xe2] sm:$0xff]
      %v3807 = vld [vmem:[%s1365 + $0xf2] sm:$0xff]
      %v3808 = vld [vmem:[%s1365 + $0xfa] sm:$0xff]
      %v3809 = vld [vmem:[%s1365 + $0x10a] sm:$0xff]
      %v3810 = vld [vmem:[%s1365 + $0x112] sm:$0xff]
      %v3811 = vld [vmem:[%s1365 + $0x122] sm:$0xff]
      %v3812 = vld [vmem:[%s1365 + $0x12a] sm:$0xff]
      %v3813 = vld [vmem:[%s1365 + $0x13a] sm:$0xff]
      %v3814 = vld [vmem:[%s1365 + $0x142] sm:$0xff]
      %v3815 = vld [vmem:[%s1365 + $0x152] sm:$0xff]
      %v3816 = vld [vmem:[%s1365 + $0x15a] sm:$0xff]
      %v3817 = vld [vmem:[%s1365 + $0x16a] sm:$0xff]
      %v3818 = vld [vmem:[%s1365 + $0x172] sm:$0xff]
      %3851 = vrot.lane.b32.xlu0 %v3787, 32
      %v3852 = vpop.permute.xlu0 %3851
      %3853 = vrot.lane.b32.xlu0 %v3788, 32
      %v3854 = vpop.permute.xlu0 %3853
      %3855 = vrot.lane.b32.xlu0 %v3789, 32
      %v3856 = vpop.permute.xlu0 %3855
      %3857 = vrot.lane.b32.xlu0 %v3790, 32
      %v3858 = vpop.permute.xlu0 %3857
      %3859 = vrot.lane.b32.xlu0 %v3791, 32
      %v3860 = vpop.permute.xlu0 %3859
      %3861 = vrot.lane.b32.xlu0 %v3792, 32
      %v3862 = vpop.permute.xlu0 %3861
      %3863 = vrot.lane.b32.xlu0 %v3793, 32
      %v3864 = vpop.permute.xlu0 %3863
      %3865 = vrot.lane.b32.xlu0 %v3794, 32
      %v3866 = vpop.permute.xlu0 %3865
      %3867 = vrot.lane.b32.xlu0 %v3795, 32
      %v3868 = vpop.permute.xlu0 %3867
      %3869 = vrot.lane.b32.xlu0 %v3796, 32
      %v3870 = vpop.permute.xlu0 %3869
      %3871 = vrot.lane.b32.xlu0 %v3797, 32
      %v3872 = vpop.permute.xlu0 %3871
      %3873 = vrot.lane.b32.xlu0 %v3798, 32
      %v3874 = vpop.permute.xlu0 %3873
      %3875 = vrot.lane.b32.xlu0 %v3799, 32
      %v3876 = vpop.permute.xlu0 %3875
      %3877 = vrot.lane.b32.xlu0 %v3800, 32
      %v3878 = vpop.permute.xlu0 %3877
      %3879 = vrot.lane.b32.xlu0 %v3801, 32
      %v3880 = vpop.permute.xlu0 %3879
      %3881 = vrot.lane.b32.xlu0 %v3802, 32
      %v3882 = vpop.permute.xlu0 %3881
      %3883 = vrot.lane.b32.xlu0 %v3803, 32
      %v3884 = vpop.permute.xlu0 %3883
      %3885 = vrot.lane.b32.xlu0 %v3804, 32
      %v3886 = vpop.permute.xlu0 %3885
      %3887 = vrot.lane.b32.xlu0 %v3805, 32
      %v3888 = vpop.permute.xlu0 %3887
      %3889 = vrot.lane.b32.xlu0 %v3806, 32
      %v3890 = vpop.permute.xlu0 %3889
      %3891 = vrot.lane.b32.xlu0 %v3807, 32
      %v3892 = vpop.permute.xlu0 %3891
      %3893 = vrot.lane.b32.xlu0 %v3808, 32
      %v3894 = vpop.permute.xlu0 %3893
      %3895 = vrot.lane.b32.xlu0 %v3809, 32
      %v3896 = vpop.permute.xlu0 %3895
      %3897 = vrot.lane.b32.xlu0 %v3810, 32
      %v3898 = vpop.permute.xlu0 %3897
      %3899 = vrot.lane.b32.xlu0 %v3811, 32
      %v3900 = vpop.permute.xlu0 %3899
      %3901 = vrot.lane.b32.xlu0 %v3812, 32
      %v3902 = vpop.permute.xlu0 %3901
      %3903 = vrot.lane.b32.xlu0 %v3813, 32
      %v3904 = vpop.permute.xlu0 %3903
      %3905 = vrot.lane.b32.xlu0 %v3814, 32
      %v3906 = vpop.permute.xlu0 %3905
      %3907 = vrot.lane.b32.xlu0 %v3815, 32
      %v3908 = vpop.permute.xlu0 %3907
      %3909 = vrot.lane.b32.xlu0 %v3816, 32
      %v3910 = vpop.permute.xlu0 %3909
      %3911 = vrot.lane.b32.xlu0 %v3817, 32
      %v3912 = vpop.permute.xlu0 %3911
      %3913 = vrot.lane.b32.xlu0 %v3818, 32
      %v3914 = vpop.permute.xlu0 %3913
      %3947 = vst.msk [vmem:[#allocation3] sm:$0xff] %vm1912, %v3852
      %3948 = vst.msk [vmem:[#allocation3 + $0x8] sm:$0xff] %vm1912, %v3854
      %3949 = vst.msk [vmem:[#allocation3 + $0x10] sm:$0xff] %vm1912, %v3856
      %3950 = vst.msk [vmem:[#allocation3 + $0x18] sm:$0xff] %vm1912, %v3858
      %3951 = vst.msk [vmem:[#allocation3 + $0x20] sm:$0xff] %vm1912, %v3860
      %3952 = vst.msk [vmem:[#allocation3 + $0x28] sm:$0xff] %vm1912, %v3862
      %3953 = vst.msk [vmem:[#allocation3 + $0x30] sm:$0xff] %vm1912, %v3864
      %3954 = vst.msk [vmem:[#allocation3 + $0x38] sm:$0xff] %vm1912, %v3866
      %3955 = vst.msk [vmem:[#allocation3 + $0x40] sm:$0xff] %vm1912, %v3868
      %3956 = vst.msk [vmem:[#allocation3 + $0x48] sm:$0xff] %vm1912, %v3870
      %3957 = vst.msk [vmem:[#allocation3 + $0x50] sm:$0xff] %vm1912, %v3872
      %3958 = vst.msk [vmem:[#allocation3 + $0x58] sm:$0xff] %vm1912, %v3874
      %3959 = vst.msk [vmem:[#allocation3 + $0x60] sm:$0xff] %vm1912, %v3876
      %3960 = vst.msk [vmem:[#allocation3 + $0x68] sm:$0xff] %vm1912, %v3878
      %3961 = vst.msk [vmem:[#allocation3 + $0x70] sm:$0xff] %vm1912, %v3880
      %3962 = vst.msk [vmem:[#allocation3 + $0x78] sm:$0xff] %vm1912, %v3882
      %3963 = vst.msk [vmem:[#allocation3 + $0x80] sm:$0xff] %vm1912, %v3884
      %3964 = vst.msk [vmem:[#allocation3 + $0x88] sm:$0xff] %vm1912, %v3886
      %3965 = vst.msk [vmem:[#allocation3 + $0x90] sm:$0xff] %vm1912, %v3888
      %3966 = vst.msk [vmem:[#allocation3 + $0x98] sm:$0xff] %vm1912, %v3890
      %3967 = vst.msk [vmem:[#allocation3 + $0xa0] sm:$0xff] %vm1912, %v3892
      %3968 = vst.msk [vmem:[#allocation3 + $0xa8] sm:$0xff] %vm1912, %v3894
      %3969 = vst.msk [vmem:[#allocation3 + $0xb0] sm:$0xff] %vm1912, %v3896
      %3970 = vst.msk [vmem:[#allocation3 + $0xb8] sm:$0xff] %vm1912, %v3898
      %3971 = vst.msk [vmem:[#allocation3 + $0xc0] sm:$0xff] %vm1912, %v3900
      %3972 = vst.msk [vmem:[#allocation3 + $0xc8] sm:$0xff] %vm1912, %v3902
      %3973 = vst.msk [vmem:[#allocation3 + $0xd0] sm:$0xff] %vm1912, %v3904
      %3974 = vst.msk [vmem:[#allocation3 + $0xd8] sm:$0xff] %vm1912, %v3906
      %3975 = vst.msk [vmem:[#allocation3 + $0xe0] sm:$0xff] %vm1912, %v3908
      %3976 = vst.msk [vmem:[#allocation3 + $0xe8] sm:$0xff] %vm1912, %v3910
      %3977 = vst.msk [vmem:[#allocation3 + $0xf0] sm:$0xff] %vm1912, %v3912
      %3978 = vst.msk [vmem:[#allocation3 + $0xf8] sm:$0xff] %vm1912, %v3914
      %v3979 = vld [vmem:[#allocation3] sm:$0xff]
      %v3980 = vld [vmem:[#allocation3 + $0x8] sm:$0xff]
      %v3981 = vld [vmem:[#allocation3 + $0x10] sm:$0xff]
      %v3982 = vld [vmem:[#allocation3 + $0x18] sm:$0xff]
      %v3983 = vld [vmem:[#allocation3 + $0x20] sm:$0xff]
      %v3984 = vld [vmem:[#allocation3 + $0x28] sm:$0xff]
      %v3985 = vld [vmem:[#allocation3 + $0x30] sm:$0xff]
      %v3986 = vld [vmem:[#allocation3 + $0x38] sm:$0xff]
      %v3987 = vld [vmem:[#allocation3 + $0x40] sm:$0xff]
      %v3988 = vld [vmem:[#allocation3 + $0x48] sm:$0xff]
      %v3989 = vld [vmem:[#allocation3 + $0x50] sm:$0xff]
      %v3990 = vld [vmem:[#allocation3 + $0x58] sm:$0xff]
      %v3991 = vld [vmem:[#allocation3 + $0x60] sm:$0xff]
      %v3992 = vld [vmem:[#allocation3 + $0x68] sm:$0xff]
      %v3993 = vld [vmem:[#allocation3 + $0x70] sm:$0xff]
      %v3994 = vld [vmem:[#allocation3 + $0x78] sm:$0xff]
      %v3995 = vld [vmem:[#allocation3 + $0x80] sm:$0xff]
      %v3996 = vld [vmem:[#allocation3 + $0x88] sm:$0xff]
      %v3997 = vld [vmem:[#allocation3 + $0x90] sm:$0xff]
      %v3998 = vld [vmem:[#allocation3 + $0x98] sm:$0xff]
      %v3999 = vld [vmem:[#allocation3 + $0xa0] sm:$0xff]
      %v4000 = vld [vmem:[#allocation3 + $0xa8] sm:$0xff]
      %v4001 = vld [vmem:[#allocation3 + $0xb0] sm:$0xff]
      %v4002 = vld [vmem:[#allocation3 + $0xb8] sm:$0xff]
      %v4003 = vld [vmem:[#allocation3 + $0xc0] sm:$0xff]
      %v4004 = vld [vmem:[#allocation3 + $0xc8] sm:$0xff]
      %v4005 = vld [vmem:[#allocation3 + $0xd0] sm:$0xff]
      %v4006 = vld [vmem:[#allocation3 + $0xd8] sm:$0xff]
      %v4007 = vld [vmem:[#allocation3 + $0xe0] sm:$0xff]
      %v4008 = vld [vmem:[#allocation3 + $0xe8] sm:$0xff]
      %v4009 = vld [vmem:[#allocation3 + $0xf0] sm:$0xff]
      %v4010 = vld [vmem:[#allocation3 + $0xf8] sm:$0xff]
      %v4011 = vld [vmem:[%s3] sm:$0xff]
      %v4012 = vld [vmem:[%s3 + $0x8] sm:$0xff]
      %v4013 = vld [vmem:[%s3 + $0x10] sm:$0xff]
      %v4014 = vld [vmem:[%s3 + $0x18] sm:$0xff]
      %v4015 = vld [vmem:[%s3 + $0x20] sm:$0xf]
      %v4016 = vld [vmem:[%s4] sm:$0x1]
      %v4018 = vlaneseq
      %v4019 = vshrl.u32 %v4018, 7
      %v4020 = vsub.s32 0, %v4019
      %v4021 = vrot.slane %v4016, %v4020
      %v4024 = vsel %vm1989, %v3979, 0
      %v4027 = vsel %vm1989, %v3980, 0
      %v4030 = vsel %vm1989, %v3981, 0
      %v4033 = vsel %vm1989, %v3982, 0
      %v4036 = vsel %vm1989, %v3983, 0
      %v4039 = vsel %vm1989, %v3984, 0
      %v4042 = vsel %vm1989, %v3985, 0
      %v4045 = vsel %vm1989, %v3986, 0
      %v4048 = vsel %vm1989, %v3987, 0
      %v4051 = vsel %vm1989, %v3988, 0
      %v4054 = vsel %vm1989, %v3989, 0
      %v4057 = vsel %vm1989, %v3990, 0
      %v4060 = vsel %vm1989, %v3991, 0
      %v4063 = vsel %vm1989, %v3992, 0
      %v4066 = vsel %vm1989, %v3993, 0
      %v4069 = vsel %vm1989, %v3994, 0
      %v4072 = vsel %vm1989, %v3995, 0
      %v4075 = vsel %vm1989, %v3996, 0
      %v4078 = vsel %vm1989, %v3997, 0
      %v4081 = vsel %vm1989, %v3998, 0
      %v4084 = vsel %vm1989, %v3999, 0
      %v4087 = vsel %vm1989, %v4000, 0
      %v4090 = vsel %vm1989, %v4001, 0
      %v4093 = vsel %vm1989, %v4002, 0
      %v4096 = vsel %vm1989, %v4003, 0
      %v4099 = vsel %vm1989, %v4004, 0
      %v4102 = vsel %vm1989, %v4005, 0
      %v4105 = vsel %vm1989, %v4006, 0
      %v4108 = vsel %vm1989, %v4007, 0
      %v4111 = vsel %vm1989, %v4008, 0
      %v4114 = vsel %vm1989, %v4009, 0
      %v4117 = vsel %vm1989, %v4010, 0
      %v4120 = vsel %vm2086, %v4015, 0
      %4122 = vmatprep.subr.mxu0 0.0
      %4123 = vmatpush1.msra.mxu0 %v4011
      %4124 = vmatprep.subr.mxu0 0.0
      %4125 = vmatpush1.msra.mxu0 %v4012
      %4126 = vmatprep.subr.mxu0 0.0
      %4127 = vmatpush1.msra.mxu0 %v4013
      %4128 = vmatprep.subr.mxu0 0.0
      %4129 = vmatpush1.msra.mxu0 %v4014
      %4130 = vmatprep.subr.mxu0 0.0
      %4131 = vmatpush1.msra.mxu0 %v4120
      %4132 = vmatprep.subr.mxu0 0.0
      %4133 = vmatpush1.msra.mxu0 0.0
      %4134 = vmatprep.subr.mxu0 0.0
      %4135 = vmatpush1.msra.mxu0 0.0
      %4136 = vmatprep.subr.mxu0 0.0
      %4137 = vmatpush1.msra.mxu0 0.0
      %4138 = vmatprep.subr.mxu0 0.0
      %4139 = vmatpush1.msra.mxu0 0.0
      %4140 = vmatprep.subr.mxu0 0.0
      %4141 = vmatpush1.msra.mxu0 0.0
      %4142 = vmatprep.subr.mxu0 0.0
      %4143 = vmatpush1.msra.mxu0 0.0
      %4144 = vmatprep.subr.mxu0 0.0
      %4145 = vmatpush1.msra.mxu0 0.0
      %4146 = vmatprep.subr.mxu0 0.0
      %4147 = vmatpush1.msra.mxu0 0.0
      %4148 = vmatprep.subr.mxu0 0.0
      %4149 = vmatpush1.msra.mxu0 0.0
      %4150 = vmatprep.subr.mxu0 0.0
      %4151 = vmatpush1.msra.mxu0 0.0
      %4152 = vmatprep.subr.mxu0 0.0
      %4153 = vmatpush1.msra.mxu0 0.0
      %4154 = vmatprep.subr.mxu0 0.0
      %4155 = vmatpush1.msra.mxu0 0.0
      %4156 = vmatprep.subr.mxu0 0.0
      %4157 = vmatpush1.msra.mxu0 0.0
      %4158 = vmatprep.subr.mxu0 0.0
      %4159 = vmatpush1.msra.mxu0 0.0
      %4160 = vmatprep.subr.mxu0 0.0
      %4161 = vmatpush1.msra.mxu0 0.0
      %4162 = vmatprep.subr.mxu0 0.0
      %4163 = vmatpush1.msra.mxu0 0.0
      %4164 = vmatprep.subr.mxu0 0.0
      %4165 = vmatpush1.msra.mxu0 0.0
      %4166 = vmatprep.subr.mxu0 0.0
      %4167 = vmatpush1.msra.mxu0 0.0
      %4168 = vmatprep.subr.mxu0 0.0
      %4169 = vmatpush1.msra.mxu0 0.0
      %4170 = vmatprep.subr.mxu0 0.0
      %4171 = vmatpush1.msra.mxu0 0.0
      %4172 = vmatprep.subr.mxu0 0.0
      %4173 = vmatpush1.msra.mxu0 0.0
      %4174 = vmatprep.subr.mxu0 0.0
      %4175 = vmatpush1.msra.mxu0 0.0
      %4176 = vmatprep.subr.mxu0 0.0
      %4177 = vmatpush1.msra.mxu0 0.0
      %4178 = vmatprep.subr.mxu0 0.0
      %4179 = vmatpush1.msra.mxu0 0.0
      %4180 = vmatprep.subr.mxu0 0.0
      %4181 = vmatpush1.msra.mxu0 0.0
      %4182 = vmatprep.subr.mxu0 0.0
      %4183 = vmatpush1.msra.mxu0 0.0
      %4184 = vmatprep.subr.mxu0 0.0
      %4185 = vmatpush1.msra.mxu0 0.0
      %4186 = vmatprep.mubr.f32.mxu0 0.0
      %4187 = vmatmul.mubr.f32.gmra.mrb[0].mxu0 %v4024
      %v4188 = vpop.f32.mrb[0].mxu0
      %v4189 = vadd.f32 %v4021, %v4188
      %v4190 = vpop.f32.mrb[0].mxu0
      %4191 = vmatprep.mubr.f32.mxu0 0.0
      %4192 = vmatmul.mubr.f32.gmra.mrb[0].mxu0 %v4027
      %v4193 = vpop.f32.mrb[0].mxu0
      %v4194 = vadd.f32 %v4021, %v4193
      %v4195 = vpop.f32.mrb[0].mxu0
      %4196 = vmatprep.mubr.f32.mxu0 0.0
      %4197 = vmatmul.mubr.f32.gmra.mrb[0].mxu0 %v4030
      %v4198 = vpop.f32.mrb[0].mxu0
      %v4199 = vadd.f32 %v4021, %v4198
      %v4200 = vpop.f32.mrb[0].mxu0
      %4201 = vmatprep.mubr.f32.mxu0 0.0
      %4202 = vmatmul.mubr.f32.gmra.mrb[0].mxu0 %v4033
      %v4203 = vpop.f32.mrb[0].mxu0
      %v4204 = vadd.f32 %v4021, %v4203
      %v4205 = vpop.f32.mrb[0].mxu0
      %4206 = vmatprep.mubr.f32.mxu0 0.0
      %4207 = vmatmul.mubr.f32.gmra.mrb[0].mxu0 %v4036
      %v4208 = vpop.f32.mrb[0].mxu0
      %v4209 = vadd.f32 %v4021, %v4208
      %v4210 = vpop.f32.mrb[0].mxu0
      %4211 = vmatprep.mubr.f32.mxu0 0.0
      %4212 = vmatmul.mubr.f32.gmra.mrb[0].mxu0 %v4039
      %v4213 = vpop.f32.mrb[0].mxu0
      %v4214 = vadd.f32 %v4021, %v4213
      %v4215 = vpop.f32.mrb[0].mxu0
      %4216 = vmatprep.mubr.f32.mxu0 0.0
      %4217 = vmatmul.mubr.f32.gmra.mrb[0].mxu0 %v4042
      %v4218 = vpop.f32.mrb[0].mxu0
      %v4219 = vadd.f32 %v4021, %v4218
      %v4220 = vpop.f32.mrb[0].mxu0
      %4221 = vmatprep.mubr.f32.mxu0 0.0
      %4222 = vmatmul.mubr.f32.gmra.mrb[0].mxu0 %v4045
      %v4223 = vpop.f32.mrb[0].mxu0
      %v4224 = vadd.f32 %v4021, %v4223
      %v4225 = vpop.f32.mrb[0].mxu0
      %4226 = vmatprep.mubr.f32.mxu0 0.0
      %4227 = vmatmul.mubr.f32.gmra.mrb[0].mxu0 %v4048
      %v4228 = vpop.f32.mrb[0].mxu0
      %v4229 = vadd.f32 %v4021, %v4228
      %v4230 = vpop.f32.mrb[0].mxu0
      %4231 = vmatprep.mubr.f32.mxu0 0.0
      %4232 = vmatmul.mubr.f32.gmra.mrb[0].mxu0 %v4051
      %v4233 = vpop.f32.mrb[0].mxu0
      %v4234 = vadd.f32 %v4021, %v4233
      %v4235 = vpop.f32.mrb[0].mxu0
      %4236 = vmatprep.mubr.f32.mxu0 0.0
      %4237 = vmatmul.mubr.f32.gmra.mrb[0].mxu0 %v4054
      %v4238 = vpop.f32.mrb[0].mxu0
      %v4239 = vadd.f32 %v4021, %v4238
      %v4240 = vpop.f32.mrb[0].mxu0
      %4241 = vmatprep.mubr.f32.mxu0 0.0
      %4242 = vmatmul.mubr.f32.gmra.mrb[0].mxu0 %v4057
      %v4243 = vpop.f32.mrb[0].mxu0
      %v4244 = vadd.f32 %v4021, %v4243
      %v4245 = vpop.f32.mrb[0].mxu0
      %4246 = vmatprep.mubr.f32.mxu0 0.0
      %4247 = vmatmul.mubr.f32.gmra.mrb[0].mxu0 %v4060
      %v4248 = vpop.f32.mrb[0].mxu0
      %v4249 = vadd.f32 %v4021, %v4248
      %v4250 = vpop.f32.mrb[0].mxu0
      %4251 = vmatprep.mubr.f32.mxu0 0.0
      %4252 = vmatmul.mubr.f32.gmra.mrb[0].mxu0 %v4063
      %v4253 = vpop.f32.mrb[0].mxu0
      %v4254 = vadd.f32 %v4021, %v4253
      %v4255 = vpop.f32.mrb[0].mxu0
      %4256 = vmatprep.mubr.f32.mxu0 0.0
      %4257 = vmatmul.mubr.f32.gmra.mrb[0].mxu0 %v4066
      %v4258 = vpop.f32.mrb[0].mxu0
      %v4259 = vadd.f32 %v4021, %v4258
      %v4260 = vpop.f32.mrb[0].mxu0
      %4261 = vmatprep.mubr.f32.mxu0 0.0
      %4262 = vmatmul.mubr.f32.gmra.mrb[0].mxu0 %v4069
      %v4263 = vpop.f32.mrb[0].mxu0
      %v4264 = vadd.f32 %v4021, %v4263
      %v4265 = vpop.f32.mrb[0].mxu0
      %4266 = vmatprep.mubr.f32.mxu0 0.0
      %4267 = vmatmul.mubr.f32.gmra.mrb[0].mxu0 %v4072
      %v4268 = vpop.f32.mrb[0].mxu0
      %v4269 = vadd.f32 %v4021, %v4268
      %v4270 = vpop.f32.mrb[0].mxu0
      %4271 = vmatprep.mubr.f32.mxu0 0.0
      %4272 = vmatmul.mubr.f32.gmra.mrb[0].mxu0 %v4075
      %v4273 = vpop.f32.mrb[0].mxu0
      %v4274 = vadd.f32 %v4021, %v4273
      %v4275 = vpop.f32.mrb[0].mxu0
      %4276 = vmatprep.mubr.f32.mxu0 0.0
      %4277 = vmatmul.mubr.f32.gmra.mrb[0].mxu0 %v4078
      %v4278 = vpop.f32.mrb[0].mxu0
      %v4279 = vadd.f32 %v4021, %v4278
      %v4280 = vpop.f32.mrb[0].mxu0
      %4281 = vmatprep.mubr.f32.mxu0 0.0
      %4282 = vmatmul.mubr.f32.gmra.mrb[0].mxu0 %v4081
      %v4283 = vpop.f32.mrb[0].mxu0
      %v4284 = vadd.f32 %v4021, %v4283
      %v4285 = vpop.f32.mrb[0].mxu0
      %4286 = vmatprep.mubr.f32.mxu0 0.0
      %4287 = vmatmul.mubr.f32.gmra.mrb[0].mxu0 %v4084
      %v4288 = vpop.f32.mrb[0].mxu0
      %v4289 = vadd.f32 %v4021, %v4288
      %v4290 = vpop.f32.mrb[0].mxu0
      %4291 = vmatprep.mubr.f32.mxu0 0.0
      %4292 = vmatmul.mubr.f32.gmra.mrb[0].mxu0 %v4087
      %v4293 = vpop.f32.mrb[0].mxu0
      %v4294 = vadd.f32 %v4021, %v4293
      %v4295 = vpop.f32.mrb[0].mxu0
      %4296 = vmatprep.mubr.f32.mxu0 0.0
      %4297 = vmatmul.mubr.f32.gmra.mrb[0].mxu0 %v4090
      %v4298 = vpop.f32.mrb[0].mxu0
      %v4299 = vadd.f32 %v4021, %v4298
      %v4300 = vpop.f32.mrb[0].mxu0
      %4301 = vmatprep.mubr.f32.mxu0 0.0
      %4302 = vmatmul.mubr.f32.gmra.mrb[0].mxu0 %v4093
      %v4303 = vpop.f32.mrb[0].mxu0
      %v4304 = vadd.f32 %v4021, %v4303
      %v4305 = vpop.f32.mrb[0].mxu0
      %4306 = vmatprep.mubr.f32.mxu0 0.0
      %4307 = vmatmul.mubr.f32.gmra.mrb[0].mxu0 %v4096
      %v4308 = vpop.f32.mrb[0].mxu0
      %v4309 = vadd.f32 %v4021, %v4308
      %v4310 = vpop.f32.mrb[0].mxu0
      %4311 = vmatprep.mubr.f32.mxu0 0.0
      %4312 = vmatmul.mubr.f32.gmra.mrb[0].mxu0 %v4099
      %v4313 = vpop.f32.mrb[0].mxu0
      %v4314 = vadd.f32 %v4021, %v4313
      %v4315 = vpop.f32.mrb[0].mxu0
      %4316 = vmatprep.mubr.f32.mxu0 0.0
      %4317 = vmatmul.mubr.f32.gmra.mrb[0].mxu0 %v4102
      %v4318 = vpop.f32.mrb[0].mxu0
      %v4319 = vadd.f32 %v4021, %v4318
      %v4320 = vpop.f32.mrb[0].mxu0
      %4321 = vmatprep.mubr.f32.mxu0 0.0
      %4322 = vmatmul.mubr.f32.gmra.mrb[0].mxu0 %v4105
      %v4323 = vpop.f32.mrb[0].mxu0
      %v4324 = vadd.f32 %v4021, %v4323
      %v4325 = vpop.f32.mrb[0].mxu0
      %4326 = vmatprep.mubr.f32.mxu0 0.0
      %4327 = vmatmul.mubr.f32.gmra.mrb[0].mxu0 %v4108
      %v4328 = vpop.f32.mrb[0].mxu0
      %v4329 = vadd.f32 %v4021, %v4328
      %v4330 = vpop.f32.mrb[0].mxu0
      %4331 = vmatprep.mubr.f32.mxu0 0.0
      %4332 = vmatmul.mubr.f32.gmra.mrb[0].mxu0 %v4111
      %v4333 = vpop.f32.mrb[0].mxu0
      %v4334 = vadd.f32 %v4021, %v4333
      %v4335 = vpop.f32.mrb[0].mxu0
      %4336 = vmatprep.mubr.f32.mxu0 0.0
      %4337 = vmatmul.mubr.f32.gmra.mrb[0].mxu0 %v4114
      %v4338 = vpop.f32.mrb[0].mxu0
      %v4339 = vadd.f32 %v4021, %v4338
      %v4340 = vpop.f32.mrb[0].mxu0
      %4341 = vmatprep.mubr.f32.mxu0 0.0
      %4342 = vmatmul.mubr.f32.gmra.mrb[0].mxu0 %v4117
      %v4343 = vpop.f32.mrb[0].mxu0
      %v4344 = vadd.f32 %v4021, %v4343
      %v4345 = vpop.f32.mrb[0].mxu0
      %4346 = vdwg.mxu0
      %v4347 = vld [vmem:[%s219] sm:$0xff]
      %v4348 = vld [vmem:[%s219 + $0x8] sm:$0xff]
      %v4349 = vld [vmem:[%s219 + $0x10] sm:$0xff]
      %v4350 = vld [vmem:[%s219 + $0x18] sm:$0xff]
      %v4351 = vld [vmem:[%s219 + $0x20] sm:$0xff]
      %v4352 = vld [vmem:[%s219 + $0x28] sm:$0xff]
      %v4353 = vld [vmem:[%s219 + $0x30] sm:$0xff]
      %v4354 = vld [vmem:[%s219 + $0x38] sm:$0xff]
      %v4355 = vld [vmem:[%s219 + $0x40] sm:$0xff]
      %v4356 = vld [vmem:[%s219 + $0x48] sm:$0xff]
      %v4357 = vld [vmem:[%s219 + $0x50] sm:$0xff]
      %v4358 = vld [vmem:[%s219 + $0x58] sm:$0xff]
      %v4359 = vld [vmem:[%s219 + $0x60] sm:$0xff]
      %v4360 = vld [vmem:[%s219 + $0x68] sm:$0xff]
      %v4361 = vld [vmem:[%s219 + $0x70] sm:$0xff]
      %v4362 = vld [vmem:[%s219 + $0x78] sm:$0xff]
      %v4363 = vld [vmem:[%s219 + $0x80] sm:$0xff]
      %v4364 = vld [vmem:[%s219 + $0x88] sm:$0xff]
      %v4365 = vld [vmem:[%s219 + $0x90] sm:$0xff]
      %v4366 = vld [vmem:[%s219 + $0x98] sm:$0xff]
      %v4367 = vld [vmem:[%s219 + $0xa0] sm:$0xff]
      %v4368 = vld [vmem:[%s219 + $0xa8] sm:$0xff]
      %v4369 = vld [vmem:[%s219 + $0xb0] sm:$0xff]
      %v4370 = vld [vmem:[%s219 + $0xb8] sm:$0xff]
      %v4371 = vld [vmem:[%s219 + $0xc0] sm:$0xff]
      %v4372 = vld [vmem:[%s219 + $0xc8] sm:$0xff]
      %v4373 = vld [vmem:[%s219 + $0xd0] sm:$0xff]
      %v4374 = vld [vmem:[%s219 + $0xd8] sm:$0xff]
      %v4375 = vld [vmem:[%s219 + $0xe0] sm:$0xff]
      %v4376 = vld [vmem:[%s219 + $0xe8] sm:$0xff]
      %v4377 = vld [vmem:[%s219 + $0xf0] sm:$0xff]
      %v4378 = vld [vmem:[%s219 + $0xf8] sm:$0xff]
      %v4379 = vadd.f32 %v4347, %v4189
      %v4380 = vadd.f32 %v4348, %v4194
      %v4381 = vadd.f32 %v4349, %v4199
      %v4382 = vadd.f32 %v4350, %v4204
      %v4383 = vadd.f32 %v4351, %v4209
      %v4384 = vadd.f32 %v4352, %v4214
      %v4385 = vadd.f32 %v4353, %v4219
      %v4386 = vadd.f32 %v4354, %v4224
      %v4387 = vadd.f32 %v4355, %v4229
      %v4388 = vadd.f32 %v4356, %v4234
      %v4389 = vadd.f32 %v4357, %v4239
      %v4390 = vadd.f32 %v4358, %v4244
      %v4391 = vadd.f32 %v4359, %v4249
      %v4392 = vadd.f32 %v4360, %v4254
      %v4393 = vadd.f32 %v4361, %v4259
      %v4394 = vadd.f32 %v4362, %v4264
      %v4395 = vadd.f32 %v4363, %v4269
      %v4396 = vadd.f32 %v4364, %v4274
      %v4397 = vadd.f32 %v4365, %v4279
      %v4398 = vadd.f32 %v4366, %v4284
      %v4399 = vadd.f32 %v4367, %v4289
      %v4400 = vadd.f32 %v4368, %v4294
      %v4401 = vadd.f32 %v4369, %v4299
      %v4402 = vadd.f32 %v4370, %v4304
      %v4403 = vadd.f32 %v4371, %v4309
      %v4404 = vadd.f32 %v4372, %v4314
      %v4405 = vadd.f32 %v4373, %v4319
      %v4406 = vadd.f32 %v4374, %v4324
      %v4407 = vadd.f32 %v4375, %v4329
      %v4408 = vadd.f32 %v4376, %v4334
      %v4409 = vadd.f32 %v4377, %v4339
      %v4410 = vadd.f32 %v4378, %v4344
      %4411 = vst.msk [vmem:[%s224] sm:$0xff] %vm225, %v4379
      %4412 = vst.msk [vmem:[%s224 + $0x8] sm:$0xff] %vm225, %v4380
      %4413 = vst.msk [vmem:[%s224 + $0x10] sm:$0xff] %vm225, %v4381
      %4414 = vst.msk [vmem:[%s224 + $0x18] sm:$0xff] %vm225, %v4382
      %4415 = vst.msk [vmem:[%s224 + $0x20] sm:$0xff] %vm225, %v4383
      %4416 = vst.msk [vmem:[%s224 + $0x28] sm:$0xff] %vm225, %v4384
      %4417 = vst.msk [vmem:[%s224 + $0x30] sm:$0xff] %vm225, %v4385
      %4418 = vst.msk [vmem:[%s224 + $0x38] sm:$0xff] %vm225, %v4386
      %4419 = vst.msk [vmem:[%s224 + $0x40] sm:$0xff] %vm225, %v4387
      %4420 = vst.msk [vmem:[%s224 + $0x48] sm:$0xff] %vm225, %v4388
      %4421 = vst.msk [vmem:[%s224 + $0x50] sm:$0xff] %vm225, %v4389
      %4422 = vst.msk [vmem:[%s224 + $0x58] sm:$0xff] %vm225, %v4390
      %4423 = vst.msk [vmem:[%s224 + $0x60] sm:$0xff] %vm225, %v4391
      %4424 = vst.msk [vmem:[%s224 + $0x68] sm:$0xff] %vm225, %v4392
      %4425 = vst.msk [vmem:[%s224 + $0x70] sm:$0xff] %vm225, %v4393
      %4426 = vst.msk [vmem:[%s224 + $0x78] sm:$0xff] %vm225, %v4394
      %4427 = vst.msk [vmem:[%s224 + $0x80] sm:$0xff] %vm225, %v4395
      %4428 = vst.msk [vmem:[%s224 + $0x88] sm:$0xff] %vm225, %v4396
      %4429 = vst.msk [vmem:[%s224 + $0x90] sm:$0xff] %vm225, %v4397
      %4430 = vst.msk [vmem:[%s224 + $0x98] sm:$0xff] %vm225, %v4398
      %4431 = vst.msk [vmem:[%s224 + $0xa0] sm:$0xff] %vm225, %v4399
      %4432 = vst.msk [vmem:[%s224 + $0xa8] sm:$0xff] %vm225, %v4400
      %4433 = vst.msk [vmem:[%s224 + $0xb0] sm:$0xff] %vm225, %v4401
      %4434 = vst.msk [vmem:[%s224 + $0xb8] sm:$0xff] %vm225, %v4402
      %4435 = vst.msk [vmem:[%s224 + $0xc0] sm:$0xff] %vm225, %v4403
      %4436 = vst.msk [vmem:[%s224 + $0xc8] sm:$0xff] %vm225, %v4404
      %4437 = vst.msk [vmem:[%s224 + $0xd0] sm:$0xff] %vm225, %v4405
      %4438 = vst.msk [vmem:[%s224 + $0xd8] sm:$0xff] %vm225, %v4406
      %4439 = vst.msk [vmem:[%s224 + $0xe0] sm:$0xff] %vm225, %v4407
      %4440 = vst.msk [vmem:[%s224 + $0xe8] sm:$0xff] %vm225, %v4408
      %4441 = vst.msk [vmem:[%s224 + $0xf0] sm:$0xff] %vm225, %v4409
      %4442 = vst.msk [vmem:[%s224 + $0xf8] sm:$0xff] %vm225, %v4410
      %p4443 = scmp.lt.s32.totalorder %s16, 1
      %s4444 = scalar_select %p4443, %s16, 1
      %s4445 = smul.addr %s4444, 32
      %s4446 = smul.addr %s4445, 8
      %s4447 = scalar_lea.vmem %s5, %s4446
      // Predicated region
      $region41: #{tpu_custom_call.1} parent=39 // pred_check
        %p4448 = pneg %p144
      $region42: #{tpu_custom_call.1} parent=39 // pred_check_branch
        %4450 = sbr.rel (%p4448) target = $region44
      $region43: #{tpu_custom_call.1} parent=39 // pred_region
        _
      $region44: #{tpu_custom_call.1} parent=39 // pred_fallthru
        _
    $region40: #{tpu_custom_call.1} parent=5 // pred_fallthru
      _
    %p4451 = scmp.le.s32.totalorder 2, %s11
    // Predicated region
    $region45: #{tpu_custom_call.1} parent=5 // pred_check
      %p4452 = pneg %p4451
    $region46: #{tpu_custom_call.1} parent=5 // pred_check_branch
      %4454 = sbr.rel (%p4452) target = $region48
    $region47: #{tpu_custom_call.1} parent=5 // pred_region
      %s4455 = ssub.s32 %s11, 2
      // Predicated region
      $region49: #{tpu_custom_call.1} parent=47 // pred_check
        %p4456 = pneg %p150
      $region50: #{tpu_custom_call.1} parent=47 // pred_check_branch
        %4458 = sbr.rel (%p4456) target = $region52
      $region51: #{tpu_custom_call.1} parent=47 // pred_region
        %p4459 = scmp.lt.s32.totalorder %s17, 1
        %s4460 = scalar_select %p4459, %s17, 1
        %s4461 = smul.addr %s4460, 32
        %s4462 = smul.addr %s4461, 8
        %s4463 = scalar_lea.vmem %s5, %s4462
      $region52: #{tpu_custom_call.1} parent=47 // pred_fallthru
        _
    $region48: #{tpu_custom_call.1} parent=5 // pred_fallthru
      _
  $region6: #{tpu_custom_call.1} parent=0 // loop_footer
    %s15 = sadd.s32 1, %s11
  $region7: #{tpu_custom_call.1} parent=0 // loop_footer_branch
    %10 = sbr.rel target = $region3
  $region8: #{tpu_custom_call.1} parent=0 // loop_exit
    _

</llo_original>
